<compile_context>
chip_gen: v7x
topology: tpu7x:2x2x1
jax: 0.10.0
libtpu: 0.0.40
codegen_flags: <defaults>
</compile_context>

<pallas_src>
import functools

import jax
import jax.numpy as jnp
from jax import lax
from jax.experimental import pallas as pl
from jax.experimental.pallas import tpu as pltpu

ALPHA = 0.2          # LeakyReLU negative slope
BN_EPS = 1e-5
ACT_DTYPE = jnp.bfloat16   # activation / weight dtype fed to the MXU


def _leaky(y):
    return jnp.where(y >= 0, y, ALPHA * y)


def _pick_row_tile(m, cap=512):
    """Largest multiple-of-8 divisor of m that is <= cap (else the full m)."""
    best = None
    c = 8
    top = min(cap, m)
    while c <= top:
        if m % c == 0:
            best = c
        c += 8
    return best if best is not None else m


def _compiler_params(n_parallel, n_axes, vmem_mb=32):
    sem = tuple(["parallel"] * n_parallel + ["arbitrary"] * (n_axes - n_parallel))
    return pltpu.CompilerParams(dimension_semantics=sem,
                                vmem_limit_bytes=vmem_mb * 1024 * 1024)


# ----------------------------------------------------------------------------
# Pallas kernels
# ----------------------------------------------------------------------------
def _pw_kernel(x_ref, w_ref, b_ref, o_ref):
    # LeakyReLU(x @ w + b):  (TM, Cin) @ (Cin, Cout) on the MXU, f32 accumulate.
    y = jnp.dot(x_ref[...], w_ref[...], preferred_element_type=jnp.float32)
    o_ref[...] = _leaky(y + b_ref[...]).astype(o_ref.dtype)


def _pw_res_kernel(x_ref, w_ref, b_ref, r_ref, o_ref):
    # LeakyReLU(x @ w + b + residual): conv3 of a non-bottleneck ResBlock.
    y = jnp.dot(x_ref[...], w_ref[...], preferred_element_type=jnp.float32)
    y = y + b_ref[...] + r_ref[...].astype(jnp.float32)
    o_ref[...] = _leaky(y).astype(o_ref.dtype)


def _pw_dual_kernel(x_ref, w_ref, xr_ref, wr_ref, b_ref, o_ref):
    # LeakyReLU(x @ w + xr @ wr + b): fused conv3 + conv_res of the bottleneck
    # block (residual branch never round-trips through HBM).
    y = jnp.dot(x_ref[...], w_ref[...], preferred_element_type=jnp.float32)
    y = y + jnp.dot(xr_ref[...], wr_ref[...], preferred_element_type=jnp.float32)
    o_ref[...] = _leaky(y + b_ref[...]).astype(o_ref.dtype)


def _conv3x3_kernel(x_ref, w_ref, b_ref, o_ref, *, th, wsp, cin):
    # x_ref: (H+2, W+2, Cin) padded image (resident across row-tile axis)
    # w_ref: (9*Cin, Cout)   b_ref: (1, Cout)   o_ref: (TH*W, Cout)
    i = pl.program_id(1)
    rows = x_ref[pl.ds(i * th, th + 2), :, :]            # (TH+2, W+2, Cin)
    taps = [rows[di:di + th, dj:dj + wsp, :].reshape(th * wsp, cin)
            for di in range(3) for dj in range(3)]
    patch = jnp.concatenate(taps, axis=-1)               # (TH*W, 9*Cin)
    y = jnp.dot(patch, w_ref[...], preferred_element_type=jnp.float32)
    o_ref[...] = _leaky(y + b_ref[...]).astype(o_ref.dtype)


# ----------------------------------------------------------------------------
# pallas_call wrappers
# ----------------------------------------------------------------------------
def _launch_pointwise(kernel, args, cout, flops):
    """Tiled 1x1-conv launcher. args = [(array, 'row'|'full'), ...] in kernel
    argument order; 'row' arrays are (M, C) tiled along M, 'full' arrays
    (weights / bias) are kept whole and resident."""
    m = args[0][0].shape[0]
    tm = _pick_row_tile(m)
    in_specs = []
    for arr, kind in args:
        if kind == "row":
            in_specs.append(pl.BlockSpec((tm, arr.shape[1]), lambda i: (i, 0)))
        else:
            in_specs.append(
                pl.BlockSpec(arr.shape, lambda i, _nd=arr.ndim: (0,) * _nd))
    bytes_accessed = sum(int(a.size) * a.dtype.itemsize for a, _ in args)
    bytes_accessed += m * cout * jnp.dtype(ACT_DTYPE).itemsize
    return pl.pallas_call(
        kernel,
        out_shape=jax.ShapeDtypeStruct((m, cout), ACT_DTYPE),
        grid=(m // tm,),
        in_specs=in_specs,
        out_specs=pl.BlockSpec((tm, cout), lambda i: (i, 0)),
        compiler_params=_compiler_params(1, 1, vmem_mb=32),
        cost_estimate=pl.CostEstimate(flops=int(flops), transcendentals=0,
                                      bytes_accessed=int(bytes_accessed)),
    )(*[a for a, _ in args])


def pointwise_act(x2d, w, bias):
    m, cin = x2d.shape
    cout = w.shape[1]
    return _launch_pointwise(
        _pw_kernel,
        [(x2d, "row"), (w, "full"), (bias.reshape(1, cout), "full")],
        cout, 2 * m * cin * cout)


def pointwise_add_act(x2d, w, bias, resid2d):
    m, cin = x2d.shape
    cout = w.shape[1]
    return _launch_pointwise(
        _pw_res_kernel,
        [(x2d, "row"), (w, "full"), (bias.reshape(1, cout), "full"),
         (resid2d, "row")],
        cout, 2 * m * cin * cout)


def pointwise_dual_add_act(x2d, w, xr2d, wr, bias):
    m, cin = x2d.shape
    cout = w.shape[1]
    return _launch_pointwise(
        _pw_dual_kernel,
        [(x2d, "row"), (w, "full"), (xr2d, "row"), (wr, "full"),
         (bias.reshape(1, cout), "full")],
        cout, 2 * m * (cin + xr2d.shape[1]) * cout)


def conv3x3_bn_act(x_nhwc, w9, bias):
    """Fused 3x3 'same' conv + folded BN + LeakyReLU. Returns (N*H*W, Cout)."""
    n, h, wsp, cin = x_nhwc.shape
    cout = w9.shape[1]
    th = h if h <= 16 else _pick_row_tile(h, cap=16)   # row tile (divides h)
    nh = h // th
    x_pad = jnp.pad(x_nhwc, ((0, 0), (1, 1), (1, 1), (0, 0)))
    bias2d = bias.reshape(1, cout)
    flops = 2 * n * h * wsp * 9 * cin * cout
    bytes_accessed = ((int(x_pad.size) + int(w9.size)) * 2
                      + int(bias2d.size) * 4 + n * h * wsp * cout * 2)
    return pl.pallas_call(
        functools.partial(_conv3x3_kernel, th=th, wsp=wsp, cin=cin),
        out_shape=jax.ShapeDtypeStruct((n * h * wsp, cout), ACT_DTYPE),
        grid=(n, nh),
        in_specs=[
            # whole padded image per batch item; stays resident across the
            # (inner, "arbitrary") row-tile axis
            pl.BlockSpec((None, h + 2, wsp + 2, cin), lambda b, i: (b, 0, 0, 0)),
            pl.BlockSpec(w9.shape, lambda b, i: (0, 0)),
            pl.BlockSpec((1, cout), lambda b, i: (0, 0)),
        ],
        out_specs=pl.BlockSpec((th * wsp, cout), lambda b, i: (b * nh + i, 0)),
        compiler_params=_compiler_params(1, 2, vmem_mb=48),
        cost_estimate=pl.CostEstimate(flops=int(flops), transcendentals=0,
                                      bytes_accessed=int(bytes_accessed)),
    )(x_pad, w9, bias2d)


# ----------------------------------------------------------------------------
# Parameter construction (deterministic, synthetic) with BN folded into conv
# ----------------------------------------------------------------------------
def _conv_bn_params(key, cin, cout, ksize):
    ks = jax.random.split(key, 6)
    fan_in = cin * ksize * ksize
    bound = 1.0 / jnp.sqrt(jnp.float32(fan_in))
    w = jax.random.uniform(ks[0], (ksize, ksize, cin, cout), jnp.float32,
                           -bound, bound)
    b = jax.random.uniform(ks[1], (cout,), jnp.float32, -bound, bound)
    gamma = jax.random.uniform(ks[2], (cout,), jnp.float32, 0.5, 1.5)
    beta = jax.random.normal(ks[3], (cout,), jnp.float32) * 0.1
    r_mean = jax.random.normal(ks[4], (cout,), jnp.float32) * 0.1
    r_var = jax.random.uniform(ks[5], (cout,), jnp.float32, 0.5, 1.5)
    scale = gamma / jnp.sqrt(r_var + BN_EPS)
    w_folded = w * scale                       # BN scale folded into the weight
    bias = beta + (b - r_mean) * scale
    return {
        "w": w_folded.reshape(ksize * ksize * cin, cout).astype(ACT_DTYPE),
        "w_hwio": w_folded,                    # f32 HWIO copy for the reference
        "bias": bias,                          # f32
    }


def init_resblock(key, cin, cout, stride=1, bottleneck=True):
    if not bottleneck and cin != cout:
        raise ValueError("non-bottleneck ResBlock requires cin == cout")
    cc = cout // 4 if bottleneck else cout
    ks = jax.random.split(key, 4)
    params = {
        "conv1": _conv_bn_params(ks[0], cin, cc, 1),
        "conv2": _conv_bn_params(ks[1], cc, cc, 3),
        "conv3": _conv_bn_params(ks[2], cc, cout, 1),
        "stride": stride,
        "bottleneck": bottleneck,
    }
    if bottleneck:
        params["conv_res"] = _conv_bn_params(ks[3], cin, cout, 1)
    return params


def init_conv3(key, in_channels=256, out_channels=512, layer_nums=4):
    keys = jax.random.split(key, layer_nums)
    blocks = [init_resblock(keys[0], in_channels, out_channels,
                            stride=2, bottleneck=True)]
    for i in range(1, layer_nums):
        blocks.append(init_resblock(keys[i], out_channels, out_channels,
                                    stride=1, bottleneck=False))
    return blocks


# ----------------------------------------------------------------------------
# Forward pass (Pallas path)
# ----------------------------------------------------------------------------
def resblock_forward(p, x_nhwc):
    stride = p["stride"]
    if stride > 1:
        # kernel_size=1, padding=0 -> strided conv == 1x1 conv on subsampled grid
        x_nhwc = x_nhwc[:, ::stride, ::stride, :]
    n, h, w, cin = x_nhwc.shape
    x2d = x_nhwc.reshape(n * h * w, cin)
    cc = p["conv1"]["w"].shape[1]

    y = pointwise_act(x2d, p["conv1"]["w"], p["conv1"]["bias"])        # (M, cc)
    y = conv3x3_bn_act(y.reshape(n, h, w, cc),
                       p["conv2"]["w"], p["conv2"]["bias"])            # (M, cc)
    if p["bottleneck"]:
        bias = p["conv3"]["bias"] + p["conv_res"]["bias"]
        out2d = pointwise_dual_add_act(y, p["conv3"]["w"],
                                       x2d, p["conv_res"]["w"], bias)
    else:
        out2d = pointwise_add_act(y, p["conv3"]["w"], p["conv3"]["bias"], x2d)
    return out2d.reshape(n, h, w, out2d.shape[1])


def conv3_forward(blocks, x_nchw):
    # NCHW (PyTorch) -> NHWC bf16 (kernel layout) -> NCHW f32
    x = jnp.transpose(x_nchw, (0, 2, 3, 1)).astype(ACT_DTYPE)
    for p in blocks:
        x = resblock_forward(p, x)
    return jnp.transpose(x, (0, 3, 1, 2)).astype(jnp.float32)


# ----------------------------------------------------------------------------
# Pure-JAX f32 reference (for a loose numerical check against the bf16 kernels)
# ----------------------------------------------------------------------------
def _conv_ref(x, w_hwio, bias, stride=1):
    pad = "SAME" if w_hwio.shape[0] == 3 else "VALID"
    y = lax.conv_general_dilated(x, w_hwio, (stride, stride), pad,
                                 dimension_numbers=("NHWC", "HWIO", "NHWC"))
    return y + bias


def resblock_reference(p, x):
    s = p["stride"]
    h = _leaky(_conv_ref(x, p["conv1"]["w_hwio"], p["conv1"]["bias"], stride=s))
    h = _leaky(_conv_ref(h, p["conv2"]["w_hwio"], p["conv2"]["bias"]))
    h = _conv_ref(h, p["conv3"]["w_hwio"], p["conv3"]["bias"])
    r = (_conv_ref(x, p["conv_res"]["w_hwio"], p["conv_res"]["bias"], stride=s)
         if p["bottleneck"] else x)
    return _leaky(r + h)


def conv3_reference(blocks, x_nchw):
    x = jnp.transpose(x_nchw, (0, 2, 3, 1))
    for p in blocks:
        x = resblock_reference(p, x)
    return jnp.transpose(x, (0, 3, 1, 2))


# ----------------------------------------------------------------------------
if __name__ == "__main__":
    key = jax.random.PRNGKey(0)
    k_param, k_data = jax.random.split(key)

    # Small but structure-preserving config: Conv3(in=32, out=64, layer_nums=2)
    in_channels, out_channels, layer_nums = 32, 64, 2
    blocks = init_conv3(k_param, in_channels, out_channels, layer_nums)

    # NCHW input like PyTorch: batch=2, C=32, H=W=16
    x = jax.random.normal(k_data, (2, in_channels, 16, 16), jnp.float32)

    fwd = jax.jit(functools.partial(conv3_forward, blocks))
    out = jax.block_until_ready(fwd(x))

    assert out.shape == (2, out_channels, 8, 8), out.shape
    assert bool(jnp.all(jnp.isfinite(out)))

    # Loose check vs f32 XLA reference (kernels use bf16 operands, f32 accum).
    ref = jax.block_until_ready(conv3_reference(blocks, x))
    err = float(jnp.max(jnp.abs(out - ref)))
    tol = 5e-2 + 5e-2 * float(jnp.max(jnp.abs(ref)))
    assert err < tol, f"max abs error {err} exceeds tolerance {tol}"

    print("KERNEL_OK")
</pallas_src>

<mosaic_0001>
module attributes {stable_mosaic.version = 11 : i64} {
  func.func @_pw_kernel(%arg0: i32, %arg1: memref<128x32xbf16, #tpu.memory_space<vmem>>, %arg2: memref<32x16xbf16, #tpu.memory_space<vmem>>, %arg3: memref<1x16xf32, #tpu.memory_space<vmem>>, %arg4: memref<128x16xbf16, #tpu.memory_space<vmem>>) attributes {dimension_semantics = [#tpu.dimension_semantics<parallel>], iteration_bounds = array<i64: 1>, scalar_prefetch = 0 : i64, scratch_operands = 0 : i64, tpu.core_type = #tpu.core_type<tc>, window_params = [{transform_indices = @transform_0, window_bounds = array<i64: 128, 32>}, {pipeline_mode = #tpu.pipeline_mode<synchronous>, transform_indices = @transform_1, window_bounds = array<i64: 32, 16>}, {pipeline_mode = #tpu.pipeline_mode<synchronous>, transform_indices = @transform_2, window_bounds = array<i64: 1, 16>}, {transform_indices = @transform_3, window_bounds = array<i64: 128, 16>}]} {
    %c0 = arith.constant 0 : index
    %c0_0 = arith.constant 0 : index
    %0 = vector.load %arg1[%c0, %c0_0] : memref<128x32xbf16, #tpu.memory_space<vmem>>, vector<128x32xbf16>
    %c0_1 = arith.constant 0 : index
    %c0_2 = arith.constant 0 : index
    %1 = vector.load %arg2[%c0_1, %c0_2] : memref<32x16xbf16, #tpu.memory_space<vmem>>, vector<32x16xbf16>
    %cst = arith.constant dense<0.000000e+00> : vector<128x16xf32>
    %2 = tpu.matmul %0, %1, %cst {dimension_numbers = #tpu.dot_dimension_numbers<[1], [0], [0], [1], [0, 0, 1, 1], [], []>} : vector<128x32xbf16>, vector<32x16xbf16>, vector<128x16xf32> -> vector<128x16xf32>
    %c0_3 = arith.constant 0 : index
    %c0_4 = arith.constant 0 : index
    %3 = vector.load %arg3[%c0_3, %c0_4] : memref<1x16xf32, #tpu.memory_space<vmem>>, vector<1x16xf32>
    %4 = vector.broadcast %3 : vector<1x16xf32> to vector<128x16xf32>
    %5 = arith.addf %2, %4 : vector<128x16xf32>
    %cst_5 = arith.constant 0.000000e+00 : f32
    %6 = vector.broadcast %cst_5 : f32 to vector<128x16xf32>
    %7 = arith.cmpf oge, %5, %6 : vector<128x16xf32>
    %cst_6 = arith.constant 2.000000e-01 : f32
    %8 = vector.broadcast %cst_6 : f32 to vector<128x16xf32>
    %9 = arith.mulf %8, %5 : vector<128x16xf32>
    %10 = arith.select %7, %5, %9 : vector<128x16xi1>, vector<128x16xf32>
    %11 = arith.truncf %10 : vector<128x16xf32> to vector<128x16xbf16>
    %c0_7 = arith.constant 0 : index
    %c0_8 = arith.constant 0 : index
    %12 = vector.load %arg4[%c0_7, %c0_8] : memref<128x16xbf16, #tpu.memory_space<vmem>>, vector<128x16xbf16>
    tpu.vector_store %arg4[%c0_7, %c0_8], %11 {strides = array<i32>} : memref<128x16xbf16, #tpu.memory_space<vmem>>, vector<128x16xbf16>,
    return
  }
  func.func @transform_0(%arg0: i32) -> (i32, i32) {
    %c0_i32 = arith.constant 0 : i32
    %c0_i32_0 = arith.constant 0 : i32
    return %arg0, %c0_i32 : i32, i32
  }
  func.func @transform_1(%arg0: i32) -> (i32, i32) {
    %c0_i32 = arith.constant 0 : i32
    %c0_i32_0 = arith.constant 0 : i32
    %c0_i32_1 = arith.constant 0 : i32
    return %c0_i32, %c0_i32_0 : i32, i32
  }
  func.func @transform_2(%arg0: i32) -> (i32, i32) {
    %c0_i32 = arith.constant 0 : i32
    %c0_i32_0 = arith.constant 0 : i32
    %c0_i32_1 = arith.constant 0 : i32
    return %c0_i32, %c0_i32_0 : i32, i32
  }
  func.func @transform_3(%arg0: i32) -> (i32, i32) {
    %c0_i32 = arith.constant 0 : i32
    %c0_i32_0 = arith.constant 0 : i32
    return %arg0, %c0_i32 : i32, i32
  }
}

module attributes {stable_mosaic.version = 11 : i64} {
  func.func @_pw_kernel(%arg0: i32, %arg1: memref<128x64xbf16, #tpu.memory_space<vmem>>, %arg2: memref<64x64xbf16, #tpu.memory_space<vmem>>, %arg3: memref<1x64xf32, #tpu.memory_space<vmem>>, %arg4: memref<128x64xbf16, #tpu.memory_space<vmem>>) attributes {dimension_semantics = [#tpu.dimension_semantics<parallel>], iteration_bounds = array<i64: 1>, scalar_prefetch = 0 : i64, scratch_operands = 0 : i64, tpu.core_type = #tpu.core_type<tc>, window_params = [{transform_indices = @transform_0, window_bounds = array<i64: 128, 64>}, {pipeline_mode = #tpu.pipeline_mode<synchronous>, transform_indices = @transform_1, window_bounds = array<i64: 64, 64>}, {pipeline_mode = #tpu.pipeline_mode<synchronous>, transform_indices = @transform_2, window_bounds = array<i64: 1, 64>}, {transform_indices = @transform_3, window_bounds = array<i64: 128, 64>}]} {
    %c0 = arith.constant 0 : index
    %c0_0 = arith.constant 0 : index
    %0 = vector.load %arg1[%c0, %c0_0] : memref<128x64xbf16, #tpu.memory_space<vmem>>, vector<128x64xbf16>
    %c0_1 = arith.constant 0 : index
    %c0_2 = arith.constant 0 : index
    %1 = vector.load %arg2[%c0_1, %c0_2] : memref<64x64xbf16, #tpu.memory_space<vmem>>, vector<64x64xbf16>
    %cst = arith.constant dense<0.000000e+00> : vector<128x64xf32>
    %2 = tpu.matmul %0, %1, %cst {dimension_numbers = #tpu.dot_dimension_numbers<[1], [0], [0], [1], [0, 0, 1, 1], [], []>} : vector<128x64xbf16>, vector<64x64xbf16>, vector<128x64xf32> -> vector<128x64xf32>
    %c0_3 = arith.constant 0 : index
    %c0_4 = arith.constant 0 : index
    %3 = vector.load %arg3[%c0_3, %c0_4] : memref<1x64xf32, #tpu.memory_space<vmem>>, vector<1x64xf32>
    %4 = vector.broadcast %3 : vector<1x64xf32> to vector<128x64xf32>
    %5 = arith.addf %2, %4 : vector<128x64xf32>
    %cst_5 = arith.constant 0.000000e+00 : f32
    %6 = vector.broadcast %cst_5 : f32 to vector<128x64xf32>
    %7 = arith.cmpf oge, %5, %6 : vector<128x64xf32>
    %cst_6 = arith.constant 2.000000e-01 : f32
    %8 = vector.broadcast %cst_6 : f32 to vector<128x64xf32>
    %9 = arith.mulf %8, %5 : vector<128x64xf32>
    %10 = arith.select %7, %5, %9 : vector<128x64xi1>, vector<128x64xf32>
    %11 = arith.truncf %10 : vector<128x64xf32> to vector<128x64xbf16>
    %c0_7 = arith.constant 0 : index
    %c0_8 = arith.constant 0 : index
    %12 = vector.load %arg4[%c0_7, %c0_8] : memref<128x64xbf16, #tpu.memory_space<vmem>>, vector<128x64xbf16>
    tpu.vector_store %arg4[%c0_7, %c0_8], %11 {strides = array<i32>} : memref<128x64xbf16, #tpu.memory_space<vmem>>, vector<128x64xbf16>,
    return
  }
  func.func @transform_0(%arg0: i32) -> (i32, i32) {
    %c0_i32 = arith.constant 0 : i32
    %c0_i32_0 = arith.constant 0 : i32
    return %arg0, %c0_i32 : i32, i32
  }
  func.func @transform_1(%arg0: i32) -> (i32, i32) {
    %c0_i32 = arith.constant 0 : i32
    %c0_i32_0 = arith.constant 0 : i32
    %c0_i32_1 = arith.constant 0 : i32
    return %c0_i32, %c0_i32_0 : i32, i32
  }
  func.func @transform_2(%arg0: i32) -> (i32, i32) {
    %c0_i32 = arith.constant 0 : i32
    %c0_i32_0 = arith.constant 0 : i32
    %c0_i32_1 = arith.constant 0 : i32
    return %c0_i32, %c0_i32_0 : i32, i32
  }
  func.func @transform_3(%arg0: i32) -> (i32, i32) {
    %c0_i32 = arith.constant 0 : i32
    %c0_i32_0 = arith.constant 0 : i32
    return %arg0, %c0_i32 : i32, i32
  }
}

module attributes {stable_mosaic.version = 11 : i64} {
  func.func @_conv3x3_kernel(%arg0: i32, %arg1: i32, %arg2: memref<1x10x10x16xbf16, #tpu.memory_space<vmem>>, %arg3: memref<144x16xbf16, #tpu.memory_space<vmem>>, %arg4: memref<1x16xf32, #tpu.memory_space<vmem>>, %arg5: memref<64x16xbf16, #tpu.memory_space<vmem>>) attributes {dimension_semantics = [#tpu.dimension_semantics<parallel>, #tpu.dimension_semantics<arbitrary>], iteration_bounds = array<i64: 2, 1>, scalar_prefetch = 0 : i64, scratch_operands = 0 : i64, tpu.core_type = #tpu.core_type<tc>, window_params = [{transform_indices = @transform_0, window_bounds = array<i64: 1, 10, 10, 16>}, {pipeline_mode = #tpu.pipeline_mode<synchronous>, transform_indices = @transform_1, window_bounds = array<i64: 144, 16>}, {pipeline_mode = #tpu.pipeline_mode<synchronous>, transform_indices = @transform_2, window_bounds = array<i64: 1, 16>}, {transform_indices = @transform_3, window_bounds = array<i64: 64, 16>}]} {
    %c8_i32 = arith.constant 8 : i32
    %0 = arith.muli %arg1, %c8_i32 : i32
    %c0 = arith.constant 0 : index
    %1 = arith.index_cast %0 : i32 to index
    %c0_0 = arith.constant 0 : index
    %c0_1 = arith.constant 0 : index
    %2 = vector.load %arg2[%c0, %1, %c0_0, %c0_1] : memref<1x10x10x16xbf16, #tpu.memory_space<vmem>>, vector<1x10x10x16xbf16>
    %3 = vector.shape_cast %2 : vector<1x10x10x16xbf16> to vector<10x10x16xbf16>
    %4 = vector.extract_strided_slice %3 {offsets = [0, 0, 0], sizes = [8, 8, 16], strides = [1, 1, 1]} : vector<10x10x16xbf16> to vector<8x8x16xbf16>
    %5 = vector.shape_cast %4 : vector<8x8x16xbf16> to vector<64x16xbf16>
    %6 = vector.extract_strided_slice %3 {offsets = [0, 1, 0], sizes = [8, 8, 16], strides = [1, 1, 1]} : vector<10x10x16xbf16> to vector<8x8x16xbf16>
    %7 = vector.shape_cast %6 : vector<8x8x16xbf16> to vector<64x16xbf16>
    %8 = vector.extract_strided_slice %3 {offsets = [0, 2, 0], sizes = [8, 8, 16], strides = [1, 1, 1]} : vector<10x10x16xbf16> to vector<8x8x16xbf16>
    %9 = vector.shape_cast %8 : vector<8x8x16xbf16> to vector<64x16xbf16>
    %10 = vector.extract_strided_slice %3 {offsets = [1, 0, 0], sizes = [8, 8, 16], strides = [1, 1, 1]} : vector<10x10x16xbf16> to vector<8x8x16xbf16>
    %11 = vector.shape_cast %10 : vector<8x8x16xbf16> to vector<64x16xbf16>
    %12 = vector.extract_strided_slice %3 {offsets = [1, 1, 0], sizes = [8, 8, 16], strides = [1, 1, 1]} : vector<10x10x16xbf16> to vector<8x8x16xbf16>
    %13 = vector.shape_cast %12 : vector<8x8x16xbf16> to vector<64x16xbf16>
    %14 = vector.extract_strided_slice %3 {offsets = [1, 2, 0], sizes = [8, 8, 16], strides = [1, 1, 1]} : vector<10x10x16xbf16> to vector<8x8x16xbf16>
    %15 = vector.shape_cast %14 : vector<8x8x16xbf16> to vector<64x16xbf16>
    %16 = vector.extract_strided_slice %3 {offsets = [2, 0, 0], sizes = [8, 8, 16], strides = [1, 1, 1]} : vector<10x10x16xbf16> to vector<8x8x16xbf16>
    %17 = vector.shape_cast %16 : vector<8x8x16xbf16> to vector<64x16xbf16>
    %18 = vector.extract_strided_slice %3 {offsets = [2, 1, 0], sizes = [8, 8, 16], strides = [1, 1, 1]} : vector<10x10x16xbf16> to vector<8x8x16xbf16>
    %19 = vector.shape_cast %18 : vector<8x8x16xbf16> to vector<64x16xbf16>
    %20 = vector.extract_strided_slice %3 {offsets = [2, 2, 0], sizes = [8, 8, 16], strides = [1, 1, 1]} : vector<10x10x16xbf16> to vector<8x8x16xbf16>
    %21 = vector.shape_cast %20 : vector<8x8x16xbf16> to vector<64x16xbf16>
    %22 = tpu.concatenate %5, %7, %9, %11, %13, %15, %17, %19, %21 in 1 : vector<64x16xbf16>, vector<64x16xbf16>, vector<64x16xbf16>, vector<64x16xbf16>, vector<64x16xbf16>, vector<64x16xbf16>, vector<64x16xbf16>, vector<64x16xbf16>, vector<64x16xbf16> -> vector<64x144xbf16>
    %c0_2 = arith.constant 0 : index
    %c0_3 = arith.constant 0 : index
    %23 = vector.load %arg3[%c0_2, %c0_3] : memref<144x16xbf16, #tpu.memory_space<vmem>>, vector<144x16xbf16>
    %cst = arith.constant dense<0.000000e+00> : vector<64x16xf32>
    %24 = tpu.matmul %22, %23, %cst {dimension_numbers = #tpu.dot_dimension_numbers<[1], [0], [0], [1], [0, 0, 1, 1], [], []>} : vector<64x144xbf16>, vector<144x16xbf16>, vector<64x16xf32> -> vector<64x16xf32>
    %c0_4 = arith.constant 0 : index
    %c0_5 = arith.constant 0 : index
    %25 = vector.load %arg4[%c0_4, %c0_5] : memref<1x16xf32, #tpu.memory_space<vmem>>, vector<1x16xf32>
    %26 = vector.broadcast %25 : vector<1x16xf32> to vector<64x16xf32>
    %27 = arith.addf %24, %26 : vector<64x16xf32>
    %cst_6 = arith.constant 0.000000e+00 : f32
    %28 = vector.broadcast %cst_6 : f32 to vector<64x16xf32>
    %29 = arith.cmpf oge, %27, %28 : vector<64x16xf32>
    %cst_7 = arith.constant 2.000000e-01 : f32
    %30 = vector.broadcast %cst_7 : f32 to vector<64x16xf32>
    %31 = arith.mulf %30, %27 : vector<64x16xf32>
    %32 = arith.select %29, %27, %31 : vector<64x16xi1>, vector<64x16xf32>
    %33 = arith.truncf %32 : vector<64x16xf32> to vector<64x16xbf16>
    %c0_8 = arith.constant 0 : index
    %c0_9 = arith.constant 0 : index
    %34 = vector.load %arg5[%c0_8, %c0_9] : memref<64x16xbf16, #tpu.memory_space<vmem>>, vector<64x16xbf16>
    tpu.vector_store %arg5[%c0_8, %c0_9], %33 {strides = array<i32>} : memref<64x16xbf16, #tpu.memory_space<vmem>>, vector<64x16xbf16>,
    return
  }
  func.func @transform_0(%arg0: i32, %arg1: i32) -> (i32, i32, i32, i32) {
    %c0_i32 = arith.constant 0 : i32
    %c0_i32_0 = arith.constant 0 : i32
    %c0_i32_1 = arith.constant 0 : i32
    %c0_i32_2 = arith.constant 0 : i32
    return %arg0, %c0_i32, %c0_i32_0, %c0_i32_1 : i32, i32, i32, i32
  }
  func.func @transform_1(%arg0: i32, %arg1: i32) -> (i32, i32) {
    %c0_i32 = arith.constant 0 : i32
    %c0_i32_0 = arith.constant 0 : i32
    %c0_i32_1 = arith.constant 0 : i32
    return %c0_i32, %c0_i32_0 : i32, i32
  }
  func.func @transform_2(%arg0: i32, %arg1: i32) -> (i32, i32) {
    %c0_i32 = arith.constant 0 : i32
    %c0_i32_0 = arith.constant 0 : i32
    %c0_i32_1 = arith.constant 0 : i32
    return %c0_i32, %c0_i32_0 : i32, i32
  }
  func.func @transform_3(%arg0: i32, %arg1: i32) -> (i32, i32) {
    %c1_i32 = arith.constant 1 : i32
    %0 = arith.muli %arg0, %c1_i32 : i32
    %1 = arith.addi %0, %arg1 : i32
    %c0_i32 = arith.constant 0 : i32
    %c0_i32_0 = arith.constant 0 : i32
    return %1, %c0_i32 : i32, i32
  }
}

module attributes {stable_mosaic.version = 11 : i64} {
  func.func @_pw_dual_kernel(%arg0: i32, %arg1: memref<128x16xbf16, #tpu.memory_space<vmem>>, %arg2: memref<16x64xbf16, #tpu.memory_space<vmem>>, %arg3: memref<128x32xbf16, #tpu.memory_space<vmem>>, %arg4: memref<32x64xbf16, #tpu.memory_space<vmem>>, %arg5: memref<1x64xf32, #tpu.memory_space<vmem>>, %arg6: memref<128x64xbf16, #tpu.memory_space<vmem>>) attributes {dimension_semantics = [#tpu.dimension_semantics<parallel>], iteration_bounds = array<i64: 1>, scalar_prefetch = 0 : i64, scratch_operands = 0 : i64, tpu.core_type = #tpu.core_type<tc>, window_params = [{transform_indices = @transform_0, window_bounds = array<i64: 128, 16>}, {pipeline_mode = #tpu.pipeline_mode<synchronous>, transform_indices = @transform_1, window_bounds = array<i64: 16, 64>}, {transform_indices = @transform_2, window_bounds = array<i64: 128, 32>}, {pipeline_mode = #tpu.pipeline_mode<synchronous>, transform_indices = @transform_3, window_bounds = array<i64: 32, 64>}, {pipeline_mode = #tpu.pipeline_mode<synchronous>, transform_indices = @transform_4, window_bounds = array<i64: 1, 64>}, {transform_indices = @transform_5, window_bounds = array<i64: 128, 64>}]} {
    %c0 = arith.constant 0 : index
    %c0_0 = arith.constant 0 : index
    %0 = vector.load %arg1[%c0, %c0_0] : memref<128x16xbf16, #tpu.memory_space<vmem>>, vector<128x16xbf16>
    %c0_1 = arith.constant 0 : index
    %c0_2 = arith.constant 0 : index
    %1 = vector.load %arg2[%c0_1, %c0_2] : memref<16x64xbf16, #tpu.memory_space<vmem>>, vector<16x64xbf16>
    %cst = arith.constant dense<0.000000e+00> : vector<128x64xf32>
    %2 = tpu.matmul %0, %1, %cst {dimension_numbers = #tpu.dot_dimension_numbers<[1], [0], [0], [1], [0, 0, 1, 1], [], []>} : vector<128x16xbf16>, vector<16x64xbf16>, vector<128x64xf32> -> vector<128x64xf32>
    %c0_3 = arith.constant 0 : index
    %c0_4 = arith.constant 0 : index
    %3 = vector.load %arg3[%c0_3, %c0_4] : memref<128x32xbf16, #tpu.memory_space<vmem>>, vector<128x32xbf16>
    %c0_5 = arith.constant 0 : index
    %c0_6 = arith.constant 0 : index
    %4 = vector.load %arg4[%c0_5, %c0_6] : memref<32x64xbf16, #tpu.memory_space<vmem>>, vector<32x64xbf16>
    %cst_7 = arith.constant dense<0.000000e+00> : vector<128x64xf32>
    %5 = tpu.matmul %3, %4, %cst_7 {dimension_numbers = #tpu.dot_dimension_numbers<[1], [0], [0], [1], [0, 0, 1, 1], [], []>} : vector<128x32xbf16>, vector<32x64xbf16>, vector<128x64xf32> -> vector<128x64xf32>
    %6 = arith.addf %2, %5 : vector<128x64xf32>
    %c0_8 = arith.constant 0 : index
    %c0_9 = arith.constant 0 : index
    %7 = vector.load %arg5[%c0_8, %c0_9] : memref<1x64xf32, #tpu.memory_space<vmem>>, vector<1x64xf32>
    %8 = vector.broadcast %7 : vector<1x64xf32> to vector<128x64xf32>
    %9 = arith.addf %6, %8 : vector<128x64xf32>
    %cst_10 = arith.constant 0.000000e+00 : f32
    %10 = vector.broadcast %cst_10 : f32 to vector<128x64xf32>
    %11 = arith.cmpf oge, %9, %10 : vector<128x64xf32>
    %cst_11 = arith.constant 2.000000e-01 : f32
    %12 = vector.broadcast %cst_11 : f32 to vector<128x64xf32>
    %13 = arith.mulf %12, %9 : vector<128x64xf32>
    %14 = arith.select %11, %9, %13 : vector<128x64xi1>, vector<128x64xf32>
    %15 = arith.truncf %14 : vector<128x64xf32> to vector<128x64xbf16>
    %c0_12 = arith.constant 0 : index
    %c0_13 = arith.constant 0 : index
    %16 = vector.load %arg6[%c0_12, %c0_13] : memref<128x64xbf16, #tpu.memory_space<vmem>>, vector<128x64xbf16>
    tpu.vector_store %arg6[%c0_12, %c0_13], %15 {strides = array<i32>} : memref<128x64xbf16, #tpu.memory_space<vmem>>, vector<128x64xbf16>,
    return
  }
  func.func @transform_0(%arg0: i32) -> (i32, i32) {
    %c0_i32 = arith.constant 0 : i32
    %c0_i32_0 = arith.constant 0 : i32
    return %arg0, %c0_i32 : i32, i32
  }
  func.func @transform_1(%arg0: i32) -> (i32, i32) {
    %c0_i32 = arith.constant 0 : i32
    %c0_i32_0 = arith.constant 0 : i32
    %c0_i32_1 = arith.constant 0 : i32
    return %c0_i32, %c0_i32_0 : i32, i32
  }
  func.func @transform_2(%arg0: i32) -> (i32, i32) {
    %c0_i32 = arith.constant 0 : i32
    %c0_i32_0 = arith.constant 0 : i32
    return %arg0, %c0_i32 : i32, i32
  }
  func.func @transform_3(%arg0: i32) -> (i32, i32) {
    %c0_i32 = arith.constant 0 : i32
    %c0_i32_0 = arith.constant 0 : i32
    %c0_i32_1 = arith.constant 0 : i32
    return %c0_i32, %c0_i32_0 : i32, i32
  }
  func.func @transform_4(%arg0: i32) -> (i32, i32) {
    %c0_i32 = arith.constant 0 : i32
    %c0_i32_0 = arith.constant 0 : i32
    %c0_i32_1 = arith.constant 0 : i32
    return %c0_i32, %c0_i32_0 : i32, i32
  }
  func.func @transform_5(%arg0: i32) -> (i32, i32) {
    %c0_i32 = arith.constant 0 : i32
    %c0_i32_0 = arith.constant 0 : i32
    return %arg0, %c0_i32 : i32, i32
  }
}

module attributes {stable_mosaic.version = 11 : i64} {
  func.func @_conv3x3_kernel(%arg0: i32, %arg1: i32, %arg2: memref<1x10x10x64xbf16, #tpu.memory_space<vmem>>, %arg3: memref<576x64xbf16, #tpu.memory_space<vmem>>, %arg4: memref<1x64xf32, #tpu.memory_space<vmem>>, %arg5: memref<64x64xbf16, #tpu.memory_space<vmem>>) attributes {dimension_semantics = [#tpu.dimension_semantics<parallel>, #tpu.dimension_semantics<arbitrary>], iteration_bounds = array<i64: 2, 1>, scalar_prefetch = 0 : i64, scratch_operands = 0 : i64, tpu.core_type = #tpu.core_type<tc>, window_params = [{transform_indices = @transform_0, window_bounds = array<i64: 1, 10, 10, 64>}, {pipeline_mode = #tpu.pipeline_mode<synchronous>, transform_indices = @transform_1, window_bounds = array<i64: 576, 64>}, {pipeline_mode = #tpu.pipeline_mode<synchronous>, transform_indices = @transform_2, window_bounds = array<i64: 1, 64>}, {transform_indices = @transform_3, window_bounds = array<i64: 64, 64>}]} {
    %c8_i32 = arith.constant 8 : i32
    %0 = arith.muli %arg1, %c8_i32 : i32
    %c0 = arith.constant 0 : index
    %1 = arith.index_cast %0 : i32 to index
    %c0_0 = arith.constant 0 : index
    %c0_1 = arith.constant 0 : index
    %2 = vector.load %arg2[%c0, %1, %c0_0, %c0_1] : memref<1x10x10x64xbf16, #tpu.memory_space<vmem>>, vector<1x10x10x64xbf16>
    %3 = vector.shape_cast %2 : vector<1x10x10x64xbf16> to vector<10x10x64xbf16>
    %4 = vector.extract_strided_slice %3 {offsets = [0, 0, 0], sizes = [8, 8, 64], strides = [1, 1, 1]} : vector<10x10x64xbf16> to vector<8x8x64xbf16>
    %5 = vector.shape_cast %4 : vector<8x8x64xbf16> to vector<64x64xbf16>
    %6 = vector.extract_strided_slice %3 {offsets = [0, 1, 0], sizes = [8, 8, 64], strides = [1, 1, 1]} : vector<10x10x64xbf16> to vector<8x8x64xbf16>
    %7 = vector.shape_cast %6 : vector<8x8x64xbf16> to vector<64x64xbf16>
    %8 = vector.extract_strided_slice %3 {offsets = [0, 2, 0], sizes = [8, 8, 64], strides = [1, 1, 1]} : vector<10x10x64xbf16> to vector<8x8x64xbf16>
    %9 = vector.shape_cast %8 : vector<8x8x64xbf16> to vector<64x64xbf16>
    %10 = vector.extract_strided_slice %3 {offsets = [1, 0, 0], sizes = [8, 8, 64], strides = [1, 1, 1]} : vector<10x10x64xbf16> to vector<8x8x64xbf16>
    %11 = vector.shape_cast %10 : vector<8x8x64xbf16> to vector<64x64xbf16>
    %12 = vector.extract_strided_slice %3 {offsets = [1, 1, 0], sizes = [8, 8, 64], strides = [1, 1, 1]} : vector<10x10x64xbf16> to vector<8x8x64xbf16>
    %13 = vector.shape_cast %12 : vector<8x8x64xbf16> to vector<64x64xbf16>
    %14 = vector.extract_strided_slice %3 {offsets = [1, 2, 0], sizes = [8, 8, 64], strides = [1, 1, 1]} : vector<10x10x64xbf16> to vector<8x8x64xbf16>
    %15 = vector.shape_cast %14 : vector<8x8x64xbf16> to vector<64x64xbf16>
    %16 = vector.extract_strided_slice %3 {offsets = [2, 0, 0], sizes = [8, 8, 64], strides = [1, 1, 1]} : vector<10x10x64xbf16> to vector<8x8x64xbf16>
    %17 = vector.shape_cast %16 : vector<8x8x64xbf16> to vector<64x64xbf16>
    %18 = vector.extract_strided_slice %3 {offsets = [2, 1, 0], sizes = [8, 8, 64], strides = [1, 1, 1]} : vector<10x10x64xbf16> to vector<8x8x64xbf16>
    %19 = vector.shape_cast %18 : vector<8x8x64xbf16> to vector<64x64xbf16>
    %20 = vector.extract_strided_slice %3 {offsets = [2, 2, 0], sizes = [8, 8, 64], strides = [1, 1, 1]} : vector<10x10x64xbf16> to vector<8x8x64xbf16>
    %21 = vector.shape_cast %20 : vector<8x8x64xbf16> to vector<64x64xbf16>
    %22 = tpu.concatenate %5, %7, %9, %11, %13, %15, %17, %19, %21 in 1 : vector<64x64xbf16>, vector<64x64xbf16>, vector<64x64xbf16>, vector<64x64xbf16>, vector<64x64xbf16>, vector<64x64xbf16>, vector<64x64xbf16>, vector<64x64xbf16>, vector<64x64xbf16> -> vector<64x576xbf16>
    %c0_2 = arith.constant 0 : index
    %c0_3 = arith.constant 0 : index
    %23 = vector.load %arg3[%c0_2, %c0_3] : memref<576x64xbf16, #tpu.memory_space<vmem>>, vector<576x64xbf16>
    %cst = arith.constant dense<0.000000e+00> : vector<64x64xf32>
    %24 = tpu.matmul %22, %23, %cst {dimension_numbers = #tpu.dot_dimension_numbers<[1], [0], [0], [1], [0, 0, 1, 1], [], []>} : vector<64x576xbf16>, vector<576x64xbf16>, vector<64x64xf32> -> vector<64x64xf32>
    %c0_4 = arith.constant 0 : index
    %c0_5 = arith.constant 0 : index
    %25 = vector.load %arg4[%c0_4, %c0_5] : memref<1x64xf32, #tpu.memory_space<vmem>>, vector<1x64xf32>
    %26 = vector.broadcast %25 : vector<1x64xf32> to vector<64x64xf32>
    %27 = arith.addf %24, %26 : vector<64x64xf32>
    %cst_6 = arith.constant 0.000000e+00 : f32
    %28 = vector.broadcast %cst_6 : f32 to vector<64x64xf32>
    %29 = arith.cmpf oge, %27, %28 : vector<64x64xf32>
    %cst_7 = arith.constant 2.000000e-01 : f32
    %30 = vector.broadcast %cst_7 : f32 to vector<64x64xf32>
    %31 = arith.mulf %30, %27 : vector<64x64xf32>
    %32 = arith.select %29, %27, %31 : vector<64x64xi1>, vector<64x64xf32>
    %33 = arith.truncf %32 : vector<64x64xf32> to vector<64x64xbf16>
    %c0_8 = arith.constant 0 : index
    %c0_9 = arith.constant 0 : index
    %34 = vector.load %arg5[%c0_8, %c0_9] : memref<64x64xbf16, #tpu.memory_space<vmem>>, vector<64x64xbf16>
    tpu.vector_store %arg5[%c0_8, %c0_9], %33 {strides = array<i32>} : memref<64x64xbf16, #tpu.memory_space<vmem>>, vector<64x64xbf16>,
    return
  }
  func.func @transform_0(%arg0: i32, %arg1: i32) -> (i32, i32, i32, i32) {
    %c0_i32 = arith.constant 0 : i32
    %c0_i32_0 = arith.constant 0 : i32
    %c0_i32_1 = arith.constant 0 : i32
    %c0_i32_2 = arith.constant 0 : i32
    return %arg0, %c0_i32, %c0_i32_0, %c0_i32_1 : i32, i32, i32, i32
  }
  func.func @transform_1(%arg0: i32, %arg1: i32) -> (i32, i32) {
    %c0_i32 = arith.constant 0 : i32
    %c0_i32_0 = arith.constant 0 : i32
    %c0_i32_1 = arith.constant 0 : i32
    return %c0_i32, %c0_i32_0 : i32, i32
  }
  func.func @transform_2(%arg0: i32, %arg1: i32) -> (i32, i32) {
    %c0_i32 = arith.constant 0 : i32
    %c0_i32_0 = arith.constant 0 : i32
    %c0_i32_1 = arith.constant 0 : i32
    return %c0_i32, %c0_i32_0 : i32, i32
  }
  func.func @transform_3(%arg0: i32, %arg1: i32) -> (i32, i32) {
    %c1_i32 = arith.constant 1 : i32
    %0 = arith.muli %arg0, %c1_i32 : i32
    %1 = arith.addi %0, %arg1 : i32
    %c0_i32 = arith.constant 0 : i32
    %c0_i32_0 = arith.constant 0 : i32
    return %1, %c0_i32 : i32, i32
  }
}

module attributes {stable_mosaic.version = 11 : i64} {
  func.func @_pw_res_kernel(%arg0: i32, %arg1: memref<128x64xbf16, #tpu.memory_space<vmem>>, %arg2: memref<64x64xbf16, #tpu.memory_space<vmem>>, %arg3: memref<1x64xf32, #tpu.memory_space<vmem>>, %arg4: memref<128x64xbf16, #tpu.memory_space<vmem>>, %arg5: memref<128x64xbf16, #tpu.memory_space<vmem>>) attributes {dimension_semantics = [#tpu.dimension_semantics<parallel>], iteration_bounds = array<i64: 1>, scalar_prefetch = 0 : i64, scratch_operands = 0 : i64, tpu.core_type = #tpu.core_type<tc>, window_params = [{transform_indices = @transform_0, window_bounds = array<i64: 128, 64>}, {pipeline_mode = #tpu.pipeline_mode<synchronous>, transform_indices = @transform_1, window_bounds = array<i64: 64, 64>}, {pipeline_mode = #tpu.pipeline_mode<synchronous>, transform_indices = @transform_2, window_bounds = array<i64: 1, 64>}, {transform_indices = @transform_3, window_bounds = array<i64: 128, 64>}, {transform_indices = @transform_4, window_bounds = array<i64: 128, 64>}]} {
    %c0 = arith.constant 0 : index
    %c0_0 = arith.constant 0 : index
    %0 = vector.load %arg1[%c0, %c0_0] : memref<128x64xbf16, #tpu.memory_space<vmem>>, vector<128x64xbf16>
    %c0_1 = arith.constant 0 : index
    %c0_2 = arith.constant 0 : index
    %1 = vector.load %arg2[%c0_1, %c0_2] : memref<64x64xbf16, #tpu.memory_space<vmem>>, vector<64x64xbf16>
    %cst = arith.constant dense<0.000000e+00> : vector<128x64xf32>
    %2 = tpu.matmul %0, %1, %cst {dimension_numbers = #tpu.dot_dimension_numbers<[1], [0], [0], [1], [0, 0, 1, 1], [], []>} : vector<128x64xbf16>, vector<64x64xbf16>, vector<128x64xf32> -> vector<128x64xf32>
    %c0_3 = arith.constant 0 : index
    %c0_4 = arith.constant 0 : index
    %3 = vector.load %arg3[%c0_3, %c0_4] : memref<1x64xf32, #tpu.memory_space<vmem>>, vector<1x64xf32>
    %4 = vector.broadcast %3 : vector<1x64xf32> to vector<128x64xf32>
    %5 = arith.addf %2, %4 : vector<128x64xf32>
    %c0_5 = arith.constant 0 : index
    %c0_6 = arith.constant 0 : index
    %6 = vector.load %arg4[%c0_5, %c0_6] : memref<128x64xbf16, #tpu.memory_space<vmem>>, vector<128x64xbf16>
    %7 = arith.extf %6 : vector<128x64xbf16> to vector<128x64xf32>
    %8 = arith.addf %5, %7 : vector<128x64xf32>
    %cst_7 = arith.constant 0.000000e+00 : f32
    %9 = vector.broadcast %cst_7 : f32 to vector<128x64xf32>
    %10 = arith.cmpf oge, %8, %9 : vector<128x64xf32>
    %cst_8 = arith.constant 2.000000e-01 : f32
    %11 = vector.broadcast %cst_8 : f32 to vector<128x64xf32>
    %12 = arith.mulf %11, %8 : vector<128x64xf32>
    %13 = arith.select %10, %8, %12 : vector<128x64xi1>, vector<128x64xf32>
    %14 = arith.truncf %13 : vector<128x64xf32> to vector<128x64xbf16>
    %c0_9 = arith.constant 0 : index
    %c0_10 = arith.constant 0 : index
    %15 = vector.load %arg5[%c0_9, %c0_10] : memref<128x64xbf16, #tpu.memory_space<vmem>>, vector<128x64xbf16>
    tpu.vector_store %arg5[%c0_9, %c0_10], %14 {strides = array<i32>} : memref<128x64xbf16, #tpu.memory_space<vmem>>, vector<128x64xbf16>,
    return
  }
  func.func @transform_0(%arg0: i32) -> (i32, i32) {
    %c0_i32 = arith.constant 0 : i32
    %c0_i32_0 = arith.constant 0 : i32
    return %arg0, %c0_i32 : i32, i32
  }
  func.func @transform_1(%arg0: i32) -> (i32, i32) {
    %c0_i32 = arith.constant 0 : i32
    %c0_i32_0 = arith.constant 0 : i32
    %c0_i32_1 = arith.constant 0 : i32
    return %c0_i32, %c0_i32_0 : i32, i32
  }
  func.func @transform_2(%arg0: i32) -> (i32, i32) {
    %c0_i32 = arith.constant 0 : i32
    %c0_i32_0 = arith.constant 0 : i32
    %c0_i32_1 = arith.constant 0 : i32
    return %c0_i32, %c0_i32_0 : i32, i32
  }
  func.func @transform_3(%arg0: i32) -> (i32, i32) {
    %c0_i32 = arith.constant 0 : i32
    %c0_i32_0 = arith.constant 0 : i32
    return %arg0, %c0_i32 : i32, i32
  }
  func.func @transform_4(%arg0: i32) -> (i32, i32) {
    %c0_i32 = arith.constant 0 : i32
    %c0_i32_0 = arith.constant 0 : i32
    return %arg0, %c0_i32 : i32, i32
  }
}

</mosaic_0001>

<llo_original>
// kernel: conv3_forward.6
$region0: #{conv3_forward.6}
  #allocation0 [shape = 'u32[]', space=smem, size = 0x4, offset = 0x4, fixed_abs, tag = 'smem constant byte address 0x4 - core index']
  #allocation1 [shape = 'u32[144,128]{1,0:T(1,128)}', space=vmem, size = 0x12000, scoped, tag = 'internal scratch']
  %s0 = inlined_call_operand.vmem [shape: bf16[128,32], index: 0, kind: input, shape index: {}]
  %s1 = inlined_call_operand.vmem [shape: bf16[32,16], index: 1, kind: input, shape index: {}]
  %s2 = inlined_call_operand.vmem [shape: f32[1,16], index: 2, kind: input, shape index: {}]
  %s3 = inlined_call_operand.vmem [shape: bf16[128,16], index: 3, kind: output, shape index: {}]
  %s4 = sld [smem:[#allocation0]]
  $region22: #{conv3_forward.6} parent=0
    _
  %s6 = ssub.s32 1, %s4
  %s7 = scalar_select 0, %s6, %s4
  // Predicated region
  $region2: #{conv3_forward.6} parent=0 // pred_check
    _
  $region3: #{conv3_forward.6} parent=0 // pred_check_branch
    %9 = sbr.rel (0) target = $region5
  $region4: #{conv3_forward.6} parent=0 // pred_region
    _
  $region5: #{conv3_forward.6} parent=0 // pred_fallthru
    _
  // Predicated region
  $region6: #{conv3_forward.6} parent=0 // pred_check
    _
  $region7: #{conv3_forward.6} parent=0 // pred_check_branch
    %11 = sbr.rel (0) target = $region9
  $region8: #{conv3_forward.6} parent=0 // pred_region
    _
  $region9: #{conv3_forward.6} parent=0 // pred_fallthru
    _
  // Predicated region
  $region10: #{conv3_forward.6} parent=0 // pred_check
    _
  $region11: #{conv3_forward.6} parent=0 // pred_check_branch
    %13 = sbr.rel (0) target = $region13
  $region12: #{conv3_forward.6} parent=0 // pred_region
    _
  $region13: #{conv3_forward.6} parent=0 // pred_fallthru
    _
  %v15 = vld [vmem:[%s0] sm:$0xf]
  %v16 = vld [vmem:[%s0 + $0x4] sm:$0xf]
  %v17 = vld [vmem:[%s0 + $0x8] sm:$0xf]
  %v18 = vld [vmem:[%s0 + $0xc] sm:$0xf]
  %v19 = vld [vmem:[%s0 + $0x10] sm:$0xf]
  %v20 = vld [vmem:[%s0 + $0x14] sm:$0xf]
  %v21 = vld [vmem:[%s0 + $0x18] sm:$0xf]
  %v22 = vld [vmem:[%s0 + $0x1c] sm:$0xf]
  %v23 = vld [vmem:[%s0 + $0x20] sm:$0xf]
  %v24 = vld [vmem:[%s0 + $0x24] sm:$0xf]
  %v25 = vld [vmem:[%s0 + $0x28] sm:$0xf]
  %v26 = vld [vmem:[%s0 + $0x2c] sm:$0xf]
  %v27 = vld [vmem:[%s0 + $0x30] sm:$0xf]
  %v28 = vld [vmem:[%s0 + $0x34] sm:$0xf]
  %v29 = vld [vmem:[%s0 + $0x38] sm:$0xf]
  %v30 = vld [vmem:[%s0 + $0x3c] sm:$0xf]
  %v31 = vld [vmem:[%s1] sm:$0xf]
  %v32 = vld [vmem:[%s1 + $0x4] sm:$0xf]
  %v33 = vld [vmem:[%s1 + $0x8] sm:$0xf]
  %v34 = vld [vmem:[%s1 + $0xc] sm:$0xf]
  %v35 = vld [vmem:[%s2] sm:$0x1]
  %v37 = vlaneseq
  %v38 = vshrl.u32 %v37, 7
  %v39 = vsub.s32 0, %v38
  %v40 = vrot.slane %v35, %v39
  %v58 = vunpack.c.l.b16 %v15
  %v59 = vunpack.c.l.b16 %v16
  %v60 = vunpack.c.l.b16 %v17
  %v61 = vunpack.c.l.b16 %v18
  %v62 = vunpack.c.l.b16 %v19
  %v63 = vunpack.c.l.b16 %v20
  %v64 = vunpack.c.l.b16 %v21
  %v65 = vunpack.c.l.b16 %v22
  %v66 = vunpack.c.l.b16 %v23
  %v67 = vunpack.c.l.b16 %v24
  %v68 = vunpack.c.l.b16 %v25
  %v69 = vunpack.c.l.b16 %v26
  %v70 = vunpack.c.l.b16 %v27
  %v71 = vunpack.c.l.b16 %v28
  %v72 = vunpack.c.l.b16 %v29
  %v73 = vunpack.c.l.b16 %v30
  %v74 = vpack.c.b16 %v59, %v58
  %v75 = vpack.c.b16 %v61, %v60
  %v76 = vpack.c.b16 %v63, %v62
  %v77 = vpack.c.b16 %v65, %v64
  %v78 = vpack.c.b16 %v67, %v66
  %v79 = vpack.c.b16 %v69, %v68
  %v80 = vpack.c.b16 %v71, %v70
  %v81 = vpack.c.b16 %v73, %v72
  %v86 = vunpack.c.l.b16 %v31
  %v87 = vunpack.c.l.b16 %v32
  %v88 = vunpack.c.l.b16 %v33
  %v89 = vunpack.c.l.b16 %v34
  %v90 = vpack.c.b16 %v87, %v86
  %v91 = vpack.c.b16 %v89, %v88
  %vm94 = vcmask 261120
  %v96 = vsel %vm94, %v74, 0
  %v99 = vsel %vm94, %v75, 0
  %v102 = vsel %vm94, %v76, 0
  %v105 = vsel %vm94, %v77, 0
  %v108 = vsel %vm94, %v78, 0
  %v111 = vsel %vm94, %v79, 0
  %v114 = vsel %vm94, %v80, 0
  %v117 = vsel %vm94, %v81, 0
  %119 = vmatprep.subr.bf16.mxu0 0
  %120 = vmatpush1.bf16.msra.mxu0 %v90
  %121 = vmatprep.subr.bf16.mxu0 0
  %122 = vmatpush1.bf16.msra.mxu0 %v91
  %123 = vmatprep.subr.bf16.mxu0 0
  %124 = vmatpush1.bf16.msra.mxu0 0
  %125 = vmatprep.subr.bf16.mxu0 0
  %126 = vmatpush1.bf16.msra.mxu0 0
  %127 = vmatprep.subr.bf16.mxu0 0
  %128 = vmatpush1.bf16.msra.mxu0 0
  %129 = vmatprep.subr.bf16.mxu0 0
  %130 = vmatpush1.bf16.msra.mxu0 0
  %131 = vmatprep.subr.bf16.mxu0 0
  %132 = vmatpush1.bf16.msra.mxu0 0
  %133 = vmatprep.subr.bf16.mxu0 0
  %134 = vmatpush1.bf16.msra.mxu0 0
  %135 = vmatprep.subr.bf16.mxu0 0
  %136 = vmatpush1.bf16.msra.mxu0 0
  %137 = vmatprep.subr.bf16.mxu0 0
  %138 = vmatpush1.bf16.msra.mxu0 0
  %139 = vmatprep.subr.bf16.mxu0 0
  %140 = vmatpush1.bf16.msra.mxu0 0
  %141 = vmatprep.subr.bf16.mxu0 0
  %142 = vmatpush1.bf16.msra.mxu0 0
  %143 = vmatprep.subr.bf16.mxu0 0
  %144 = vmatpush1.bf16.msra.mxu0 0
  %145 = vmatprep.subr.bf16.mxu0 0
  %146 = vmatpush1.bf16.msra.mxu0 0
  %147 = vmatprep.subr.bf16.mxu0 0
  %148 = vmatpush1.bf16.msra.mxu0 0
  %149 = vmatprep.subr.bf16.mxu0 0
  %150 = vmatpush1.bf16.msra.mxu0 0
  %151 = vmatprep.mubr.bf16.mxu0 0
  %152 = vmatmul.mubr.bf16.gmra.mrb[0].mxu0 %v96
  %v153 = vpop.f32.mrb[0].mxu0
  %v154 = vadd.f32 %v40, %v153
  %v155 = vpop.f32.mrb[0].mxu0
  %v156 = vpop.f32.mrb[0].mxu0
  %v157 = vadd.f32 %v40, %v156
  %v158 = vpop.f32.mrb[0].mxu0
  %159 = vmatprep.mubr.bf16.mxu0 0
  %160 = vmatmul.mubr.bf16.gmra.mrb[0].mxu0 %v99
  %v161 = vpop.f32.mrb[0].mxu0
  %v162 = vadd.f32 %v40, %v161
  %v163 = vpop.f32.mrb[0].mxu0
  %v164 = vpop.f32.mrb[0].mxu0
  %v165 = vadd.f32 %v40, %v164
  %v166 = vpop.f32.mrb[0].mxu0
  %167 = vmatprep.mubr.bf16.mxu0 0
  %168 = vmatmul.mubr.bf16.gmra.mrb[0].mxu0 %v102
  %v169 = vpop.f32.mrb[0].mxu0
  %v170 = vadd.f32 %v40, %v169
  %v171 = vpop.f32.mrb[0].mxu0
  %v172 = vpop.f32.mrb[0].mxu0
  %v173 = vadd.f32 %v40, %v172
  %v174 = vpop.f32.mrb[0].mxu0
  %175 = vmatprep.mubr.bf16.mxu0 0
  %176 = vmatmul.mubr.bf16.gmra.mrb[0].mxu0 %v105
  %v177 = vpop.f32.mrb[0].mxu0
  %v178 = vadd.f32 %v40, %v177
  %v179 = vpop.f32.mrb[0].mxu0
  %v180 = vpop.f32.mrb[0].mxu0
  %v181 = vadd.f32 %v40, %v180
  %v182 = vpop.f32.mrb[0].mxu0
  %183 = vmatprep.mubr.bf16.mxu0 0
  %184 = vmatmul.mubr.bf16.gmra.mrb[0].mxu0 %v108
  %v185 = vpop.f32.mrb[0].mxu0
  %v186 = vadd.f32 %v40, %v185
  %v187 = vpop.f32.mrb[0].mxu0
  %v188 = vpop.f32.mrb[0].mxu0
  %v189 = vadd.f32 %v40, %v188
  %v190 = vpop.f32.mrb[0].mxu0
  %191 = vmatprep.mubr.bf16.mxu0 0
  %192 = vmatmul.mubr.bf16.gmra.mrb[0].mxu0 %v111
  %v193 = vpop.f32.mrb[0].mxu0
  %v194 = vadd.f32 %v40, %v193
  %v195 = vpop.f32.mrb[0].mxu0
  %v196 = vpop.f32.mrb[0].mxu0
  %v197 = vadd.f32 %v40, %v196
  %v198 = vpop.f32.mrb[0].mxu0
  %199 = vmatprep.mubr.bf16.mxu0 0
  %200 = vmatmul.mubr.bf16.gmra.mrb[0].mxu0 %v114
  %v201 = vpop.f32.mrb[0].mxu0
  %v202 = vadd.f32 %v40, %v201
  %v203 = vpop.f32.mrb[0].mxu0
  %v204 = vpop.f32.mrb[0].mxu0
  %v205 = vadd.f32 %v40, %v204
  %v206 = vpop.f32.mrb[0].mxu0
  %207 = vmatprep.mubr.bf16.mxu0 0
  %208 = vmatmul.mubr.bf16.gmra.mrb[0].mxu0 %v117
  %v209 = vpop.f32.mrb[0].mxu0
  %v210 = vadd.f32 %v40, %v209
  %v211 = vpop.f32.mrb[0].mxu0
  %v212 = vpop.f32.mrb[0].mxu0
  %v213 = vadd.f32 %v40, %v212
  %v214 = vpop.f32.mrb[0].mxu0
  %215 = vdwg.mxu0
  %vm216 = vcmp.ge.f32.partialorder %v154, 0.0
  %vm217 = vcmp.ge.f32.partialorder %v157, 0.0
  %vm218 = vcmp.ge.f32.partialorder %v162, 0.0
  %vm219 = vcmp.ge.f32.partialorder %v165, 0.0
  %vm220 = vcmp.ge.f32.partialorder %v170, 0.0
  %vm221 = vcmp.ge.f32.partialorder %v173, 0.0
  %vm222 = vcmp.ge.f32.partialorder %v178, 0.0
  %vm223 = vcmp.ge.f32.partialorder %v181, 0.0
  %vm224 = vcmp.ge.f32.partialorder %v186, 0.0
  %vm225 = vcmp.ge.f32.partialorder %v189, 0.0
  %vm226 = vcmp.ge.f32.partialorder %v194, 0.0
  %vm227 = vcmp.ge.f32.partialorder %v197, 0.0
  %vm228 = vcmp.ge.f32.partialorder %v202, 0.0
  %vm229 = vcmp.ge.f32.partialorder %v205, 0.0
  %vm230 = vcmp.ge.f32.partialorder %v210, 0.0
  %vm231 = vcmp.ge.f32.partialorder %v213, 0.0
  %v232 = vmul.f32 %v154, 0.2
  %v233 = vmul.f32 %v157, 0.2
  %v234 = vmul.f32 %v162, 0.2
  %v235 = vmul.f32 %v165, 0.2
  %v236 = vmul.f32 %v170, 0.2
  %v237 = vmul.f32 %v173, 0.2
  %v238 = vmul.f32 %v178, 0.2
  %v239 = vmul.f32 %v181, 0.2
  %v240 = vmul.f32 %v186, 0.2
  %v241 = vmul.f32 %v189, 0.2
  %v242 = vmul.f32 %v194, 0.2
  %v243 = vmul.f32 %v197, 0.2
  %v244 = vmul.f32 %v202, 0.2
  %v245 = vmul.f32 %v205, 0.2
  %v246 = vmul.f32 %v210, 0.2
  %v247 = vmul.f32 %v213, 0.2
  %v248 = vsel %vm216, %v154, %v232
  %v249 = vsel %vm217, %v157, %v233
  %v250 = vsel %vm218, %v162, %v234
  %v251 = vsel %vm219, %v165, %v235
  %v252 = vsel %vm220, %v170, %v236
  %v253 = vsel %vm221, %v173, %v237
  %v254 = vsel %vm222, %v178, %v238
  %v255 = vsel %vm223, %v181, %v239
  %v256 = vsel %vm224, %v186, %v240
  %v257 = vsel %vm225, %v189, %v241
  %v258 = vsel %vm226, %v194, %v242
  %v259 = vsel %vm227, %v197, %v243
  %v260 = vsel %vm228, %v202, %v244
  %v261 = vsel %vm229, %v205, %v245
  %v262 = vsel %vm230, %v210, %v246
  %v263 = vsel %vm231, %v213, %v247
  %v264 = vpack.c.bf16 %v249, %v248
  %v265 = vpack.c.bf16 %v251, %v250
  %v266 = vpack.c.bf16 %v253, %v252
  %v267 = vpack.c.bf16 %v255, %v254
  %v268 = vpack.c.bf16 %v257, %v256
  %v269 = vpack.c.bf16 %v259, %v258
  %v270 = vpack.c.bf16 %v261, %v260
  %v271 = vpack.c.bf16 %v263, %v262
  %v280 = vunpack.c.l.b16 %v264
  %v281 = vunpack.c.h.b16 %v264
  %v282 = vunpack.c.l.b16 %v265
  %v283 = vunpack.c.h.b16 %v265
  %v284 = vunpack.c.l.b16 %v266
  %v285 = vunpack.c.h.b16 %v266
  %v286 = vunpack.c.l.b16 %v267
  %v287 = vunpack.c.h.b16 %v267
  %v288 = vunpack.c.l.b16 %v268
  %v289 = vunpack.c.h.b16 %v268
  %v290 = vunpack.c.l.b16 %v269
  %v291 = vunpack.c.h.b16 %v269
  %v292 = vunpack.c.l.b16 %v270
  %v293 = vunpack.c.h.b16 %v270
  %v294 = vunpack.c.l.b16 %v271
  %v295 = vunpack.c.h.b16 %v271
  %v296 = vpack.c.b16 %v280, %v280
  %v297 = vpack.c.b16 %v281, %v281
  %v298 = vpack.c.b16 %v282, %v282
  %v299 = vpack.c.b16 %v283, %v283
  %v300 = vpack.c.b16 %v284, %v284
  %v301 = vpack.c.b16 %v285, %v285
  %v302 = vpack.c.b16 %v286, %v286
  %v303 = vpack.c.b16 %v287, %v287
  %v304 = vpack.c.b16 %v288, %v288
  %v305 = vpack.c.b16 %v289, %v289
  %v306 = vpack.c.b16 %v290, %v290
  %v307 = vpack.c.b16 %v291, %v291
  %v308 = vpack.c.b16 %v292, %v292
  %v309 = vpack.c.b16 %v293, %v293
  %v310 = vpack.c.b16 %v294, %v294
  %v311 = vpack.c.b16 %v295, %v295
  %vm328 = vcmask 125952
  %329 = vst.msk [vmem:[%s3] sm:$0xf] %vm328, %v296
  %330 = vst.msk [vmem:[%s3 + $0x4] sm:$0xf] %vm328, %v297
  %331 = vst.msk [vmem:[%s3 + $0x8] sm:$0xf] %vm328, %v298
  %332 = vst.msk [vmem:[%s3 + $0xc] sm:$0xf] %vm328, %v299
  %333 = vst.msk [vmem:[%s3 + $0x10] sm:$0xf] %vm328, %v300
  %334 = vst.msk [vmem:[%s3 + $0x14] sm:$0xf] %vm328, %v301
  %335 = vst.msk [vmem:[%s3 + $0x18] sm:$0xf] %vm328, %v302
  %336 = vst.msk [vmem:[%s3 + $0x1c] sm:$0xf] %vm328, %v303
  %337 = vst.msk [vmem:[%s3 + $0x20] sm:$0xf] %vm328, %v304
  %338 = vst.msk [vmem:[%s3 + $0x24] sm:$0xf] %vm328, %v305
  %339 = vst.msk [vmem:[%s3 + $0x28] sm:$0xf] %vm328, %v306
  %340 = vst.msk [vmem:[%s3 + $0x2c] sm:$0xf] %vm328, %v307
  %341 = vst.msk [vmem:[%s3 + $0x30] sm:$0xf] %vm328, %v308
  %342 = vst.msk [vmem:[%s3 + $0x34] sm:$0xf] %vm328, %v309
  %343 = vst.msk [vmem:[%s3 + $0x38] sm:$0xf] %vm328, %v310
  %344 = vst.msk [vmem:[%s3 + $0x3c] sm:$0xf] %vm328, %v311
  // Predicated region
  $region14: #{conv3_forward.6} parent=0 // pred_check
    _
  $region15: #{conv3_forward.6} parent=0 // pred_check_branch
    %346 = sbr.rel (0) target = $region17
  $region16: #{conv3_forward.6} parent=0 // pred_region
    _
  $region17: #{conv3_forward.6} parent=0 // pred_fallthru
    _
  // Predicated region
  $region18: #{conv3_forward.6} parent=0 // pred_check
    _
  $region19: #{conv3_forward.6} parent=0 // pred_check_branch
    %348 = sbr.rel (0) target = $region21
  $region20: #{conv3_forward.6} parent=0 // pred_region
    _
  $region21: #{conv3_forward.6} parent=0 // pred_fallthru
    _

// kernel: conv3_forward.9
$region0: #{conv3_forward.9}
  #allocation0 [shape = 'u32[]', space=smem, size = 0x4, offset = 0x4, fixed_abs, tag = 'smem constant byte address 0x4 - core index']
  #allocation1 [shape = 'u32[144,128]{1,0:T(1,128)}', space=vmem, size = 0x12000, scoped, tag = 'internal scratch']
  %s0 = inlined_call_operand.vmem [shape: bf16[128,64], index: 0, kind: input, shape index: {}]
  %s1 = inlined_call_operand.vmem [shape: bf16[64,64], index: 1, kind: input, shape index: {}]
  %s2 = inlined_call_operand.vmem [shape: f32[1,64], index: 2, kind: input, shape index: {}]
  %s3 = inlined_call_operand.vmem [shape: bf16[128,64], index: 3, kind: output, shape index: {}]
  %s4 = sld [smem:[#allocation0]]
  $region22: #{conv3_forward.9} parent=0
    _
  %s6 = ssub.s32 1, %s4
  %s7 = scalar_select 0, %s6, %s4
  // Predicated region
  $region2: #{conv3_forward.9} parent=0 // pred_check
    _
  $region3: #{conv3_forward.9} parent=0 // pred_check_branch
    %9 = sbr.rel (0) target = $region5
  $region4: #{conv3_forward.9} parent=0 // pred_region
    _
  $region5: #{conv3_forward.9} parent=0 // pred_fallthru
    _
  // Predicated region
  $region6: #{conv3_forward.9} parent=0 // pred_check
    _
  $region7: #{conv3_forward.9} parent=0 // pred_check_branch
    %11 = sbr.rel (0) target = $region9
  $region8: #{conv3_forward.9} parent=0 // pred_region
    _
  $region9: #{conv3_forward.9} parent=0 // pred_fallthru
    _
  // Predicated region
  $region10: #{conv3_forward.9} parent=0 // pred_check
    _
  $region11: #{conv3_forward.9} parent=0 // pred_check_branch
    %13 = sbr.rel (0) target = $region13
  $region12: #{conv3_forward.9} parent=0 // pred_region
    _
  $region13: #{conv3_forward.9} parent=0 // pred_fallthru
    _
  %v15 = vld [vmem:[%s0] sm:$0xf]
  %v16 = vld [vmem:[%s0 + $0x4] sm:$0xf]
  %v17 = vld [vmem:[%s0 + $0x8] sm:$0xf]
  %v18 = vld [vmem:[%s0 + $0xc] sm:$0xf]
  %v19 = vld [vmem:[%s0 + $0x10] sm:$0xf]
  %v20 = vld [vmem:[%s0 + $0x14] sm:$0xf]
  %v21 = vld [vmem:[%s0 + $0x18] sm:$0xf]
  %v22 = vld [vmem:[%s0 + $0x1c] sm:$0xf]
  %v23 = vld [vmem:[%s0 + $0x20] sm:$0xf]
  %v24 = vld [vmem:[%s0 + $0x24] sm:$0xf]
  %v25 = vld [vmem:[%s0 + $0x28] sm:$0xf]
  %v26 = vld [vmem:[%s0 + $0x2c] sm:$0xf]
  %v27 = vld [vmem:[%s0 + $0x30] sm:$0xf]
  %v28 = vld [vmem:[%s0 + $0x34] sm:$0xf]
  %v29 = vld [vmem:[%s0 + $0x38] sm:$0xf]
  %v30 = vld [vmem:[%s0 + $0x3c] sm:$0xf]
  %v31 = vld [vmem:[%s1] sm:$0xf]
  %v32 = vld [vmem:[%s1 + $0x4] sm:$0xf]
  %v33 = vld [vmem:[%s1 + $0x8] sm:$0xf]
  %v34 = vld [vmem:[%s1 + $0xc] sm:$0xf]
  %v35 = vld [vmem:[%s1 + $0x10] sm:$0xf]
  %v36 = vld [vmem:[%s1 + $0x14] sm:$0xf]
  %v37 = vld [vmem:[%s1 + $0x18] sm:$0xf]
  %v38 = vld [vmem:[%s1 + $0x1c] sm:$0xf]
  %v39 = vld [vmem:[%s2] sm:$0x1]
  %v41 = vlaneseq
  %v42 = vshrl.u32 %v41, 7
  %v43 = vsub.s32 0, %v42
  %v44 = vrot.slane %v39, %v43
  %v62 = vunpack.c.l.b16 %v15
  %v63 = vunpack.c.l.b16 %v16
  %v64 = vunpack.c.l.b16 %v17
  %v65 = vunpack.c.l.b16 %v18
  %v66 = vunpack.c.l.b16 %v19
  %v67 = vunpack.c.l.b16 %v20
  %v68 = vunpack.c.l.b16 %v21
  %v69 = vunpack.c.l.b16 %v22
  %v70 = vunpack.c.l.b16 %v23
  %v71 = vunpack.c.l.b16 %v24
  %v72 = vunpack.c.l.b16 %v25
  %v73 = vunpack.c.l.b16 %v26
  %v74 = vunpack.c.l.b16 %v27
  %v75 = vunpack.c.l.b16 %v28
  %v76 = vunpack.c.l.b16 %v29
  %v77 = vunpack.c.l.b16 %v30
  %v78 = vpack.c.b16 %v63, %v62
  %v79 = vpack.c.b16 %v65, %v64
  %v80 = vpack.c.b16 %v67, %v66
  %v81 = vpack.c.b16 %v69, %v68
  %v82 = vpack.c.b16 %v71, %v70
  %v83 = vpack.c.b16 %v73, %v72
  %v84 = vpack.c.b16 %v75, %v74
  %v85 = vpack.c.b16 %v77, %v76
  %v94 = vunpack.c.l.b16 %v31
  %v95 = vunpack.c.l.b16 %v32
  %v96 = vunpack.c.l.b16 %v33
  %v97 = vunpack.c.l.b16 %v34
  %v98 = vunpack.c.l.b16 %v35
  %v99 = vunpack.c.l.b16 %v36
  %v100 = vunpack.c.l.b16 %v37
  %v101 = vunpack.c.l.b16 %v38
  %v102 = vpack.c.b16 %v95, %v94
  %v103 = vpack.c.b16 %v97, %v96
  %v104 = vpack.c.b16 %v99, %v98
  %v105 = vpack.c.b16 %v101, %v100
  %vm110 = vcmask 523264
  %v112 = vsel %vm110, %v78, 0
  %v115 = vsel %vm110, %v79, 0
  %v118 = vsel %vm110, %v80, 0
  %v121 = vsel %vm110, %v81, 0
  %v124 = vsel %vm110, %v82, 0
  %v127 = vsel %vm110, %v83, 0
  %v130 = vsel %vm110, %v84, 0
  %v133 = vsel %vm110, %v85, 0
  %135 = vmatprep.subr.bf16.mxu0 0
  %136 = vmatpush1.bf16.msra.mxu0 %v102
  %137 = vmatprep.subr.bf16.mxu0 0
  %138 = vmatpush1.bf16.msra.mxu0 %v103
  %139 = vmatprep.subr.bf16.mxu0 0
  %140 = vmatpush1.bf16.msra.mxu0 %v104
  %141 = vmatprep.subr.bf16.mxu0 0
  %142 = vmatpush1.bf16.msra.mxu0 %v105
  %143 = vmatprep.subr.bf16.mxu0 0
  %144 = vmatpush1.bf16.msra.mxu0 0
  %145 = vmatprep.subr.bf16.mxu0 0
  %146 = vmatpush1.bf16.msra.mxu0 0
  %147 = vmatprep.subr.bf16.mxu0 0
  %148 = vmatpush1.bf16.msra.mxu0 0
  %149 = vmatprep.subr.bf16.mxu0 0
  %150 = vmatpush1.bf16.msra.mxu0 0
  %151 = vmatprep.subr.bf16.mxu0 0
  %152 = vmatpush1.bf16.msra.mxu0 0
  %153 = vmatprep.subr.bf16.mxu0 0
  %154 = vmatpush1.bf16.msra.mxu0 0
  %155 = vmatprep.subr.bf16.mxu0 0
  %156 = vmatpush1.bf16.msra.mxu0 0
  %157 = vmatprep.subr.bf16.mxu0 0
  %158 = vmatpush1.bf16.msra.mxu0 0
  %159 = vmatprep.subr.bf16.mxu0 0
  %160 = vmatpush1.bf16.msra.mxu0 0
  %161 = vmatprep.subr.bf16.mxu0 0
  %162 = vmatpush1.bf16.msra.mxu0 0
  %163 = vmatprep.subr.bf16.mxu0 0
  %164 = vmatpush1.bf16.msra.mxu0 0
  %165 = vmatprep.subr.bf16.mxu0 0
  %166 = vmatpush1.bf16.msra.mxu0 0
  %167 = vmatprep.mubr.bf16.mxu0 0
  %168 = vmatmul.mubr.bf16.gmra.mrb[0].mxu0 %v112
  %v169 = vpop.f32.mrb[0].mxu0
  %v170 = vadd.f32 %v44, %v169
  %v171 = vpop.f32.mrb[0].mxu0
  %v172 = vpop.f32.mrb[0].mxu0
  %v173 = vadd.f32 %v44, %v172
  %v174 = vpop.f32.mrb[0].mxu0
  %175 = vmatprep.mubr.bf16.mxu0 0
  %176 = vmatmul.mubr.bf16.gmra.mrb[0].mxu0 %v115
  %v177 = vpop.f32.mrb[0].mxu0
  %v178 = vadd.f32 %v44, %v177
  %v179 = vpop.f32.mrb[0].mxu0
  %v180 = vpop.f32.mrb[0].mxu0
  %v181 = vadd.f32 %v44, %v180
  %v182 = vpop.f32.mrb[0].mxu0
  %183 = vmatprep.mubr.bf16.mxu0 0
  %184 = vmatmul.mubr.bf16.gmra.mrb[0].mxu0 %v118
  %v185 = vpop.f32.mrb[0].mxu0
  %v186 = vadd.f32 %v44, %v185
  %v187 = vpop.f32.mrb[0].mxu0
  %v188 = vpop.f32.mrb[0].mxu0
  %v189 = vadd.f32 %v44, %v188
  %v190 = vpop.f32.mrb[0].mxu0
  %191 = vmatprep.mubr.bf16.mxu0 0
  %192 = vmatmul.mubr.bf16.gmra.mrb[0].mxu0 %v121
  %v193 = vpop.f32.mrb[0].mxu0
  %v194 = vadd.f32 %v44, %v193
  %v195 = vpop.f32.mrb[0].mxu0
  %v196 = vpop.f32.mrb[0].mxu0
  %v197 = vadd.f32 %v44, %v196
  %v198 = vpop.f32.mrb[0].mxu0
  %199 = vmatprep.mubr.bf16.mxu0 0
  %200 = vmatmul.mubr.bf16.gmra.mrb[0].mxu0 %v124
  %v201 = vpop.f32.mrb[0].mxu0
  %v202 = vadd.f32 %v44, %v201
  %v203 = vpop.f32.mrb[0].mxu0
  %v204 = vpop.f32.mrb[0].mxu0
  %v205 = vadd.f32 %v44, %v204
  %v206 = vpop.f32.mrb[0].mxu0
  %207 = vmatprep.mubr.bf16.mxu0 0
  %208 = vmatmul.mubr.bf16.gmra.mrb[0].mxu0 %v127
  %v209 = vpop.f32.mrb[0].mxu0
  %v210 = vadd.f32 %v44, %v209
  %v211 = vpop.f32.mrb[0].mxu0
  %v212 = vpop.f32.mrb[0].mxu0
  %v213 = vadd.f32 %v44, %v212
  %v214 = vpop.f32.mrb[0].mxu0
  %215 = vmatprep.mubr.bf16.mxu0 0
  %216 = vmatmul.mubr.bf16.gmra.mrb[0].mxu0 %v130
  %v217 = vpop.f32.mrb[0].mxu0
  %v218 = vadd.f32 %v44, %v217
  %v219 = vpop.f32.mrb[0].mxu0
  %v220 = vpop.f32.mrb[0].mxu0
  %v221 = vadd.f32 %v44, %v220
  %v222 = vpop.f32.mrb[0].mxu0
  %223 = vmatprep.mubr.bf16.mxu0 0
  %224 = vmatmul.mubr.bf16.gmra.mrb[0].mxu0 %v133
  %v225 = vpop.f32.mrb[0].mxu0
  %v226 = vadd.f32 %v44, %v225
  %v227 = vpop.f32.mrb[0].mxu0
  %v228 = vpop.f32.mrb[0].mxu0
  %v229 = vadd.f32 %v44, %v228
  %v230 = vpop.f32.mrb[0].mxu0
  %231 = vdwg.mxu0
  %vm232 = vcmp.ge.f32.partialorder %v170, 0.0
  %vm233 = vcmp.ge.f32.partialorder %v173, 0.0
  %vm234 = vcmp.ge.f32.partialorder %v178, 0.0
  %vm235 = vcmp.ge.f32.partialorder %v181, 0.0
  %vm236 = vcmp.ge.f32.partialorder %v186, 0.0
  %vm237 = vcmp.ge.f32.partialorder %v189, 0.0
  %vm238 = vcmp.ge.f32.partialorder %v194, 0.0
  %vm239 = vcmp.ge.f32.partialorder %v197, 0.0
  %vm240 = vcmp.ge.f32.partialorder %v202, 0.0
  %vm241 = vcmp.ge.f32.partialorder %v205, 0.0
  %vm242 = vcmp.ge.f32.partialorder %v210, 0.0
  %vm243 = vcmp.ge.f32.partialorder %v213, 0.0
  %vm244 = vcmp.ge.f32.partialorder %v218, 0.0
  %vm245 = vcmp.ge.f32.partialorder %v221, 0.0
  %vm246 = vcmp.ge.f32.partialorder %v226, 0.0
  %vm247 = vcmp.ge.f32.partialorder %v229, 0.0
  %v248 = vmul.f32 %v170, 0.2
  %v249 = vmul.f32 %v173, 0.2
  %v250 = vmul.f32 %v178, 0.2
  %v251 = vmul.f32 %v181, 0.2
  %v252 = vmul.f32 %v186, 0.2
  %v253 = vmul.f32 %v189, 0.2
  %v254 = vmul.f32 %v194, 0.2
  %v255 = vmul.f32 %v197, 0.2
  %v256 = vmul.f32 %v202, 0.2
  %v257 = vmul.f32 %v205, 0.2
  %v258 = vmul.f32 %v210, 0.2
  %v259 = vmul.f32 %v213, 0.2
  %v260 = vmul.f32 %v218, 0.2
  %v261 = vmul.f32 %v221, 0.2
  %v262 = vmul.f32 %v226, 0.2
  %v263 = vmul.f32 %v229, 0.2
  %v264 = vsel %vm232, %v170, %v248
  %v265 = vsel %vm233, %v173, %v249
  %v266 = vsel %vm234, %v178, %v250
  %v267 = vsel %vm235, %v181, %v251
  %v268 = vsel %vm236, %v186, %v252
  %v269 = vsel %vm237, %v189, %v253
  %v270 = vsel %vm238, %v194, %v254
  %v271 = vsel %vm239, %v197, %v255
  %v272 = vsel %vm240, %v202, %v256
  %v273 = vsel %vm241, %v205, %v257
  %v274 = vsel %vm242, %v210, %v258
  %v275 = vsel %vm243, %v213, %v259
  %v276 = vsel %vm244, %v218, %v260
  %v277 = vsel %vm245, %v221, %v261
  %v278 = vsel %vm246, %v226, %v262
  %v279 = vsel %vm247, %v229, %v263
  %v280 = vpack.c.bf16 %v265, %v264
  %v281 = vpack.c.bf16 %v267, %v266
  %v282 = vpack.c.bf16 %v269, %v268
  %v283 = vpack.c.bf16 %v271, %v270
  %v284 = vpack.c.bf16 %v273, %v272
  %v285 = vpack.c.bf16 %v275, %v274
  %v286 = vpack.c.bf16 %v277, %v276
  %v287 = vpack.c.bf16 %v279, %v278
  %v296 = vunpack.c.l.b16 %v280
  %v297 = vunpack.c.h.b16 %v280
  %v298 = vunpack.c.l.b16 %v281
  %v299 = vunpack.c.h.b16 %v281
  %v300 = vunpack.c.l.b16 %v282
  %v301 = vunpack.c.h.b16 %v282
  %v302 = vunpack.c.l.b16 %v283
  %v303 = vunpack.c.h.b16 %v283
  %v304 = vunpack.c.l.b16 %v284
  %v305 = vunpack.c.h.b16 %v284
  %v306 = vunpack.c.l.b16 %v285
  %v307 = vunpack.c.h.b16 %v285
  %v308 = vunpack.c.l.b16 %v286
  %v309 = vunpack.c.h.b16 %v286
  %v310 = vunpack.c.l.b16 %v287
  %v311 = vunpack.c.h.b16 %v287
  %v312 = vpack.c.b16 %v296, %v296
  %v313 = vpack.c.b16 %v297, %v297
  %v314 = vpack.c.b16 %v298, %v298
  %v315 = vpack.c.b16 %v299, %v299
  %v316 = vpack.c.b16 %v300, %v300
  %v317 = vpack.c.b16 %v301, %v301
  %v318 = vpack.c.b16 %v302, %v302
  %v319 = vpack.c.b16 %v303, %v303
  %v320 = vpack.c.b16 %v304, %v304
  %v321 = vpack.c.b16 %v305, %v305
  %v322 = vpack.c.b16 %v306, %v306
  %v323 = vpack.c.b16 %v307, %v307
  %v324 = vpack.c.b16 %v308, %v308
  %v325 = vpack.c.b16 %v309, %v309
  %v326 = vpack.c.b16 %v310, %v310
  %v327 = vpack.c.b16 %v311, %v311
  %vm344 = vcmask 519168
  %345 = vst.msk [vmem:[%s3] sm:$0xf] %vm344, %v312
  %346 = vst.msk [vmem:[%s3 + $0x4] sm:$0xf] %vm344, %v313
  %347 = vst.msk [vmem:[%s3 + $0x8] sm:$0xf] %vm344, %v314
  %348 = vst.msk [vmem:[%s3 + $0xc] sm:$0xf] %vm344, %v315
  %349 = vst.msk [vmem:[%s3 + $0x10] sm:$0xf] %vm344, %v316
  %350 = vst.msk [vmem:[%s3 + $0x14] sm:$0xf] %vm344, %v317
  %351 = vst.msk [vmem:[%s3 + $0x18] sm:$0xf] %vm344, %v318
  %352 = vst.msk [vmem:[%s3 + $0x1c] sm:$0xf] %vm344, %v319
  %353 = vst.msk [vmem:[%s3 + $0x20] sm:$0xf] %vm344, %v320
  %354 = vst.msk [vmem:[%s3 + $0x24] sm:$0xf] %vm344, %v321
  %355 = vst.msk [vmem:[%s3 + $0x28] sm:$0xf] %vm344, %v322
  %356 = vst.msk [vmem:[%s3 + $0x2c] sm:$0xf] %vm344, %v323
  %357 = vst.msk [vmem:[%s3 + $0x30] sm:$0xf] %vm344, %v324
  %358 = vst.msk [vmem:[%s3 + $0x34] sm:$0xf] %vm344, %v325
  %359 = vst.msk [vmem:[%s3 + $0x38] sm:$0xf] %vm344, %v326
  %360 = vst.msk [vmem:[%s3 + $0x3c] sm:$0xf] %vm344, %v327
  // Predicated region
  $region14: #{conv3_forward.9} parent=0 // pred_check
    _
  $region15: #{conv3_forward.9} parent=0 // pred_check_branch
    %362 = sbr.rel (0) target = $region17
  $region16: #{conv3_forward.9} parent=0 // pred_region
    _
  $region17: #{conv3_forward.9} parent=0 // pred_fallthru
    _
  // Predicated region
  $region18: #{conv3_forward.9} parent=0 // pred_check
    _
  $region19: #{conv3_forward.9} parent=0 // pred_check_branch
    %364 = sbr.rel (0) target = $region21
  $region20: #{conv3_forward.9} parent=0 // pred_region
    _
  $region21: #{conv3_forward.9} parent=0 // pred_fallthru
    _

// kernel: conv3_forward.8
$region0: #{conv3_forward.8}
  #allocation0 [shape = 'u32[]', space=smem, size = 0x4, offset = 0x4, fixed_abs, tag = 'smem constant byte address 0x4 - core index']
  #allocation1 [shape = 'u32[144,128]{1,0:T(1,128)}', space=vmem, size = 0x12000, scoped, tag = 'internal scratch']
  %s0 = inlined_call_operand.vmem [shape: bf16[128,16], index: 0, kind: input, shape index: {}]
  %s1 = inlined_call_operand.vmem [shape: bf16[16,64], index: 1, kind: input, shape index: {}]
  %s2 = inlined_call_operand.vmem [shape: bf16[128,32], index: 2, kind: input, shape index: {}]
  %s3 = inlined_call_operand.vmem [shape: bf16[32,64], index: 3, kind: input, shape index: {}]
  %s4 = inlined_call_operand.vmem [shape: f32[1,64], index: 4, kind: input, shape index: {}]
  %s5 = inlined_call_operand.vmem [shape: bf16[128,64], index: 5, kind: output, shape index: {}]
  %s6 = sld [smem:[#allocation0]]
  $region30: #{conv3_forward.8} parent=0
    _
  %s8 = ssub.s32 1, %s6
  %s9 = scalar_select 0, %s8, %s6
  // Predicated region
  $region2: #{conv3_forward.8} parent=0 // pred_check
    _
  $region3: #{conv3_forward.8} parent=0 // pred_check_branch
    %11 = sbr.rel (0) target = $region5
  $region4: #{conv3_forward.8} parent=0 // pred_region
    _
  $region5: #{conv3_forward.8} parent=0 // pred_fallthru
    _
  // Predicated region
  $region6: #{conv3_forward.8} parent=0 // pred_check
    _
  $region7: #{conv3_forward.8} parent=0 // pred_check_branch
    %13 = sbr.rel (0) target = $region9
  $region8: #{conv3_forward.8} parent=0 // pred_region
    _
  $region9: #{conv3_forward.8} parent=0 // pred_fallthru
    _
  // Predicated region
  $region10: #{conv3_forward.8} parent=0 // pred_check
    _
  $region11: #{conv3_forward.8} parent=0 // pred_check_branch
    %15 = sbr.rel (0) target = $region13
  $region12: #{conv3_forward.8} parent=0 // pred_region
    _
  $region13: #{conv3_forward.8} parent=0 // pred_fallthru
    _
  // Predicated region
  $region14: #{conv3_forward.8} parent=0 // pred_check
    _
  $region15: #{conv3_forward.8} parent=0 // pred_check_branch
    %17 = sbr.rel (0) target = $region17
  $region16: #{conv3_forward.8} parent=0 // pred_region
    _
  $region17: #{conv3_forward.8} parent=0 // pred_fallthru
    _
  // Predicated region
  $region18: #{conv3_forward.8} parent=0 // pred_check
    _
  $region19: #{conv3_forward.8} parent=0 // pred_check_branch
    %19 = sbr.rel (0) target = $region21
  $region20: #{conv3_forward.8} parent=0 // pred_region
    _
  $region21: #{conv3_forward.8} parent=0 // pred_fallthru
    _
  %v21 = vld [vmem:[%s0] sm:$0xf]
  %v22 = vld [vmem:[%s0 + $0x4] sm:$0xf]
  %v23 = vld [vmem:[%s0 + $0x8] sm:$0xf]
  %v24 = vld [vmem:[%s0 + $0xc] sm:$0xf]
  %v25 = vld [vmem:[%s0 + $0x10] sm:$0xf]
  %v26 = vld [vmem:[%s0 + $0x14] sm:$0xf]
  %v27 = vld [vmem:[%s0 + $0x18] sm:$0xf]
  %v28 = vld [vmem:[%s0 + $0x1c] sm:$0xf]
  %v29 = vld [vmem:[%s0 + $0x20] sm:$0xf]
  %v30 = vld [vmem:[%s0 + $0x24] sm:$0xf]
  %v31 = vld [vmem:[%s0 + $0x28] sm:$0xf]
  %v32 = vld [vmem:[%s0 + $0x2c] sm:$0xf]
  %v33 = vld [vmem:[%s0 + $0x30] sm:$0xf]
  %v34 = vld [vmem:[%s0 + $0x34] sm:$0xf]
  %v35 = vld [vmem:[%s0 + $0x38] sm:$0xf]
  %v36 = vld [vmem:[%s0 + $0x3c] sm:$0xf]
  %v37 = vld [vmem:[%s1] sm:$0xf]
  %v38 = vld [vmem:[%s1 + $0x4] sm:$0xf]
  %v39 = vld [vmem:[%s2] sm:$0xf]
  %v40 = vld [vmem:[%s2 + $0x4] sm:$0xf]
  %v41 = vld [vmem:[%s2 + $0x8] sm:$0xf]
  %v42 = vld [vmem:[%s2 + $0xc] sm:$0xf]
  %v43 = vld [vmem:[%s2 + $0x10] sm:$0xf]
  %v44 = vld [vmem:[%s2 + $0x14] sm:$0xf]
  %v45 = vld [vmem:[%s2 + $0x18] sm:$0xf]
  %v46 = vld [vmem:[%s2 + $0x1c] sm:$0xf]
  %v47 = vld [vmem:[%s2 + $0x20] sm:$0xf]
  %v48 = vld [vmem:[%s2 + $0x24] sm:$0xf]
  %v49 = vld [vmem:[%s2 + $0x28] sm:$0xf]
  %v50 = vld [vmem:[%s2 + $0x2c] sm:$0xf]
  %v51 = vld [vmem:[%s2 + $0x30] sm:$0xf]
  %v52 = vld [vmem:[%s2 + $0x34] sm:$0xf]
  %v53 = vld [vmem:[%s2 + $0x38] sm:$0xf]
  %v54 = vld [vmem:[%s2 + $0x3c] sm:$0xf]
  %v55 = vld [vmem:[%s3] sm:$0xf]
  %v56 = vld [vmem:[%s3 + $0x4] sm:$0xf]
  %v57 = vld [vmem:[%s3 + $0x8] sm:$0xf]
  %v58 = vld [vmem:[%s3 + $0xc] sm:$0xf]
  %v75 = vunpack.c.l.b16 %v39
  %v76 = vunpack.c.l.b16 %v40
  %v77 = vunpack.c.l.b16 %v41
  %v78 = vunpack.c.l.b16 %v42
  %v79 = vunpack.c.l.b16 %v43
  %v80 = vunpack.c.l.b16 %v44
  %v81 = vunpack.c.l.b16 %v45
  %v82 = vunpack.c.l.b16 %v46
  %v83 = vunpack.c.l.b16 %v47
  %v84 = vunpack.c.l.b16 %v48
  %v85 = vunpack.c.l.b16 %v49
  %v86 = vunpack.c.l.b16 %v50
  %v87 = vunpack.c.l.b16 %v51
  %v88 = vunpack.c.l.b16 %v52
  %v89 = vunpack.c.l.b16 %v53
  %v90 = vunpack.c.l.b16 %v54
  %v91 = vpack.c.b16 %v76, %v75
  %v92 = vpack.c.b16 %v78, %v77
  %v93 = vpack.c.b16 %v80, %v79
  %v94 = vpack.c.b16 %v82, %v81
  %v95 = vpack.c.b16 %v84, %v83
  %v96 = vpack.c.b16 %v86, %v85
  %v97 = vpack.c.b16 %v88, %v87
  %v98 = vpack.c.b16 %v90, %v89
  %v103 = vunpack.c.l.b16 %v55
  %v104 = vunpack.c.l.b16 %v56
  %v105 = vunpack.c.l.b16 %v57
  %v106 = vunpack.c.l.b16 %v58
  %v107 = vpack.c.b16 %v104, %v103
  %v108 = vpack.c.b16 %v106, %v105
  %vm111 = vcmask 261120
  %v113 = vsel %vm111, %v91, 0
  %v116 = vsel %vm111, %v92, 0
  %v119 = vsel %vm111, %v93, 0
  %v122 = vsel %vm111, %v94, 0
  %v125 = vsel %vm111, %v95, 0
  %v128 = vsel %vm111, %v96, 0
  %v131 = vsel %vm111, %v97, 0
  %v134 = vsel %vm111, %v98, 0
  %136 = vmatprep.subr.bf16.mxu0 0
  %137 = vmatpush1.bf16.msra.mxu0 %v107
  %138 = vmatprep.subr.bf16.mxu0 0
  %139 = vmatpush1.bf16.msra.mxu0 %v108
  %140 = vmatprep.subr.bf16.mxu0 0
  %141 = vmatpush1.bf16.msra.mxu0 0
  %142 = vmatprep.subr.bf16.mxu0 0
  %143 = vmatpush1.bf16.msra.mxu0 0
  %144 = vmatprep.subr.bf16.mxu0 0
  %145 = vmatpush1.bf16.msra.mxu0 0
  %146 = vmatprep.subr.bf16.mxu0 0
  %147 = vmatpush1.bf16.msra.mxu0 0
  %148 = vmatprep.subr.bf16.mxu0 0
  %149 = vmatpush1.bf16.msra.mxu0 0
  %150 = vmatprep.subr.bf16.mxu0 0
  %151 = vmatpush1.bf16.msra.mxu0 0
  %152 = vmatprep.subr.bf16.mxu0 0
  %153 = vmatpush1.bf16.msra.mxu0 0
  %154 = vmatprep.subr.bf16.mxu0 0
  %155 = vmatpush1.bf16.msra.mxu0 0
  %156 = vmatprep.subr.bf16.mxu0 0
  %157 = vmatpush1.bf16.msra.mxu0 0
  %158 = vmatprep.subr.bf16.mxu0 0
  %159 = vmatpush1.bf16.msra.mxu0 0
  %160 = vmatprep.subr.bf16.mxu0 0
  %161 = vmatpush1.bf16.msra.mxu0 0
  %162 = vmatprep.subr.bf16.mxu0 0
  %163 = vmatpush1.bf16.msra.mxu0 0
  %164 = vmatprep.subr.bf16.mxu0 0
  %165 = vmatpush1.bf16.msra.mxu0 0
  %166 = vmatprep.subr.bf16.mxu0 0
  %167 = vmatpush1.bf16.msra.mxu0 0
  %168 = vmatprep.mubr.bf16.mxu0 0
  %169 = vmatmul.mubr.bf16.gmra.mrb[0].mxu0 %v113
  %v170 = vpop.f32.mrb[0].mxu0
  %v171 = vadd.f32 0.0, %v170
  %v172 = vpop.f32.mrb[0].mxu0
  %v173 = vpop.f32.mrb[0].mxu0
  %v174 = vadd.f32 0.0, %v173
  %v175 = vpop.f32.mrb[0].mxu0
  %176 = vmatprep.mubr.bf16.mxu0 0
  %177 = vmatmul.mubr.bf16.gmra.mrb[0].mxu0 %v116
  %v178 = vpop.f32.mrb[0].mxu0
  %v179 = vadd.f32 0.0, %v178
  %v180 = vpop.f32.mrb[0].mxu0
  %v181 = vpop.f32.mrb[0].mxu0
  %v182 = vadd.f32 0.0, %v181
  %v183 = vpop.f32.mrb[0].mxu0
  %184 = vmatprep.mubr.bf16.mxu0 0
  %185 = vmatmul.mubr.bf16.gmra.mrb[0].mxu0 %v119
  %v186 = vpop.f32.mrb[0].mxu0
  %v187 = vadd.f32 0.0, %v186
  %v188 = vpop.f32.mrb[0].mxu0
  %v189 = vpop.f32.mrb[0].mxu0
  %v190 = vadd.f32 0.0, %v189
  %v191 = vpop.f32.mrb[0].mxu0
  %192 = vmatprep.mubr.bf16.mxu0 0
  %193 = vmatmul.mubr.bf16.gmra.mrb[0].mxu0 %v122
  %v194 = vpop.f32.mrb[0].mxu0
  %v195 = vadd.f32 0.0, %v194
  %v196 = vpop.f32.mrb[0].mxu0
  %v197 = vpop.f32.mrb[0].mxu0
  %v198 = vadd.f32 0.0, %v197
  %v199 = vpop.f32.mrb[0].mxu0
  %200 = vmatprep.mubr.bf16.mxu0 0
  %201 = vmatmul.mubr.bf16.gmra.mrb[0].mxu0 %v125
  %v202 = vpop.f32.mrb[0].mxu0
  %v203 = vadd.f32 0.0, %v202
  %v204 = vpop.f32.mrb[0].mxu0
  %v205 = vpop.f32.mrb[0].mxu0
  %v206 = vadd.f32 0.0, %v205
  %v207 = vpop.f32.mrb[0].mxu0
  %208 = vmatprep.mubr.bf16.mxu0 0
  %209 = vmatmul.mubr.bf16.gmra.mrb[0].mxu0 %v128
  %v210 = vpop.f32.mrb[0].mxu0
  %v211 = vadd.f32 0.0, %v210
  %v212 = vpop.f32.mrb[0].mxu0
  %v213 = vpop.f32.mrb[0].mxu0
  %v214 = vadd.f32 0.0, %v213
  %v215 = vpop.f32.mrb[0].mxu0
  %216 = vmatprep.mubr.bf16.mxu0 0
  %217 = vmatmul.mubr.bf16.gmra.mrb[0].mxu0 %v131
  %v218 = vpop.f32.mrb[0].mxu0
  %v219 = vadd.f32 0.0, %v218
  %v220 = vpop.f32.mrb[0].mxu0
  %v221 = vpop.f32.mrb[0].mxu0
  %v222 = vadd.f32 0.0, %v221
  %v223 = vpop.f32.mrb[0].mxu0
  %224 = vmatprep.mubr.bf16.mxu0 0
  %225 = vmatmul.mubr.bf16.gmra.mrb[0].mxu0 %v134
  %v226 = vpop.f32.mrb[0].mxu0
  %v227 = vadd.f32 0.0, %v226
  %v228 = vpop.f32.mrb[0].mxu0
  %v229 = vpop.f32.mrb[0].mxu0
  %v230 = vadd.f32 0.0, %v229
  %v231 = vpop.f32.mrb[0].mxu0
  %232 = vdwg.mxu0
  %v249 = vunpack.c.l.b16 %v21
  %v250 = vunpack.c.l.b16 %v22
  %v251 = vunpack.c.l.b16 %v23
  %v252 = vunpack.c.l.b16 %v24
  %v253 = vunpack.c.l.b16 %v25
  %v254 = vunpack.c.l.b16 %v26
  %v255 = vunpack.c.l.b16 %v27
  %v256 = vunpack.c.l.b16 %v28
  %v257 = vunpack.c.l.b16 %v29
  %v258 = vunpack.c.l.b16 %v30
  %v259 = vunpack.c.l.b16 %v31
  %v260 = vunpack.c.l.b16 %v32
  %v261 = vunpack.c.l.b16 %v33
  %v262 = vunpack.c.l.b16 %v34
  %v263 = vunpack.c.l.b16 %v35
  %v264 = vunpack.c.l.b16 %v36
  %v265 = vpack.c.b16 %v250, %v249
  %v266 = vpack.c.b16 %v252, %v251
  %v267 = vpack.c.b16 %v254, %v253
  %v268 = vpack.c.b16 %v256, %v255
  %v269 = vpack.c.b16 %v258, %v257
  %v270 = vpack.c.b16 %v260, %v259
  %v271 = vpack.c.b16 %v262, %v261
  %v272 = vpack.c.b16 %v264, %v263
  %v275 = vunpack.c.l.b16 %v37
  %v276 = vunpack.c.l.b16 %v38
  %v277 = vpack.c.b16 %v276, %v275
  %vm279 = vcmask 130048
  %v281 = vsel %vm279, %v265, 0
  %v284 = vsel %vm279, %v266, 0
  %v287 = vsel %vm279, %v267, 0
  %v290 = vsel %vm279, %v268, 0
  %v293 = vsel %vm279, %v269, 0
  %v296 = vsel %vm279, %v270, 0
  %v299 = vsel %vm279, %v271, 0
  %v302 = vsel %vm279, %v272, 0
  %304 = vmatprep.subr.bf16.mxu0 0
  %305 = vmatpush1.bf16.msra.mxu0 %v277
  %306 = vmatprep.subr.bf16.mxu0 0
  %307 = vmatpush1.bf16.msra.mxu0 0
  %308 = vmatprep.subr.bf16.mxu0 0
  %309 = vmatpush1.bf16.msra.mxu0 0
  %310 = vmatprep.subr.bf16.mxu0 0
  %311 = vmatpush1.bf16.msra.mxu0 0
  %312 = vmatprep.subr.bf16.mxu0 0
  %313 = vmatpush1.bf16.msra.mxu0 0
  %314 = vmatprep.subr.bf16.mxu0 0
  %315 = vmatpush1.bf16.msra.mxu0 0
  %316 = vmatprep.subr.bf16.mxu0 0
  %317 = vmatpush1.bf16.msra.mxu0 0
  %318 = vmatprep.subr.bf16.mxu0 0
  %319 = vmatpush1.bf16.msra.mxu0 0
  %320 = vmatprep.subr.bf16.mxu0 0
  %321 = vmatpush1.bf16.msra.mxu0 0
  %322 = vmatprep.subr.bf16.mxu0 0
  %323 = vmatpush1.bf16.msra.mxu0 0
  %324 = vmatprep.subr.bf16.mxu0 0
  %325 = vmatpush1.bf16.msra.mxu0 0
  %326 = vmatprep.subr.bf16.mxu0 0
  %327 = vmatpush1.bf16.msra.mxu0 0
  %328 = vmatprep.subr.bf16.mxu0 0
  %329 = vmatpush1.bf16.msra.mxu0 0
  %330 = vmatprep.subr.bf16.mxu0 0
  %331 = vmatpush1.bf16.msra.mxu0 0
  %332 = vmatprep.subr.bf16.mxu0 0
  %333 = vmatpush1.bf16.msra.mxu0 0
  %334 = vmatprep.subr.bf16.mxu0 0
  %335 = vmatpush1.bf16.msra.mxu0 0
  %336 = vmatprep.mubr.bf16.mxu0 0
  %337 = vmatmul.mubr.bf16.gmra.mrb[0].mxu0 %v281
  %v338 = vpop.f32.mrb[0].mxu0
  %v339 = vadd.f32 %v171, %v338
  %v340 = vpop.f32.mrb[0].mxu0
  %v341 = vpop.f32.mrb[0].mxu0
  %v342 = vadd.f32 %v174, %v341
  %v343 = vpop.f32.mrb[0].mxu0
  %344 = vmatprep.mubr.bf16.mxu0 0
  %345 = vmatmul.mubr.bf16.gmra.mrb[0].mxu0 %v284
  %v346 = vpop.f32.mrb[0].mxu0
  %v347 = vadd.f32 %v179, %v346
  %v348 = vpop.f32.mrb[0].mxu0
  %v349 = vpop.f32.mrb[0].mxu0
  %v350 = vadd.f32 %v182, %v349
  %v351 = vpop.f32.mrb[0].mxu0
  %352 = vmatprep.mubr.bf16.mxu0 0
  %353 = vmatmul.mubr.bf16.gmra.mrb[0].mxu0 %v287
  %v354 = vpop.f32.mrb[0].mxu0
  %v355 = vadd.f32 %v187, %v354
  %v356 = vpop.f32.mrb[0].mxu0
  %v357 = vpop.f32.mrb[0].mxu0
  %v358 = vadd.f32 %v190, %v357
  %v359 = vpop.f32.mrb[0].mxu0
  %360 = vmatprep.mubr.bf16.mxu0 0
  %361 = vmatmul.mubr.bf16.gmra.mrb[0].mxu0 %v290
  %v362 = vpop.f32.mrb[0].mxu0
  %v363 = vadd.f32 %v195, %v362
  %v364 = vpop.f32.mrb[0].mxu0
  %v365 = vpop.f32.mrb[0].mxu0
  %v366 = vadd.f32 %v198, %v365
  %v367 = vpop.f32.mrb[0].mxu0
  %368 = vmatprep.mubr.bf16.mxu0 0
  %369 = vmatmul.mubr.bf16.gmra.mrb[0].mxu0 %v293
  %v370 = vpop.f32.mrb[0].mxu0
  %v371 = vadd.f32 %v203, %v370
  %v372 = vpop.f32.mrb[0].mxu0
  %v373 = vpop.f32.mrb[0].mxu0
  %v374 = vadd.f32 %v206, %v373
  %v375 = vpop.f32.mrb[0].mxu0
  %376 = vmatprep.mubr.bf16.mxu0 0
  %377 = vmatmul.mubr.bf16.gmra.mrb[0].mxu0 %v296
  %v378 = vpop.f32.mrb[0].mxu0
  %v379 = vadd.f32 %v211, %v378
  %v380 = vpop.f32.mrb[0].mxu0
  %v381 = vpop.f32.mrb[0].mxu0
  %v382 = vadd.f32 %v214, %v381
  %v383 = vpop.f32.mrb[0].mxu0
  %384 = vmatprep.mubr.bf16.mxu0 0
  %385 = vmatmul.mubr.bf16.gmra.mrb[0].mxu0 %v299
  %v386 = vpop.f32.mrb[0].mxu0
  %v387 = vadd.f32 %v219, %v386
  %v388 = vpop.f32.mrb[0].mxu0
  %v389 = vpop.f32.mrb[0].mxu0
  %v390 = vadd.f32 %v222, %v389
  %v391 = vpop.f32.mrb[0].mxu0
  %392 = vmatprep.mubr.bf16.mxu0 0
  %393 = vmatmul.mubr.bf16.gmra.mrb[0].mxu0 %v302
  %v394 = vpop.f32.mrb[0].mxu0
  %v395 = vadd.f32 %v227, %v394
  %v396 = vpop.f32.mrb[0].mxu0
  %v397 = vpop.f32.mrb[0].mxu0
  %v398 = vadd.f32 %v230, %v397
  %v399 = vpop.f32.mrb[0].mxu0
  %400 = vdwg.mxu0
  %v401 = vld [vmem:[%s4] sm:$0x1]
  %v403 = vlaneseq
  %v404 = vshrl.u32 %v403, 7
  %v405 = vsub.s32 0, %v404
  %v406 = vrot.slane %v401, %v405
  %v408 = vadd.f32 %v339, %v406
  %v409 = vadd.f32 %v342, %v406
  %v410 = vadd.f32 %v347, %v406
  %v411 = vadd.f32 %v350, %v406
  %v412 = vadd.f32 %v355, %v406
  %v413 = vadd.f32 %v358, %v406
  %v414 = vadd.f32 %v363, %v406
  %v415 = vadd.f32 %v366, %v406
  %v416 = vadd.f32 %v371, %v406
  %v417 = vadd.f32 %v374, %v406
  %v418 = vadd.f32 %v379, %v406
  %v419 = vadd.f32 %v382, %v406
  %v420 = vadd.f32 %v387, %v406
  %v421 = vadd.f32 %v390, %v406
  %v422 = vadd.f32 %v395, %v406
  %v423 = vadd.f32 %v398, %v406
  %vm424 = vcmp.ge.f32.partialorder %v408, 0.0
  %vm425 = vcmp.ge.f32.partialorder %v409, 0.0
  %vm426 = vcmp.ge.f32.partialorder %v410, 0.0
  %vm427 = vcmp.ge.f32.partialorder %v411, 0.0
  %vm428 = vcmp.ge.f32.partialorder %v412, 0.0
  %vm429 = vcmp.ge.f32.partialorder %v413, 0.0
  %vm430 = vcmp.ge.f32.partialorder %v414, 0.0
  %vm431 = vcmp.ge.f32.partialorder %v415, 0.0
  %vm432 = vcmp.ge.f32.partialorder %v416, 0.0
  %vm433 = vcmp.ge.f32.partialorder %v417, 0.0
  %vm434 = vcmp.ge.f32.partialorder %v418, 0.0
  %vm435 = vcmp.ge.f32.partialorder %v419, 0.0
  %vm436 = vcmp.ge.f32.partialorder %v420, 0.0
  %vm437 = vcmp.ge.f32.partialorder %v421, 0.0
  %vm438 = vcmp.ge.f32.partialorder %v422, 0.0
  %vm439 = vcmp.ge.f32.partialorder %v423, 0.0
  %v440 = vmul.f32 %v408, 0.2
  %v441 = vmul.f32 %v409, 0.2
  %v442 = vmul.f32 %v410, 0.2
  %v443 = vmul.f32 %v411, 0.2
  %v444 = vmul.f32 %v412, 0.2
  %v445 = vmul.f32 %v413, 0.2
  %v446 = vmul.f32 %v414, 0.2
  %v447 = vmul.f32 %v415, 0.2
  %v448 = vmul.f32 %v416, 0.2
  %v449 = vmul.f32 %v417, 0.2
  %v450 = vmul.f32 %v418, 0.2
  %v451 = vmul.f32 %v419, 0.2
  %v452 = vmul.f32 %v420, 0.2
  %v453 = vmul.f32 %v421, 0.2
  %v454 = vmul.f32 %v422, 0.2
  %v455 = vmul.f32 %v423, 0.2
  %v456 = vsel %vm424, %v408, %v440
  %v457 = vsel %vm425, %v409, %v441
  %v458 = vsel %vm426, %v410, %v442
  %v459 = vsel %vm427, %v411, %v443
  %v460 = vsel %vm428, %v412, %v444
  %v461 = vsel %vm429, %v413, %v445
  %v462 = vsel %vm430, %v414, %v446
  %v463 = vsel %vm431, %v415, %v447
  %v464 = vsel %vm432, %v416, %v448
  %v465 = vsel %vm433, %v417, %v449
  %v466 = vsel %vm434, %v418, %v450
  %v467 = vsel %vm435, %v419, %v451
  %v468 = vsel %vm436, %v420, %v452
  %v469 = vsel %vm437, %v421, %v453
  %v470 = vsel %vm438, %v422, %v454
  %v471 = vsel %vm439, %v423, %v455
  %v472 = vpack.c.bf16 %v457, %v456
  %v473 = vpack.c.bf16 %v459, %v458
  %v474 = vpack.c.bf16 %v461, %v460
  %v475 = vpack.c.bf16 %v463, %v462
  %v476 = vpack.c.bf16 %v465, %v464
  %v477 = vpack.c.bf16 %v467, %v466
  %v478 = vpack.c.bf16 %v469, %v468
  %v479 = vpack.c.bf16 %v471, %v470
  %v488 = vunpack.c.l.b16 %v472
  %v489 = vunpack.c.h.b16 %v472
  %v490 = vunpack.c.l.b16 %v473
  %v491 = vunpack.c.h.b16 %v473
  %v492 = vunpack.c.l.b16 %v474
  %v493 = vunpack.c.h.b16 %v474
  %v494 = vunpack.c.l.b16 %v475
  %v495 = vunpack.c.h.b16 %v475
  %v496 = vunpack.c.l.b16 %v476
  %v497 = vunpack.c.h.b16 %v476
  %v498 = vunpack.c.l.b16 %v477
  %v499 = vunpack.c.h.b16 %v477
  %v500 = vunpack.c.l.b16 %v478
  %v501 = vunpack.c.h.b16 %v478
  %v502 = vunpack.c.l.b16 %v479
  %v503 = vunpack.c.h.b16 %v479
  %v504 = vpack.c.b16 %v488, %v488
  %v505 = vpack.c.b16 %v489, %v489
  %v506 = vpack.c.b16 %v490, %v490
  %v507 = vpack.c.b16 %v491, %v491
  %v508 = vpack.c.b16 %v492, %v492
  %v509 = vpack.c.b16 %v493, %v493
  %v510 = vpack.c.b16 %v494, %v494
  %v511 = vpack.c.b16 %v495, %v495
  %v512 = vpack.c.b16 %v496, %v496
  %v513 = vpack.c.b16 %v497, %v497
  %v514 = vpack.c.b16 %v498, %v498
  %v515 = vpack.c.b16 %v499, %v499
  %v516 = vpack.c.b16 %v500, %v500
  %v517 = vpack.c.b16 %v501, %v501
  %v518 = vpack.c.b16 %v502, %v502
  %v519 = vpack.c.b16 %v503, %v503
  %vm536 = vcmask 519168
  %537 = vst.msk [vmem:[%s5] sm:$0xf] %vm536, %v504
  %538 = vst.msk [vmem:[%s5 + $0x4] sm:$0xf] %vm536, %v505
  %539 = vst.msk [vmem:[%s5 + $0x8] sm:$0xf] %vm536, %v506
  %540 = vst.msk [vmem:[%s5 + $0xc] sm:$0xf] %vm536, %v507
  %541 = vst.msk [vmem:[%s5 + $0x10] sm:$0xf] %vm536, %v508
  %542 = vst.msk [vmem:[%s5 + $0x14] sm:$0xf] %vm536, %v509
  %543 = vst.msk [vmem:[%s5 + $0x18] sm:$0xf] %vm536, %v510
  %544 = vst.msk [vmem:[%s5 + $0x1c] sm:$0xf] %vm536, %v511
  %545 = vst.msk [vmem:[%s5 + $0x20] sm:$0xf] %vm536, %v512
  %546 = vst.msk [vmem:[%s5 + $0x24] sm:$0xf] %vm536, %v513
  %547 = vst.msk [vmem:[%s5 + $0x28] sm:$0xf] %vm536, %v514
  %548 = vst.msk [vmem:[%s5 + $0x2c] sm:$0xf] %vm536, %v515
  %549 = vst.msk [vmem:[%s5 + $0x30] sm:$0xf] %vm536, %v516
  %550 = vst.msk [vmem:[%s5 + $0x34] sm:$0xf] %vm536, %v517
  %551 = vst.msk [vmem:[%s5 + $0x38] sm:$0xf] %vm536, %v518
  %552 = vst.msk [vmem:[%s5 + $0x3c] sm:$0xf] %vm536, %v519
  // Predicated region
  $region22: #{conv3_forward.8} parent=0 // pred_check
    _
  $region23: #{conv3_forward.8} parent=0 // pred_check_branch
    %554 = sbr.rel (0) target = $region25
  $region24: #{conv3_forward.8} parent=0 // pred_region
    _
  $region25: #{conv3_forward.8} parent=0 // pred_fallthru
    _
  // Predicated region
  $region26: #{conv3_forward.8} parent=0 // pred_check
    _
  $region27: #{conv3_forward.8} parent=0 // pred_check_branch
    %556 = sbr.rel (0) target = $region29
  $region28: #{conv3_forward.8} parent=0 // pred_region
    _
  $region29: #{conv3_forward.8} parent=0 // pred_fallthru
    _

// kernel: conv3_forward.7
$region0: #{conv3_forward.7}
  #allocation0 [shape = 'u32[]', space=smem, size = 0x4, offset = 0x4, fixed_abs, tag = 'smem constant byte address 0x4 - core index']
  #allocation1 [shape = 'u32[144,128]{1,0:T(1,128)}', space=vmem, size = 0x12000, scoped, tag = 'internal scratch']
  %s0 = inlined_call_operand.vmem [shape: bf16[2,10,10,16], index: 0, kind: input, shape index: {}]
  %s1 = inlined_call_operand.vmem [shape: bf16[144,16], index: 1, kind: input, shape index: {}]
  %s2 = inlined_call_operand.vmem [shape: f32[1,16], index: 2, kind: input, shape index: {}]
  %s3 = inlined_call_operand.vmem [shape: bf16[128,16], index: 3, kind: output, shape index: {}]
  %s4 = sld [smem:[#allocation0]]
  $region45: #{conv3_forward.7} parent=0
    _
  %s6 = ssub.s32 1, %s4
  %s7 = scalar_select 0, %s6, %s4
  loop: start=0, step=1, limit=4
  $region2: #{conv3_forward.7} parent=0 // loop_pre_header
    _
  $region3: #{conv3_forward.7} parent=0 // loop_header
    %s9 = sphi 0, %s13
    %p10 = scmp.ge.s32.totalorder %s9, 4
    %s16 = sphi 0, %s28
    %s17 = sphi 0, %s24
    %s18 = sphi 0, %s16
    %s19 = sphi 0, %s17
    %s20 = sphi 0, %s18
    %s21 = sphi 0, %s19
    %s31 = sphi 0, %s33
    %s34 = sphi 0, %s31
    %s35 = sphi 0, %s34
    %s51 = sphi 0, %s35
    %s55 = sphi 0, %s55
    %s57 = sphi 0, %s55
    %s58 = sphi 0, %s57
    %s72 = sphi 0, %s58
    %s76 = sphi 0, %s76
    %s78 = sphi 0, %s76
    %s79 = sphi 0, %s78
    %s93 = sphi 0, %s79
    %s101 = sphi 0, %s103
    %s104 = sphi 0, %s101
    %s105 = sphi 0, %s104
    %s121 = sphi 0, %s105
  $region4: #{conv3_forward.7} parent=0 // loop_header_branch
    %12 = sbr.rel (%p10) target = $region8
  $region5: #{conv3_forward.7} parent=0 // loop_body
    %s14 = ssub.s32 %s9, 1
    %s15 = ssub.s32 %s9, 2
    %s22 = sadd.s32 1, %s17
    %p23 = scmp.ge.s32.totalorder %s22, 1
    %s24 = scalar_select %p23, 0, %s22
    %s25 = sadd.s32 1, %s16
    %s26 = scalar_select %p23, %s25, %s16
    %p27 = scmp.ge.s32.totalorder %s26, 2
    %s28 = scalar_select %p27, 0, %s26
    %s29 = ssub.s32 %s16, %s28
    %p30 = scmp.eq.s32.totalorder %s29, 0
    %s32 = sadd.s32 %s31, 1
    %s33 = scalar_select %p30, %s31, %s32
    %p36 = pneg %p30
    %p37 = scmp.eq.s32.totalorder %s9, 1
    %p38 = por %p36, %p37
    %p39 = scmp.ne.s32.totalorder %s31, %s34
    %p40 = scmp.eq.s32.totalorder %s9, 0
    %p41 = por %p39, %p40
    %p42 = scmp.ne.s32.totalorder %s31, %s34
    %p43 = scmp.eq.s32.totalorder %s14, 1
    %p44 = por %p42, %p43
    %p45 = scmp.ne.s32.totalorder %s34, %s35
    %p46 = scmp.eq.s32.totalorder %s14, 0
    %p47 = por %p45, %p46
    %p48 = scmp.ne.s32.totalorder %s34, %s35
    %p49 = scmp.eq.s32.totalorder %s15, 1
    %p50 = por %p48, %p49
    %p52 = scmp.ne.s32.totalorder %s35, %s51
    %p53 = scmp.eq.s32.totalorder %s15, 0
    %p54 = por %p52, %p53
    %s56 = sadd.s32 %s55, 1
    %p59 = scmp.eq.s32.totalorder %s9, 1
    %p60 = scmp.ne.s32.totalorder %s55, %s57
    %p61 = scmp.eq.s32.totalorder %s9, 0
    %p62 = por %p60, %p61
    %p63 = scmp.ne.s32.totalorder %s55, %s57
    %p64 = scmp.eq.s32.totalorder %s14, 1
    %p65 = por %p63, %p64
    %p66 = scmp.ne.s32.totalorder %s57, %s58
    %p67 = scmp.eq.s32.totalorder %s14, 0
    %p68 = por %p66, %p67
    %p69 = scmp.ne.s32.totalorder %s57, %s58
    %p70 = scmp.eq.s32.totalorder %s15, 1
    %p71 = por %p69, %p70
    %p73 = scmp.ne.s32.totalorder %s58, %s72
    %p74 = scmp.eq.s32.totalorder %s15, 0
    %p75 = por %p73, %p74
    %s77 = sadd.s32 %s76, 1
    %p80 = scmp.eq.s32.totalorder %s9, 1
    %p81 = scmp.ne.s32.totalorder %s76, %s78
    %p82 = scmp.eq.s32.totalorder %s9, 0
    %p83 = por %p81, %p82
    %p84 = scmp.ne.s32.totalorder %s76, %s78
    %p85 = scmp.eq.s32.totalorder %s14, 1
    %p86 = por %p84, %p85
    %p87 = scmp.ne.s32.totalorder %s78, %s79
    %p88 = scmp.eq.s32.totalorder %s14, 0
    %p89 = por %p87, %p88
    %p90 = scmp.ne.s32.totalorder %s78, %s79
    %p91 = scmp.eq.s32.totalorder %s15, 1
    %p92 = por %p90, %p91
    %p94 = scmp.ne.s32.totalorder %s79, %s93
    %p95 = scmp.eq.s32.totalorder %s15, 0
    %p96 = por %p94, %p95
    %s97 = sadd.s32 %s16, %s17
    %s98 = sadd.s32 %s28, %s24
    %s99 = ssub.s32 %s97, %s98
    %p100 = scmp.eq.s32.totalorder %s99, 0
    %s102 = sadd.s32 %s101, 1
    %s103 = scalar_select %p100, %s101, %s102
    %p106 = pneg %p100
    %p107 = scmp.eq.s32.totalorder %s9, 1
    %p108 = por %p106, %p107
    %p109 = scmp.ne.s32.totalorder %s101, %s104
    %p110 = scmp.eq.s32.totalorder %s9, 0
    %p111 = por %p109, %p110
    %p112 = scmp.ne.s32.totalorder %s101, %s104
    %p113 = scmp.eq.s32.totalorder %s14, 1
    %p114 = por %p112, %p113
    %p115 = scmp.ne.s32.totalorder %s104, %s105
    %p116 = scmp.eq.s32.totalorder %s14, 0
    %p117 = por %p115, %p116
    %p118 = scmp.ne.s32.totalorder %s104, %s105
    %p119 = scmp.eq.s32.totalorder %s15, 1
    %p120 = por %p118, %p119
    %p122 = scmp.ne.s32.totalorder %s105, %s121
    %p123 = scmp.eq.s32.totalorder %s15, 0
    %p124 = por %p122, %p123
    %p125 = scmp.le.s32.totalorder 1, %s9
    %p126 = scmp.lt.s32.totalorder %s9, 3
    %p127 = pnand %p125, %p126
    %p128 = pneg %p127
    // Predicated region
    $region9: #{conv3_forward.7} parent=5 // pred_check
      _
    $region10: #{conv3_forward.7} parent=5 // pred_check_branch
      %130 = sbr.rel (%p127) target = $region12
    $region11: #{conv3_forward.7} parent=5 // pred_region
      %s131 = ssub.s32 %s9, 1
      // Predicated region
      $region13: #{conv3_forward.7} parent=11 // pred_check
        %p132 = pneg %p68
      $region14: #{conv3_forward.7} parent=11 // pred_check_branch
        %134 = sbr.rel (%p132) target = $region16
      $region15: #{conv3_forward.7} parent=11 // pred_region
        _
      $region16: #{conv3_forward.7} parent=11 // pred_fallthru
        _
      // Predicated region
      $region17: #{conv3_forward.7} parent=11 // pred_check
        %p135 = pneg %p89
      $region18: #{conv3_forward.7} parent=11 // pred_check_branch
        %137 = sbr.rel (%p135) target = $region20
      $region19: #{conv3_forward.7} parent=11 // pred_region
        _
      $region20: #{conv3_forward.7} parent=11 // pred_fallthru
        _
    $region12: #{conv3_forward.7} parent=5 // pred_fallthru
      _
    %p138 = scmp.lt.s32.totalorder %s9, 2
    // Predicated region
    $region21: #{conv3_forward.7} parent=5 // pred_check
      %p139 = pneg %p138
    $region22: #{conv3_forward.7} parent=5 // pred_check_branch
      %141 = sbr.rel (%p139) target = $region24
    $region23: #{conv3_forward.7} parent=5 // pred_region
      // Predicated region
      $region25: #{conv3_forward.7} parent=23 // pred_check
        %p142 = pneg %p41
      $region26: #{conv3_forward.7} parent=23 // pred_check_branch
        %144 = sbr.rel (%p142) target = $region28
      $region27: #{conv3_forward.7} parent=23 // pred_region
        %p145 = scmp.lt.s32.totalorder %s16, 1
        %s146 = scalar_select %p145, %s16, 1
        %s147 = smul.addr %s146, 20
        %s148 = smul.addr %s147, 4
        %s149 = scalar_lea.vmem %s0, %s148
      $region28: #{conv3_forward.7} parent=23 // pred_fallthru
        _
    $region24: #{conv3_forward.7} parent=5 // pred_fallthru
      _
    %p150 = scmp.le.s32.totalorder 1, %s9
    %p151 = scmp.lt.s32.totalorder %s9, 3
    %p152 = pnand %p150, %p151
    %p153 = pneg %p152
    // Predicated region
    $region29: #{conv3_forward.7} parent=5 // pred_check
      _
    $region30: #{conv3_forward.7} parent=5 // pred_check_branch
      %155 = sbr.rel (%p152) target = $region32
    $region31: #{conv3_forward.7} parent=5 // pred_region
      %s156 = ssub.s32 %s9, 1
      %p157 = scmp.lt.s32.totalorder %s18, 1
      %s158 = scalar_select %p157, %s18, 1
      %s159 = smul.addr %s158, 20
      %s160 = smul.addr %s159, 4
      %s161 = scalar_lea.vmem %s0, %s160
      %p162 = pneg %p47
      %p163 = pneg %p44
      %p164 = pneg %p68
      %p165 = pneg %p65
      %p166 = pneg %p89
      %p167 = pneg %p86
      %p168 = pneg %p117
      %p169 = pneg %p114
      %s170 = sadd.s32 %s18, %s19
      %s171 = smul.u32 8, %s170
      %p172 = scmp.lt.s32.totalorder %s171, 15
      %s173 = scalar_select %p172, %s171, 15
      %s174 = smul.addr %s173, 4
      %s175 = scalar_lea.vmem %s3, %s174
      %p176 = scmp.lt.s32.totalorder %s18, 1
      %s177 = scalar_select %p176, %s18, 1
      %s178 = smul.addr %s177, 20
      %s179 = smul.addr %s178, 4
      %s180 = scalar_lea.vmem %s0, %s179
      %s181 = sadd.s32 %s18, %s19
      %s182 = smul.u32 8, %s181
      %p183 = scmp.lt.s32.totalorder %s182, 15
      %s184 = scalar_select %p183, %s182, 15
      %s185 = smul.addr %s184, 4
      %s186 = scalar_lea.vmem %s3, %s185
      %s187 = sadd.s32 %s18, %s19
      %s188 = smul.u32 8, %s187
      %s190 = smul.u32 %s19, 8
      %s191 = smul.u32 %s190, 2
      %s192 = smul.addr %s191, 4
      %s193 = scalar_lea.vmem %s180, %s192
      %v194 = vld [vmem:[%s193] sm:$0xf]
      %v195 = vld [vmem:[%s193 + $0x4] sm:$0x1]
      %v196 = vld [vmem:[%s193 + $0x8] sm:$0xf]
      %v197 = vld [vmem:[%s193 + $0xc] sm:$0x1]
      %v198 = vld [vmem:[%s193 + $0x10] sm:$0xf]
      %v199 = vld [vmem:[%s193 + $0x14] sm:$0x1]
      %v200 = vld [vmem:[%s193 + $0x18] sm:$0xf]
      %v201 = vld [vmem:[%s193 + $0x1c] sm:$0x1]
      %v202 = vld [vmem:[%s193 + $0x20] sm:$0xf]
      %v203 = vld [vmem:[%s193 + $0x24] sm:$0x1]
      %v204 = vld [vmem:[%s193 + $0x28] sm:$0xf]
      %v205 = vld [vmem:[%s193 + $0x2c] sm:$0x1]
      %v206 = vld [vmem:[%s193 + $0x30] sm:$0xf]
      %v207 = vld [vmem:[%s193 + $0x34] sm:$0x1]
      %v208 = vld [vmem:[%s193 + $0x38] sm:$0xf]
      %v209 = vld [vmem:[%s193 + $0x3c] sm:$0x1]
      %v210 = vld [vmem:[%s193 + $0x40] sm:$0xf]
      %v211 = vld [vmem:[%s193 + $0x44] sm:$0x1]
      %v212 = vld [vmem:[%s193 + $0x48] sm:$0xf]
      %v213 = vld [vmem:[%s193 + $0x4c] sm:$0x1]
      %vm214 = vsmask.f32 3328
      %vm215 = vsmask.f32 7440
      %vm216 = vmor %vm214, %vm215
      %v218 = vshrl.u32 %v194, 16
      %v220 = vrot.slane %v218, 4
      %v221 = vshll.u32 %v194, 16
      %v223 = vrot.slane %v221, 5
      %v224 = vor.u32 %v220, %v223
      %v225 = vrot.slane %v224, 4
      %v227 = vshll.u32 %v195, 16
      %v229 = vrot.slane %v227, 5
      %v230 = vsel %vm216, %v225, %v229
      %v232 = vshrl.u32 %v196, 16
      %v234 = vrot.slane %v232, 4
      %v235 = vshll.u32 %v196, 16
      %v237 = vrot.slane %v235, 5
      %v238 = vor.u32 %v234, %v237
      %v239 = vrot.slane %v238, 4
      %v241 = vshll.u32 %v197, 16
      %v243 = vrot.slane %v241, 5
      %v244 = vsel %vm216, %v239, %v243
      %v246 = vshrl.u32 %v198, 16
      %v248 = vrot.slane %v246, 4
      %v249 = vshll.u32 %v198, 16
      %v251 = vrot.slane %v249, 5
      %v252 = vor.u32 %v248, %v251
      %v253 = vrot.slane %v252, 4
      %v255 = vshll.u32 %v199, 16
      %v257 = vrot.slane %v255, 5
      %v258 = vsel %vm216, %v253, %v257
      %v260 = vshrl.u32 %v200, 16
      %v262 = vrot.slane %v260, 4
      %v263 = vshll.u32 %v200, 16
      %v265 = vrot.slane %v263, 5
      %v266 = vor.u32 %v262, %v265
      %v267 = vrot.slane %v266, 4
      %v269 = vshll.u32 %v201, 16
      %v271 = vrot.slane %v269, 5
      %v272 = vsel %vm216, %v267, %v271
      %v274 = vshrl.u32 %v202, 16
      %v276 = vrot.slane %v274, 4
      %v277 = vshll.u32 %v202, 16
      %v279 = vrot.slane %v277, 5
      %v280 = vor.u32 %v276, %v279
      %v281 = vrot.slane %v280, 4
      %v283 = vshll.u32 %v203, 16
      %v285 = vrot.slane %v283, 5
      %v286 = vsel %vm216, %v281, %v285
      %v288 = vshrl.u32 %v204, 16
      %v290 = vrot.slane %v288, 4
      %v291 = vshll.u32 %v204, 16
      %v293 = vrot.slane %v291, 5
      %v294 = vor.u32 %v290, %v293
      %v295 = vrot.slane %v294, 4
      %v297 = vshll.u32 %v205, 16
      %v299 = vrot.slane %v297, 5
      %v300 = vsel %vm216, %v295, %v299
      %v302 = vshrl.u32 %v206, 16
      %v304 = vrot.slane %v302, 4
      %v305 = vshll.u32 %v206, 16
      %v307 = vrot.slane %v305, 5
      %v308 = vor.u32 %v304, %v307
      %v309 = vrot.slane %v308, 4
      %v311 = vshll.u32 %v207, 16
      %v313 = vrot.slane %v311, 5
      %v314 = vsel %vm216, %v309, %v313
      %v316 = vshrl.u32 %v208, 16
      %v318 = vrot.slane %v316, 4
      %v319 = vshll.u32 %v208, 16
      %v321 = vrot.slane %v319, 5
      %v322 = vor.u32 %v318, %v321
      %v323 = vrot.slane %v322, 4
      %v325 = vshll.u32 %v209, 16
      %v327 = vrot.slane %v325, 5
      %v328 = vsel %vm216, %v323, %v327
      %vm345 = vcmask 1042432
      %vm346 = vcmask 1046532
      %vm347 = vmor %vm345, %vm346
      %v348 = vrot.slane %v194, 5
      %v349 = vrot.slane %v348, 4
      %v350 = vrot.slane %v195, 5
      %v351 = vsel %vm347, %v349, %v350
      %v352 = vrot.slane %v196, 5
      %v353 = vrot.slane %v352, 4
      %v354 = vrot.slane %v197, 5
      %v355 = vsel %vm347, %v353, %v354
      %v356 = vrot.slane %v198, 5
      %v357 = vrot.slane %v356, 4
      %v358 = vrot.slane %v199, 5
      %v359 = vsel %vm347, %v357, %v358
      %v360 = vrot.slane %v200, 5
      %v361 = vrot.slane %v360, 4
      %v362 = vrot.slane %v201, 5
      %v363 = vsel %vm347, %v361, %v362
      %v364 = vrot.slane %v202, 5
      %v365 = vrot.slane %v364, 4
      %v366 = vrot.slane %v203, 5
      %v367 = vsel %vm347, %v365, %v366
      %v368 = vrot.slane %v204, 5
      %v369 = vrot.slane %v368, 4
      %v370 = vrot.slane %v205, 5
      %v371 = vsel %vm347, %v369, %v370
      %v372 = vrot.slane %v206, 5
      %v373 = vrot.slane %v372, 4
      %v374 = vrot.slane %v207, 5
      %v375 = vsel %vm347, %v373, %v374
      %v376 = vrot.slane %v208, 5
      %v377 = vrot.slane %v376, 4
      %v378 = vrot.slane %v209, 5
      %v379 = vsel %vm347, %v377, %v378
      %v381 = vshrl.u32 %v210, 16
      %v383 = vrot.slane %v381, 4
      %v384 = vshll.u32 %v210, 16
      %v386 = vrot.slane %v384, 5
      %v387 = vor.u32 %v383, %v386
      %v388 = vrot.slane %v387, 4
      %v390 = vshll.u32 %v211, 16
      %v392 = vrot.slane %v390, 5
      %v393 = vsel %vm216, %v388, %v392
      %v396 = vrot.slane %v210, 5
      %v397 = vrot.slane %v396, 4
      %v398 = vrot.slane %v211, 5
      %v399 = vsel %vm347, %v397, %v398
      %v401 = vshrl.u32 %v212, 16
      %v403 = vrot.slane %v401, 4
      %v404 = vshll.u32 %v212, 16
      %v406 = vrot.slane %v404, 5
      %v407 = vor.u32 %v403, %v406
      %v408 = vrot.slane %v407, 4
      %v410 = vshll.u32 %v213, 16
      %v412 = vrot.slane %v410, 5
      %v413 = vsel %vm216, %v408, %v412
      %v416 = vrot.slane %v212, 5
      %v417 = vrot.slane %v416, 4
      %v418 = vrot.slane %v213, 5
      %v419 = vsel %vm347, %v417, %v418
      %v420 = vunpack.c.l.b16 %v194
      %v421 = vunpack.c.l.b16 %v196
      %v422 = vunpack.c.l.b16 %v198
      %v423 = vunpack.c.l.b16 %v200
      %v424 = vunpack.c.l.b16 %v202
      %v425 = vunpack.c.l.b16 %v204
      %v426 = vunpack.c.l.b16 %v206
      %v427 = vunpack.c.l.b16 %v208
      %v428 = vpack.c.b16 %v421, %v420
      %v429 = vpack.c.b16 %v423, %v422
      %v430 = vpack.c.b16 %v425, %v424
      %v431 = vpack.c.b16 %v427, %v426
      %v432 = vunpack.c.l.b16 %v230
      %v433 = vunpack.c.l.b16 %v244
      %v434 = vunpack.c.l.b16 %v258
      %v435 = vunpack.c.l.b16 %v272
      %v436 = vunpack.c.l.b16 %v286
      %v437 = vunpack.c.l.b16 %v300
      %v438 = vunpack.c.l.b16 %v314
      %v439 = vunpack.c.l.b16 %v328
      %v440 = vpack.c.b16 %v433, %v432
      %v441 = vpack.c.b16 %v435, %v434
      %v442 = vpack.c.b16 %v437, %v436
      %v443 = vpack.c.b16 %v439, %v438
      %444 = vrot.lane.b32.xlu0 %v440, 16
      %v445 = vpop.permute.xlu0 %444
      %446 = vrot.lane.b32.xlu0 %v441, 16
      %v447 = vpop.permute.xlu0 %446
      %448 = vrot.lane.b32.xlu0 %v442, 16
      %v449 = vpop.permute.xlu0 %448
      %450 = vrot.lane.b32.xlu0 %v443, 16
      %v451 = vpop.permute.xlu0 %450
      %v452 = vunpack.c.l.b16 %v351
      %v453 = vunpack.c.l.b16 %v355
      %v454 = vunpack.c.l.b16 %v359
      %v455 = vunpack.c.l.b16 %v363
      %v456 = vunpack.c.l.b16 %v367
      %v457 = vunpack.c.l.b16 %v371
      %v458 = vunpack.c.l.b16 %v375
      %v459 = vunpack.c.l.b16 %v379
      %v460 = vpack.c.b16 %v453, %v452
      %v461 = vpack.c.b16 %v455, %v454
      %v462 = vpack.c.b16 %v457, %v456
      %v463 = vpack.c.b16 %v459, %v458
      %464 = vrot.lane.b32.xlu0 %v460, 32
      %v465 = vpop.permute.xlu0 %464
      %466 = vrot.lane.b32.xlu0 %v461, 32
      %v467 = vpop.permute.xlu0 %466
      %468 = vrot.lane.b32.xlu0 %v462, 32
      %v469 = vpop.permute.xlu0 %468
      %470 = vrot.lane.b32.xlu0 %v463, 32
      %v471 = vpop.permute.xlu0 %470
      %v472 = vunpack.c.l.b16 %v210
      %v473 = vpack.c.b16 %v422, %v421
      %v474 = vpack.c.b16 %v424, %v423
      %v475 = vpack.c.b16 %v426, %v425
      %v476 = vpack.c.b16 %v472, %v427
      %477 = vrot.lane.b32.xlu0 %v473, 48
      %v478 = vpop.permute.xlu0 %477
      %479 = vrot.lane.b32.xlu0 %v474, 48
      %v480 = vpop.permute.xlu0 %479
      %481 = vrot.lane.b32.xlu0 %v475, 48
      %v482 = vpop.permute.xlu0 %481
      %483 = vrot.lane.b32.xlu0 %v476, 48
      %v484 = vpop.permute.xlu0 %483
      %v485 = vunpack.c.l.b16 %v393
      %v486 = vpack.c.b16 %v434, %v433
      %v487 = vpack.c.b16 %v436, %v435
      %v488 = vpack.c.b16 %v438, %v437
      %v489 = vpack.c.b16 %v485, %v439
      %490 = vrot.lane.b32.xlu0 %v486, 64
      %v491 = vpop.permute.xlu0 %490
      %492 = vrot.lane.b32.xlu0 %v487, 64
      %v493 = vpop.permute.xlu0 %492
      %494 = vrot.lane.b32.xlu0 %v488, 64
      %v495 = vpop.permute.xlu0 %494
      %496 = vrot.lane.b32.xlu0 %v489, 64
      %v497 = vpop.permute.xlu0 %496
      %v498 = vunpack.c.l.b16 %v399
      %v499 = vpack.c.b16 %v454, %v453
      %v500 = vpack.c.b16 %v456, %v455
      %v501 = vpack.c.b16 %v458, %v457
      %v502 = vpack.c.b16 %v498, %v459
      %503 = vrot.lane.b32.xlu0 %v499, 80
      %v504 = vpop.permute.xlu0 %503
      %505 = vrot.lane.b32.xlu0 %v500, 80
      %v506 = vpop.permute.xlu0 %505
      %507 = vrot.lane.b32.xlu0 %v501, 80
      %v508 = vpop.permute.xlu0 %507
      %509 = vrot.lane.b32.xlu0 %v502, 80
      %v510 = vpop.permute.xlu0 %509
      %v511 = vunpack.c.l.b16 %v212
      %v512 = vpack.c.b16 %v511, %v472
      %513 = vrot.lane.b32.xlu0 %v429, 96
      %v514 = vpop.permute.xlu0 %513
      %515 = vrot.lane.b32.xlu0 %v430, 96
      %v516 = vpop.permute.xlu0 %515
      %517 = vrot.lane.b32.xlu0 %v431, 96
      %v518 = vpop.permute.xlu0 %517
      %519 = vrot.lane.b32.xlu0 %v512, 96
      %v520 = vpop.permute.xlu0 %519
      %v521 = vunpack.c.l.b16 %v413
      %v522 = vpack.c.b16 %v521, %v485
      %523 = vrot.lane.b32.xlu0 %v441, 112
      %v524 = vpop.permute.xlu0 %523
      %525 = vrot.lane.b32.xlu0 %v442, 112
      %v526 = vpop.permute.xlu0 %525
      %527 = vrot.lane.b32.xlu0 %v443, 112
      %v528 = vpop.permute.xlu0 %527
      %529 = vrot.lane.b32.xlu0 %v522, 112
      %v530 = vpop.permute.xlu0 %529
      %v531 = vunpack.c.l.b16 %v419
      %v532 = vpack.c.b16 %v531, %v498
      %vm533 = vcmask 130048
      %v536 = vsel %vm533, %v428, %v445
      %v539 = vsel %vm533, %v429, %v447
      %v542 = vsel %vm533, %v430, %v449
      %v545 = vsel %vm533, %v431, %v451
      %vm546 = vcmask 261120
      %v548 = vsel %vm546, %v536, %v465
      %v550 = vsel %vm546, %v539, %v467
      %v552 = vsel %vm546, %v542, %v469
      %v554 = vsel %vm546, %v545, %v471
      %vm555 = vcmask 392192
      %v557 = vsel %vm555, %v548, %v478
      %v559 = vsel %vm555, %v550, %v480
      %v561 = vsel %vm555, %v552, %v482
      %v563 = vsel %vm555, %v554, %v484
      %vm564 = vcmask 523264
      %v566 = vsel %vm564, %v557, %v491
      %v568 = vsel %vm564, %v559, %v493
      %v570 = vsel %vm564, %v561, %v495
      %v572 = vsel %vm564, %v563, %v497
      %vm573 = vcmask 654336
      %v575 = vsel %vm573, %v566, %v504
      %v577 = vsel %vm573, %v568, %v506
      %v579 = vsel %vm573, %v570, %v508
      %v581 = vsel %vm573, %v572, %v510
      %vm582 = vcmask 785408
      %v584 = vsel %vm582, %v575, %v514
      %v586 = vsel %vm582, %v577, %v516
      %v588 = vsel %vm582, %v579, %v518
      %v590 = vsel %vm582, %v581, %v520
      %vm591 = vcmask 916480
      %v593 = vsel %vm591, %v584, %v524
      %v596 = vsel %vm591, %v586, %v526
      %v599 = vsel %vm591, %v588, %v528
      %v602 = vsel %vm591, %v590, %v530
      %v604 = vld [vmem:[%s1] sm:$0xf]
      %v605 = vld [vmem:[%s1 + $0x4] sm:$0xf]
      %v606 = vld [vmem:[%s1 + $0x8] sm:$0xf]
      %v607 = vld [vmem:[%s1 + $0xc] sm:$0xf]
      %v608 = vld [vmem:[%s1 + $0x10] sm:$0xf]
      %v609 = vld [vmem:[%s1 + $0x14] sm:$0xf]
      %v610 = vld [vmem:[%s1 + $0x18] sm:$0xf]
      %v611 = vld [vmem:[%s1 + $0x1c] sm:$0xf]
      %v612 = vld [vmem:[%s1 + $0x20] sm:$0xf]
      %v613 = vld [vmem:[%s1 + $0x24] sm:$0xf]
      %v614 = vld [vmem:[%s1 + $0x28] sm:$0xf]
      %v615 = vld [vmem:[%s1 + $0x2c] sm:$0xf]
      %v616 = vld [vmem:[%s1 + $0x30] sm:$0xf]
      %v617 = vld [vmem:[%s1 + $0x34] sm:$0xf]
      %v618 = vld [vmem:[%s1 + $0x38] sm:$0xf]
      %v619 = vld [vmem:[%s1 + $0x3c] sm:$0xf]
      %v620 = vld [vmem:[%s1 + $0x40] sm:$0xf]
      %v621 = vld [vmem:[%s1 + $0x44] sm:$0xf]
      %v622 = vld [vmem:[%s2] sm:$0x1]
      %v624 = vlaneseq
      %v625 = vshrl.u32 %v624, 7
      %v626 = vsub.s32 0, %v625
      %v627 = vrot.slane %v622, %v626
      %v647 = vunpack.c.l.b16 %v604
      %v648 = vunpack.c.l.b16 %v605
      %v649 = vunpack.c.l.b16 %v606
      %v650 = vunpack.c.l.b16 %v607
      %v651 = vunpack.c.l.b16 %v608
      %v652 = vunpack.c.l.b16 %v609
      %v653 = vunpack.c.l.b16 %v610
      %v654 = vunpack.c.l.b16 %v611
      %v655 = vunpack.c.l.b16 %v612
      %v656 = vunpack.c.l.b16 %v613
      %v657 = vunpack.c.l.b16 %v614
      %v658 = vunpack.c.l.b16 %v615
      %v659 = vunpack.c.l.b16 %v616
      %v660 = vunpack.c.l.b16 %v617
      %v661 = vunpack.c.l.b16 %v618
      %v662 = vunpack.c.l.b16 %v619
      %v663 = vunpack.c.l.b16 %v620
      %v664 = vunpack.c.l.b16 %v621
      %v665 = vpack.c.b16 %v648, %v647
      %v666 = vpack.c.b16 %v650, %v649
      %v667 = vpack.c.b16 %v652, %v651
      %v668 = vpack.c.b16 %v654, %v653
      %v669 = vpack.c.b16 %v656, %v655
      %v670 = vpack.c.b16 %v658, %v657
      %v671 = vpack.c.b16 %v660, %v659
      %v672 = vpack.c.b16 %v662, %v661
      %v673 = vpack.c.b16 %v664, %v663
      %v684 = vsel %vm533, %v461, 0
      %v687 = vsel %vm533, %v462, 0
      %v690 = vsel %vm533, %v463, 0
      %v693 = vsel %vm533, %v532, 0
      %695 = vmatprep.subr.bf16.mxu0 0
      %696 = vmatpush1.bf16.msra.mxu0 %v665
      %697 = vmatprep.subr.bf16.mxu0 0
      %698 = vmatpush1.bf16.msra.mxu0 %v666
      %699 = vmatprep.subr.bf16.mxu0 0
      %700 = vmatpush1.bf16.msra.mxu0 %v667
      %701 = vmatprep.subr.bf16.mxu0 0
      %702 = vmatpush1.bf16.msra.mxu0 %v668
      %703 = vmatprep.subr.bf16.mxu0 0
      %704 = vmatpush1.bf16.msra.mxu0 %v669
      %705 = vmatprep.subr.bf16.mxu0 0
      %706 = vmatpush1.bf16.msra.mxu0 %v670
      %707 = vmatprep.subr.bf16.mxu0 0
      %708 = vmatpush1.bf16.msra.mxu0 %v671
      %709 = vmatprep.subr.bf16.mxu0 0
      %710 = vmatpush1.bf16.msra.mxu0 %v672
      %711 = vmatprep.subr.bf16.mxu0 0
      %712 = vmatpush1.bf16.msra.mxu0 %v673
      %713 = vmatprep.subr.bf16.mxu0 0
      %714 = vmatpush1.bf16.msra.mxu0 0
      %715 = vmatprep.subr.bf16.mxu0 0
      %716 = vmatpush1.bf16.msra.mxu0 0
      %717 = vmatprep.subr.bf16.mxu0 0
      %718 = vmatpush1.bf16.msra.mxu0 0
      %719 = vmatprep.subr.bf16.mxu0 0
      %720 = vmatpush1.bf16.msra.mxu0 0
      %721 = vmatprep.subr.bf16.mxu0 0
      %722 = vmatpush1.bf16.msra.mxu0 0
      %723 = vmatprep.subr.bf16.mxu0 0
      %724 = vmatpush1.bf16.msra.mxu0 0
      %725 = vmatprep.subr.bf16.mxu0 0
      %726 = vmatpush1.bf16.msra.mxu0 0
      %727 = vmatprep.mubr.bf16.mxu0 %v684
      %728 = vmatmul.mubr.bf16.gmra.mrb[0].mxu0 %v593
      %v729 = vpop.f32.mrb[0].mxu0
      %v730 = vadd.f32 %v627, %v729
      %v731 = vpop.f32.mrb[0].mxu0
      %v732 = vpop.f32.mrb[0].mxu0
      %v733 = vadd.f32 %v627, %v732
      %v734 = vpop.f32.mrb[0].mxu0
      %735 = vmatprep.mubr.bf16.mxu0 %v687
      %736 = vmatmul.mubr.bf16.gmra.mrb[0].mxu0 %v596
      %v737 = vpop.f32.mrb[0].mxu0
      %v738 = vadd.f32 %v627, %v737
      %v739 = vpop.f32.mrb[0].mxu0
      %v740 = vpop.f32.mrb[0].mxu0
      %v741 = vadd.f32 %v627, %v740
      %v742 = vpop.f32.mrb[0].mxu0
      %743 = vmatprep.mubr.bf16.mxu0 %v690
      %744 = vmatmul.mubr.bf16.gmra.mrb[0].mxu0 %v599
      %v745 = vpop.f32.mrb[0].mxu0
      %v746 = vadd.f32 %v627, %v745
      %v747 = vpop.f32.mrb[0].mxu0
      %v748 = vpop.f32.mrb[0].mxu0
      %v749 = vadd.f32 %v627, %v748
      %v750 = vpop.f32.mrb[0].mxu0
      %751 = vmatprep.mubr.bf16.mxu0 %v693
      %752 = vmatmul.mubr.bf16.gmra.mrb[0].mxu0 %v602
      %v753 = vpop.f32.mrb[0].mxu0
      %v754 = vadd.f32 %v627, %v753
      %v755 = vpop.f32.mrb[0].mxu0
      %v756 = vpop.f32.mrb[0].mxu0
      %v757 = vadd.f32 %v627, %v756
      %v758 = vpop.f32.mrb[0].mxu0
      %759 = vdwg.mxu0
      %vm760 = vcmp.ge.f32.partialorder %v730, 0.0
      %vm761 = vcmp.ge.f32.partialorder %v733, 0.0
      %vm762 = vcmp.ge.f32.partialorder %v738, 0.0
      %vm763 = vcmp.ge.f32.partialorder %v741, 0.0
      %vm764 = vcmp.ge.f32.partialorder %v746, 0.0
      %vm765 = vcmp.ge.f32.partialorder %v749, 0.0
      %vm766 = vcmp.ge.f32.partialorder %v754, 0.0
      %vm767 = vcmp.ge.f32.partialorder %v757, 0.0
      %v768 = vmul.f32 %v730, 0.2
      %v769 = vmul.f32 %v733, 0.2
      %v770 = vmul.f32 %v738, 0.2
      %v771 = vmul.f32 %v741, 0.2
      %v772 = vmul.f32 %v746, 0.2
      %v773 = vmul.f32 %v749, 0.2
      %v774 = vmul.f32 %v754, 0.2
      %v775 = vmul.f32 %v757, 0.2
      %v776 = vsel %vm760, %v730, %v768
      %v777 = vsel %vm761, %v733, %v769
      %v778 = vsel %vm762, %v738, %v770
      %v779 = vsel %vm763, %v741, %v771
      %v780 = vsel %vm764, %v746, %v772
      %v781 = vsel %vm765, %v749, %v773
      %v782 = vsel %vm766, %v754, %v774
      %v783 = vsel %vm767, %v757, %v775
      %v784 = vpack.c.bf16 %v777, %v776
      %v785 = vpack.c.bf16 %v779, %v778
      %v786 = vpack.c.bf16 %v781, %v780
      %v787 = vpack.c.bf16 %v783, %v782
      %v792 = vunpack.c.l.b16 %v784
      %v793 = vunpack.c.h.b16 %v784
      %v794 = vunpack.c.l.b16 %v785
      %v795 = vunpack.c.h.b16 %v785
      %v796 = vunpack.c.l.b16 %v786
      %v797 = vunpack.c.h.b16 %v786
      %v798 = vunpack.c.l.b16 %v787
      %v799 = vunpack.c.h.b16 %v787
      %v800 = vpack.c.b16 %v792, %v792
      %v801 = vpack.c.b16 %v793, %v793
      %v802 = vpack.c.b16 %v794, %v794
      %v803 = vpack.c.b16 %v795, %v795
      %v804 = vpack.c.b16 %v796, %v796
      %v805 = vpack.c.b16 %v797, %v797
      %v806 = vpack.c.b16 %v798, %v798
      %v807 = vpack.c.b16 %v799, %v799
      %vm816 = vcmask 125952
      %817 = vst.msk [vmem:[%s186] sm:$0xf] %vm816, %v800
      %818 = vst.msk [vmem:[%s186 + $0x4] sm:$0xf] %vm816, %v801
      %819 = vst.msk [vmem:[%s186 + $0x8] sm:$0xf] %vm816, %v802
      %820 = vst.msk [vmem:[%s186 + $0xc] sm:$0xf] %vm816, %v803
      %821 = vst.msk [vmem:[%s186 + $0x10] sm:$0xf] %vm816, %v804
      %822 = vst.msk [vmem:[%s186 + $0x14] sm:$0xf] %vm816, %v805
      %823 = vst.msk [vmem:[%s186 + $0x18] sm:$0xf] %vm816, %v806
      %824 = vst.msk [vmem:[%s186 + $0x1c] sm:$0xf] %vm816, %v807
      %s825 = sadd.s32 %s18, %s19
      %s826 = smul.u32 8, %s825
      %p827 = scmp.lt.s32.totalorder %s826, 15
      %s828 = scalar_select %p827, %s826, 15
      %s829 = smul.addr %s828, 4
      %s830 = scalar_lea.vmem %s3, %s829
      // Predicated region
      $region33: #{conv3_forward.7} parent=31 // pred_check
        %p831 = pneg %p114
      $region34: #{conv3_forward.7} parent=31 // pred_check_branch
        %833 = sbr.rel (%p831) target = $region36
      $region35: #{conv3_forward.7} parent=31 // pred_region
        %s834 = sadd.s32 %s18, %s19
        %s835 = smul.u32 8, %s834
      $region36: #{conv3_forward.7} parent=31 // pred_fallthru
        _
    $region32: #{conv3_forward.7} parent=5 // pred_fallthru
      _
    %p836 = scmp.le.s32.totalorder 2, %s9
    // Predicated region
    $region37: #{conv3_forward.7} parent=5 // pred_check
      %p837 = pneg %p836
    $region38: #{conv3_forward.7} parent=5 // pred_check_branch
      %839 = sbr.rel (%p837) target = $region40
    $region39: #{conv3_forward.7} parent=5 // pred_region
      %s840 = ssub.s32 %s9, 2
      // Predicated region
      $region41: #{conv3_forward.7} parent=39 // pred_check
        %p841 = pneg %p120
      $region42: #{conv3_forward.7} parent=39 // pred_check_branch
        %843 = sbr.rel (%p841) target = $region44
      $region43: #{conv3_forward.7} parent=39 // pred_region
        %s844 = sadd.s32 %s20, %s21
        %s845 = smul.u32 8, %s844
        %p846 = scmp.lt.s32.totalorder %s845, 15
        %s847 = scalar_select %p846, %s845, 15
        %s848 = smul.addr %s847, 4
        %s849 = scalar_lea.vmem %s3, %s848
      $region44: #{conv3_forward.7} parent=39 // pred_fallthru
        _
    $region40: #{conv3_forward.7} parent=5 // pred_fallthru
      _
  $region6: #{conv3_forward.7} parent=0 // loop_footer
    %s13 = sadd.s32 1, %s9
  $region7: #{conv3_forward.7} parent=0 // loop_footer_branch
    %8 = sbr.rel target = $region3
  $region8: #{conv3_forward.7} parent=0 // loop_exit
    _

// kernel: conv3_forward.11
$region0: #{conv3_forward.11}
  #allocation0 [shape = 'u32[]', space=smem, size = 0x4, offset = 0x4, fixed_abs, tag = 'smem constant byte address 0x4 - core index']
  #allocation1 [shape = 'u32[144,128]{1,0:T(1,128)}', space=vmem, size = 0x12000, scoped, tag = 'internal scratch']
  %s0 = inlined_call_operand.vmem [shape: bf16[128,64], index: 0, kind: input, shape index: {}]
  %s1 = inlined_call_operand.vmem [shape: bf16[64,64], index: 1, kind: input, shape index: {}]
  %s2 = inlined_call_operand.vmem [shape: f32[1,64], index: 2, kind: input, shape index: {}]
  %s3 = inlined_call_operand.vmem [shape: bf16[128,64], index: 3, kind: input, shape index: {}]
  %s4 = inlined_call_operand.vmem [shape: bf16[128,64], index: 4, kind: output, shape index: {}]
  %s5 = sld [smem:[#allocation0]]
  $region26: #{conv3_forward.11} parent=0
    _
  %s7 = ssub.s32 1, %s5
  %s8 = scalar_select 0, %s7, %s5
  // Predicated region
  $region2: #{conv3_forward.11} parent=0 // pred_check
    _
  $region3: #{conv3_forward.11} parent=0 // pred_check_branch
    %10 = sbr.rel (0) target = $region5
  $region4: #{conv3_forward.11} parent=0 // pred_region
    _
  $region5: #{conv3_forward.11} parent=0 // pred_fallthru
    _
  // Predicated region
  $region6: #{conv3_forward.11} parent=0 // pred_check
    _
  $region7: #{conv3_forward.11} parent=0 // pred_check_branch
    %12 = sbr.rel (0) target = $region9
  $region8: #{conv3_forward.11} parent=0 // pred_region
    _
  $region9: #{conv3_forward.11} parent=0 // pred_fallthru
    _
  // Predicated region
  $region10: #{conv3_forward.11} parent=0 // pred_check
    _
  $region11: #{conv3_forward.11} parent=0 // pred_check_branch
    %14 = sbr.rel (0) target = $region13
  $region12: #{conv3_forward.11} parent=0 // pred_region
    _
  $region13: #{conv3_forward.11} parent=0 // pred_fallthru
    _
  // Predicated region
  $region14: #{conv3_forward.11} parent=0 // pred_check
    _
  $region15: #{conv3_forward.11} parent=0 // pred_check_branch
    %16 = sbr.rel (0) target = $region17
  $region16: #{conv3_forward.11} parent=0 // pred_region
    _
  $region17: #{conv3_forward.11} parent=0 // pred_fallthru
    _
  %v18 = vld [vmem:[%s0] sm:$0xf]
  %v19 = vld [vmem:[%s0 + $0x4] sm:$0xf]
  %v20 = vld [vmem:[%s0 + $0x8] sm:$0xf]
  %v21 = vld [vmem:[%s0 + $0xc] sm:$0xf]
  %v22 = vld [vmem:[%s0 + $0x10] sm:$0xf]
  %v23 = vld [vmem:[%s0 + $0x14] sm:$0xf]
  %v24 = vld [vmem:[%s0 + $0x18] sm:$0xf]
  %v25 = vld [vmem:[%s0 + $0x1c] sm:$0xf]
  %v26 = vld [vmem:[%s0 + $0x20] sm:$0xf]
  %v27 = vld [vmem:[%s0 + $0x24] sm:$0xf]
  %v28 = vld [vmem:[%s0 + $0x28] sm:$0xf]
  %v29 = vld [vmem:[%s0 + $0x2c] sm:$0xf]
  %v30 = vld [vmem:[%s0 + $0x30] sm:$0xf]
  %v31 = vld [vmem:[%s0 + $0x34] sm:$0xf]
  %v32 = vld [vmem:[%s0 + $0x38] sm:$0xf]
  %v33 = vld [vmem:[%s0 + $0x3c] sm:$0xf]
  %v34 = vld [vmem:[%s1] sm:$0xf]
  %v35 = vld [vmem:[%s1 + $0x4] sm:$0xf]
  %v36 = vld [vmem:[%s1 + $0x8] sm:$0xf]
  %v37 = vld [vmem:[%s1 + $0xc] sm:$0xf]
  %v38 = vld [vmem:[%s1 + $0x10] sm:$0xf]
  %v39 = vld [vmem:[%s1 + $0x14] sm:$0xf]
  %v40 = vld [vmem:[%s1 + $0x18] sm:$0xf]
  %v41 = vld [vmem:[%s1 + $0x1c] sm:$0xf]
  %v42 = vld [vmem:[%s2] sm:$0x1]
  %v44 = vlaneseq
  %v45 = vshrl.u32 %v44, 7
  %v46 = vsub.s32 0, %v45
  %v47 = vrot.slane %v42, %v46
  %v65 = vunpack.c.l.b16 %v18
  %v66 = vunpack.c.l.b16 %v19
  %v67 = vunpack.c.l.b16 %v20
  %v68 = vunpack.c.l.b16 %v21
  %v69 = vunpack.c.l.b16 %v22
  %v70 = vunpack.c.l.b16 %v23
  %v71 = vunpack.c.l.b16 %v24
  %v72 = vunpack.c.l.b16 %v25
  %v73 = vunpack.c.l.b16 %v26
  %v74 = vunpack.c.l.b16 %v27
  %v75 = vunpack.c.l.b16 %v28
  %v76 = vunpack.c.l.b16 %v29
  %v77 = vunpack.c.l.b16 %v30
  %v78 = vunpack.c.l.b16 %v31
  %v79 = vunpack.c.l.b16 %v32
  %v80 = vunpack.c.l.b16 %v33
  %v81 = vpack.c.b16 %v66, %v65
  %v82 = vpack.c.b16 %v68, %v67
  %v83 = vpack.c.b16 %v70, %v69
  %v84 = vpack.c.b16 %v72, %v71
  %v85 = vpack.c.b16 %v74, %v73
  %v86 = vpack.c.b16 %v76, %v75
  %v87 = vpack.c.b16 %v78, %v77
  %v88 = vpack.c.b16 %v80, %v79
  %v97 = vunpack.c.l.b16 %v34
  %v98 = vunpack.c.l.b16 %v35
  %v99 = vunpack.c.l.b16 %v36
  %v100 = vunpack.c.l.b16 %v37
  %v101 = vunpack.c.l.b16 %v38
  %v102 = vunpack.c.l.b16 %v39
  %v103 = vunpack.c.l.b16 %v40
  %v104 = vunpack.c.l.b16 %v41
  %v105 = vpack.c.b16 %v98, %v97
  %v106 = vpack.c.b16 %v100, %v99
  %v107 = vpack.c.b16 %v102, %v101
  %v108 = vpack.c.b16 %v104, %v103
  %vm113 = vcmask 523264
  %v115 = vsel %vm113, %v81, 0
  %v118 = vsel %vm113, %v82, 0
  %v121 = vsel %vm113, %v83, 0
  %v124 = vsel %vm113, %v84, 0
  %v127 = vsel %vm113, %v85, 0
  %v130 = vsel %vm113, %v86, 0
  %v133 = vsel %vm113, %v87, 0
  %v136 = vsel %vm113, %v88, 0
  %138 = vmatprep.subr.bf16.mxu0 0
  %139 = vmatpush1.bf16.msra.mxu0 %v105
  %140 = vmatprep.subr.bf16.mxu0 0
  %141 = vmatpush1.bf16.msra.mxu0 %v106
  %142 = vmatprep.subr.bf16.mxu0 0
  %143 = vmatpush1.bf16.msra.mxu0 %v107
  %144 = vmatprep.subr.bf16.mxu0 0
  %145 = vmatpush1.bf16.msra.mxu0 %v108
  %146 = vmatprep.subr.bf16.mxu0 0
  %147 = vmatpush1.bf16.msra.mxu0 0
  %148 = vmatprep.subr.bf16.mxu0 0
  %149 = vmatpush1.bf16.msra.mxu0 0
  %150 = vmatprep.subr.bf16.mxu0 0
  %151 = vmatpush1.bf16.msra.mxu0 0
  %152 = vmatprep.subr.bf16.mxu0 0
  %153 = vmatpush1.bf16.msra.mxu0 0
  %154 = vmatprep.subr.bf16.mxu0 0
  %155 = vmatpush1.bf16.msra.mxu0 0
  %156 = vmatprep.subr.bf16.mxu0 0
  %157 = vmatpush1.bf16.msra.mxu0 0
  %158 = vmatprep.subr.bf16.mxu0 0
  %159 = vmatpush1.bf16.msra.mxu0 0
  %160 = vmatprep.subr.bf16.mxu0 0
  %161 = vmatpush1.bf16.msra.mxu0 0
  %162 = vmatprep.subr.bf16.mxu0 0
  %163 = vmatpush1.bf16.msra.mxu0 0
  %164 = vmatprep.subr.bf16.mxu0 0
  %165 = vmatpush1.bf16.msra.mxu0 0
  %166 = vmatprep.subr.bf16.mxu0 0
  %167 = vmatpush1.bf16.msra.mxu0 0
  %168 = vmatprep.subr.bf16.mxu0 0
  %169 = vmatpush1.bf16.msra.mxu0 0
  %170 = vmatprep.mubr.bf16.mxu0 0
  %171 = vmatmul.mubr.bf16.gmra.mrb[0].mxu0 %v115
  %v172 = vpop.f32.mrb[0].mxu0
  %v173 = vadd.f32 %v47, %v172
  %v174 = vpop.f32.mrb[0].mxu0
  %v175 = vpop.f32.mrb[0].mxu0
  %v176 = vadd.f32 %v47, %v175
  %v177 = vpop.f32.mrb[0].mxu0
  %178 = vmatprep.mubr.bf16.mxu0 0
  %179 = vmatmul.mubr.bf16.gmra.mrb[0].mxu0 %v118
  %v180 = vpop.f32.mrb[0].mxu0
  %v181 = vadd.f32 %v47, %v180
  %v182 = vpop.f32.mrb[0].mxu0
  %v183 = vpop.f32.mrb[0].mxu0
  %v184 = vadd.f32 %v47, %v183
  %v185 = vpop.f32.mrb[0].mxu0
  %186 = vmatprep.mubr.bf16.mxu0 0
  %187 = vmatmul.mubr.bf16.gmra.mrb[0].mxu0 %v121
  %v188 = vpop.f32.mrb[0].mxu0
  %v189 = vadd.f32 %v47, %v188
  %v190 = vpop.f32.mrb[0].mxu0
  %v191 = vpop.f32.mrb[0].mxu0
  %v192 = vadd.f32 %v47, %v191
  %v193 = vpop.f32.mrb[0].mxu0
  %194 = vmatprep.mubr.bf16.mxu0 0
  %195 = vmatmul.mubr.bf16.gmra.mrb[0].mxu0 %v124
  %v196 = vpop.f32.mrb[0].mxu0
  %v197 = vadd.f32 %v47, %v196
  %v198 = vpop.f32.mrb[0].mxu0
  %v199 = vpop.f32.mrb[0].mxu0
  %v200 = vadd.f32 %v47, %v199
  %v201 = vpop.f32.mrb[0].mxu0
  %202 = vmatprep.mubr.bf16.mxu0 0
  %203 = vmatmul.mubr.bf16.gmra.mrb[0].mxu0 %v127
  %v204 = vpop.f32.mrb[0].mxu0
  %v205 = vadd.f32 %v47, %v204
  %v206 = vpop.f32.mrb[0].mxu0
  %v207 = vpop.f32.mrb[0].mxu0
  %v208 = vadd.f32 %v47, %v207
  %v209 = vpop.f32.mrb[0].mxu0
  %210 = vmatprep.mubr.bf16.mxu0 0
  %211 = vmatmul.mubr.bf16.gmra.mrb[0].mxu0 %v130
  %v212 = vpop.f32.mrb[0].mxu0
  %v213 = vadd.f32 %v47, %v212
  %v214 = vpop.f32.mrb[0].mxu0
  %v215 = vpop.f32.mrb[0].mxu0
  %v216 = vadd.f32 %v47, %v215
  %v217 = vpop.f32.mrb[0].mxu0
  %218 = vmatprep.mubr.bf16.mxu0 0
  %219 = vmatmul.mubr.bf16.gmra.mrb[0].mxu0 %v133
  %v220 = vpop.f32.mrb[0].mxu0
  %v221 = vadd.f32 %v47, %v220
  %v222 = vpop.f32.mrb[0].mxu0
  %v223 = vpop.f32.mrb[0].mxu0
  %v224 = vadd.f32 %v47, %v223
  %v225 = vpop.f32.mrb[0].mxu0
  %226 = vmatprep.mubr.bf16.mxu0 0
  %227 = vmatmul.mubr.bf16.gmra.mrb[0].mxu0 %v136
  %v228 = vpop.f32.mrb[0].mxu0
  %v229 = vadd.f32 %v47, %v228
  %v230 = vpop.f32.mrb[0].mxu0
  %v231 = vpop.f32.mrb[0].mxu0
  %v232 = vadd.f32 %v47, %v231
  %v233 = vpop.f32.mrb[0].mxu0
  %234 = vdwg.mxu0
  %v235 = vld [vmem:[%s3] sm:$0xf]
  %v236 = vld [vmem:[%s3 + $0x4] sm:$0xf]
  %v237 = vld [vmem:[%s3 + $0x8] sm:$0xf]
  %v238 = vld [vmem:[%s3 + $0xc] sm:$0xf]
  %v239 = vld [vmem:[%s3 + $0x10] sm:$0xf]
  %v240 = vld [vmem:[%s3 + $0x14] sm:$0xf]
  %v241 = vld [vmem:[%s3 + $0x18] sm:$0xf]
  %v242 = vld [vmem:[%s3 + $0x1c] sm:$0xf]
  %v243 = vld [vmem:[%s3 + $0x20] sm:$0xf]
  %v244 = vld [vmem:[%s3 + $0x24] sm:$0xf]
  %v245 = vld [vmem:[%s3 + $0x28] sm:$0xf]
  %v246 = vld [vmem:[%s3 + $0x2c] sm:$0xf]
  %v247 = vld [vmem:[%s3 + $0x30] sm:$0xf]
  %v248 = vld [vmem:[%s3 + $0x34] sm:$0xf]
  %v249 = vld [vmem:[%s3 + $0x38] sm:$0xf]
  %v250 = vld [vmem:[%s3 + $0x3c] sm:$0xf]
  %v251 = vunpack.c.l.bf16 %v235
  %v252 = vunpack.c.l.bf16 %v236
  %v253 = vunpack.c.l.bf16 %v237
  %v254 = vunpack.c.l.bf16 %v238
  %v255 = vunpack.c.l.bf16 %v239
  %v256 = vunpack.c.l.bf16 %v240
  %v257 = vunpack.c.l.bf16 %v241
  %v258 = vunpack.c.l.bf16 %v242
  %v259 = vunpack.c.l.bf16 %v243
  %v260 = vunpack.c.l.bf16 %v244
  %v261 = vunpack.c.l.bf16 %v245
  %v262 = vunpack.c.l.bf16 %v246
  %v263 = vunpack.c.l.bf16 %v247
  %v264 = vunpack.c.l.bf16 %v248
  %v265 = vunpack.c.l.bf16 %v249
  %v266 = vunpack.c.l.bf16 %v250
  %v267 = vadd.f32 %v173, %v251
  %v268 = vadd.f32 %v176, %v252
  %v269 = vadd.f32 %v181, %v253
  %v270 = vadd.f32 %v184, %v254
  %v271 = vadd.f32 %v189, %v255
  %v272 = vadd.f32 %v192, %v256
  %v273 = vadd.f32 %v197, %v257
  %v274 = vadd.f32 %v200, %v258
  %v275 = vadd.f32 %v205, %v259
  %v276 = vadd.f32 %v208, %v260
  %v277 = vadd.f32 %v213, %v261
  %v278 = vadd.f32 %v216, %v262
  %v279 = vadd.f32 %v221, %v263
  %v280 = vadd.f32 %v224, %v264
  %v281 = vadd.f32 %v229, %v265
  %v282 = vadd.f32 %v232, %v266
  %vm283 = vcmp.ge.f32.partialorder %v267, 0.0
  %vm284 = vcmp.ge.f32.partialorder %v268, 0.0
  %vm285 = vcmp.ge.f32.partialorder %v269, 0.0
  %vm286 = vcmp.ge.f32.partialorder %v270, 0.0
  %vm287 = vcmp.ge.f32.partialorder %v271, 0.0
  %vm288 = vcmp.ge.f32.partialorder %v272, 0.0
  %vm289 = vcmp.ge.f32.partialorder %v273, 0.0
  %vm290 = vcmp.ge.f32.partialorder %v274, 0.0
  %vm291 = vcmp.ge.f32.partialorder %v275, 0.0
  %vm292 = vcmp.ge.f32.partialorder %v276, 0.0
  %vm293 = vcmp.ge.f32.partialorder %v277, 0.0
  %vm294 = vcmp.ge.f32.partialorder %v278, 0.0
  %vm295 = vcmp.ge.f32.partialorder %v279, 0.0
  %vm296 = vcmp.ge.f32.partialorder %v280, 0.0
  %vm297 = vcmp.ge.f32.partialorder %v281, 0.0
  %vm298 = vcmp.ge.f32.partialorder %v282, 0.0
  %v299 = vmul.f32 %v267, 0.2
  %v300 = vmul.f32 %v268, 0.2
  %v301 = vmul.f32 %v269, 0.2
  %v302 = vmul.f32 %v270, 0.2
  %v303 = vmul.f32 %v271, 0.2
  %v304 = vmul.f32 %v272, 0.2
  %v305 = vmul.f32 %v273, 0.2
  %v306 = vmul.f32 %v274, 0.2
  %v307 = vmul.f32 %v275, 0.2
  %v308 = vmul.f32 %v276, 0.2
  %v309 = vmul.f32 %v277, 0.2
  %v310 = vmul.f32 %v278, 0.2
  %v311 = vmul.f32 %v279, 0.2
  %v312 = vmul.f32 %v280, 0.2
  %v313 = vmul.f32 %v281, 0.2
  %v314 = vmul.f32 %v282, 0.2
  %v315 = vsel %vm283, %v267, %v299
  %v316 = vsel %vm284, %v268, %v300
  %v317 = vsel %vm285, %v269, %v301
  %v318 = vsel %vm286, %v270, %v302
  %v319 = vsel %vm287, %v271, %v303
  %v320 = vsel %vm288, %v272, %v304
  %v321 = vsel %vm289, %v273, %v305
  %v322 = vsel %vm290, %v274, %v306
  %v323 = vsel %vm291, %v275, %v307
  %v324 = vsel %vm292, %v276, %v308
  %v325 = vsel %vm293, %v277, %v309
  %v326 = vsel %vm294, %v278, %v310
  %v327 = vsel %vm295, %v279, %v311
  %v328 = vsel %vm296, %v280, %v312
  %v329 = vsel %vm297, %v281, %v313
  %v330 = vsel %vm298, %v282, %v314
  %v331 = vpack.c.bf16 %v316, %v315
  %v332 = vpack.c.bf16 %v318, %v317
  %v333 = vpack.c.bf16 %v320, %v319
  %v334 = vpack.c.bf16 %v322, %v321
  %v335 = vpack.c.bf16 %v324, %v323
  %v336 = vpack.c.bf16 %v326, %v325
  %v337 = vpack.c.bf16 %v328, %v327
  %v338 = vpack.c.bf16 %v330, %v329
  %v347 = vunpack.c.l.b16 %v331
  %v348 = vunpack.c.h.b16 %v331
  %v349 = vunpack.c.l.b16 %v332
  %v350 = vunpack.c.h.b16 %v332
  %v351 = vunpack.c.l.b16 %v333
  %v352 = vunpack.c.h.b16 %v333
  %v353 = vunpack.c.l.b16 %v334
  %v354 = vunpack.c.h.b16 %v334
  %v355 = vunpack.c.l.b16 %v335
  %v356 = vunpack.c.h.b16 %v335
  %v357 = vunpack.c.l.b16 %v336
  %v358 = vunpack.c.h.b16 %v336
  %v359 = vunpack.c.l.b16 %v337
  %v360 = vunpack.c.h.b16 %v337
  %v361 = vunpack.c.l.b16 %v338
  %v362 = vunpack.c.h.b16 %v338
  %v363 = vpack.c.b16 %v347, %v347
  %v364 = vpack.c.b16 %v348, %v348
  %v365 = vpack.c.b16 %v349, %v349
  %v366 = vpack.c.b16 %v350, %v350
  %v367 = vpack.c.b16 %v351, %v351
  %v368 = vpack.c.b16 %v352, %v352
  %v369 = vpack.c.b16 %v353, %v353
  %v370 = vpack.c.b16 %v354, %v354
  %v371 = vpack.c.b16 %v355, %v355
  %v372 = vpack.c.b16 %v356, %v356
  %v373 = vpack.c.b16 %v357, %v357
  %v374 = vpack.c.b16 %v358, %v358
  %v375 = vpack.c.b16 %v359, %v359
  %v376 = vpack.c.b16 %v360, %v360
  %v377 = vpack.c.b16 %v361, %v361
  %v378 = vpack.c.b16 %v362, %v362
  %vm395 = vcmask 519168
  %396 = vst.msk [vmem:[%s4] sm:$0xf] %vm395, %v363
  %397 = vst.msk [vmem:[%s4 + $0x4] sm:$0xf] %vm395, %v364
  %398 = vst.msk [vmem:[%s4 + $0x8] sm:$0xf] %vm395, %v365
  %399 = vst.msk [vmem:[%s4 + $0xc] sm:$0xf] %vm395, %v366
  %400 = vst.msk [vmem:[%s4 + $0x10] sm:$0xf] %vm395, %v367
  %401 = vst.msk [vmem:[%s4 + $0x14] sm:$0xf] %vm395, %v368
  %402 = vst.msk [vmem:[%s4 + $0x18] sm:$0xf] %vm395, %v369
  %403 = vst.msk [vmem:[%s4 + $0x1c] sm:$0xf] %vm395, %v370
  %404 = vst.msk [vmem:[%s4 + $0x20] sm:$0xf] %vm395, %v371
  %405 = vst.msk [vmem:[%s4 + $0x24] sm:$0xf] %vm395, %v372
  %406 = vst.msk [vmem:[%s4 + $0x28] sm:$0xf] %vm395, %v373
  %407 = vst.msk [vmem:[%s4 + $0x2c] sm:$0xf] %vm395, %v374
  %408 = vst.msk [vmem:[%s4 + $0x30] sm:$0xf] %vm395, %v375
  %409 = vst.msk [vmem:[%s4 + $0x34] sm:$0xf] %vm395, %v376
  %410 = vst.msk [vmem:[%s4 + $0x38] sm:$0xf] %vm395, %v377
  %411 = vst.msk [vmem:[%s4 + $0x3c] sm:$0xf] %vm395, %v378
  // Predicated region
  $region18: #{conv3_forward.11} parent=0 // pred_check
    _
  $region19: #{conv3_forward.11} parent=0 // pred_check_branch
    %413 = sbr.rel (0) target = $region21
  $region20: #{conv3_forward.11} parent=0 // pred_region
    _
  $region21: #{conv3_forward.11} parent=0 // pred_fallthru
    _
  // Predicated region
  $region22: #{conv3_forward.11} parent=0 // pred_check
    _
  $region23: #{conv3_forward.11} parent=0 // pred_check_branch
    %415 = sbr.rel (0) target = $region25
  $region24: #{conv3_forward.11} parent=0 // pred_region
    _
  $region25: #{conv3_forward.11} parent=0 // pred_fallthru
    _

// kernel: conv3_forward.10
$region0: #{conv3_forward.10}
  #allocation0 [shape = 'u32[]', space=smem, size = 0x4, offset = 0x4, fixed_abs, tag = 'smem constant byte address 0x4 - core index']
  #allocation1 [shape = 'u32[144,128]{1,0:T(1,128)}', space=vmem, size = 0x12000, scoped, tag = 'internal scratch']
  %s0 = inlined_call_operand.vmem [shape: bf16[2,10,10,64], index: 0, kind: input, shape index: {}]
  %s1 = inlined_call_operand.vmem [shape: bf16[576,64], index: 1, kind: input, shape index: {}]
  %s2 = inlined_call_operand.vmem [shape: f32[1,64], index: 2, kind: input, shape index: {}]
  %s3 = inlined_call_operand.vmem [shape: bf16[128,64], index: 3, kind: output, shape index: {}]
  %s4 = sld [smem:[#allocation0]]
  $region45: #{conv3_forward.10} parent=0
    _
  %s6 = ssub.s32 1, %s4
  %s7 = scalar_select 0, %s6, %s4
  loop: start=0, step=1, limit=4
  $region2: #{conv3_forward.10} parent=0 // loop_pre_header
    _
  $region3: #{conv3_forward.10} parent=0 // loop_header
    %s9 = sphi 0, %s13
    %p10 = scmp.ge.s32.totalorder %s9, 4
    %s16 = sphi 0, %s28
    %s17 = sphi 0, %s24
    %s18 = sphi 0, %s16
    %s19 = sphi 0, %s17
    %s20 = sphi 0, %s18
    %s21 = sphi 0, %s19
    %s31 = sphi 0, %s33
    %s34 = sphi 0, %s31
    %s35 = sphi 0, %s34
    %s51 = sphi 0, %s35
    %s55 = sphi 0, %s55
    %s57 = sphi 0, %s55
    %s58 = sphi 0, %s57
    %s72 = sphi 0, %s58
    %s76 = sphi 0, %s76
    %s78 = sphi 0, %s76
    %s79 = sphi 0, %s78
    %s93 = sphi 0, %s79
    %s101 = sphi 0, %s103
    %s104 = sphi 0, %s101
    %s105 = sphi 0, %s104
    %s121 = sphi 0, %s105
  $region4: #{conv3_forward.10} parent=0 // loop_header_branch
    %12 = sbr.rel (%p10) target = $region8
  $region5: #{conv3_forward.10} parent=0 // loop_body
    %s14 = ssub.s32 %s9, 1
    %s15 = ssub.s32 %s9, 2
    %s22 = sadd.s32 1, %s17
    %p23 = scmp.ge.s32.totalorder %s22, 1
    %s24 = scalar_select %p23, 0, %s22
    %s25 = sadd.s32 1, %s16
    %s26 = scalar_select %p23, %s25, %s16
    %p27 = scmp.ge.s32.totalorder %s26, 2
    %s28 = scalar_select %p27, 0, %s26
    %s29 = ssub.s32 %s16, %s28
    %p30 = scmp.eq.s32.totalorder %s29, 0
    %s32 = sadd.s32 %s31, 1
    %s33 = scalar_select %p30, %s31, %s32
    %p36 = pneg %p30
    %p37 = scmp.eq.s32.totalorder %s9, 1
    %p38 = por %p36, %p37
    %p39 = scmp.ne.s32.totalorder %s31, %s34
    %p40 = scmp.eq.s32.totalorder %s9, 0
    %p41 = por %p39, %p40
    %p42 = scmp.ne.s32.totalorder %s31, %s34
    %p43 = scmp.eq.s32.totalorder %s14, 1
    %p44 = por %p42, %p43
    %p45 = scmp.ne.s32.totalorder %s34, %s35
    %p46 = scmp.eq.s32.totalorder %s14, 0
    %p47 = por %p45, %p46
    %p48 = scmp.ne.s32.totalorder %s34, %s35
    %p49 = scmp.eq.s32.totalorder %s15, 1
    %p50 = por %p48, %p49
    %p52 = scmp.ne.s32.totalorder %s35, %s51
    %p53 = scmp.eq.s32.totalorder %s15, 0
    %p54 = por %p52, %p53
    %s56 = sadd.s32 %s55, 1
    %p59 = scmp.eq.s32.totalorder %s9, 1
    %p60 = scmp.ne.s32.totalorder %s55, %s57
    %p61 = scmp.eq.s32.totalorder %s9, 0
    %p62 = por %p60, %p61
    %p63 = scmp.ne.s32.totalorder %s55, %s57
    %p64 = scmp.eq.s32.totalorder %s14, 1
    %p65 = por %p63, %p64
    %p66 = scmp.ne.s32.totalorder %s57, %s58
    %p67 = scmp.eq.s32.totalorder %s14, 0
    %p68 = por %p66, %p67
    %p69 = scmp.ne.s32.totalorder %s57, %s58
    %p70 = scmp.eq.s32.totalorder %s15, 1
    %p71 = por %p69, %p70
    %p73 = scmp.ne.s32.totalorder %s58, %s72
    %p74 = scmp.eq.s32.totalorder %s15, 0
    %p75 = por %p73, %p74
    %s77 = sadd.s32 %s76, 1
    %p80 = scmp.eq.s32.totalorder %s9, 1
    %p81 = scmp.ne.s32.totalorder %s76, %s78
    %p82 = scmp.eq.s32.totalorder %s9, 0
    %p83 = por %p81, %p82
    %p84 = scmp.ne.s32.totalorder %s76, %s78
    %p85 = scmp.eq.s32.totalorder %s14, 1
    %p86 = por %p84, %p85
    %p87 = scmp.ne.s32.totalorder %s78, %s79
    %p88 = scmp.eq.s32.totalorder %s14, 0
    %p89 = por %p87, %p88
    %p90 = scmp.ne.s32.totalorder %s78, %s79
    %p91 = scmp.eq.s32.totalorder %s15, 1
    %p92 = por %p90, %p91
    %p94 = scmp.ne.s32.totalorder %s79, %s93
    %p95 = scmp.eq.s32.totalorder %s15, 0
    %p96 = por %p94, %p95
    %s97 = sadd.s32 %s16, %s17
    %s98 = sadd.s32 %s28, %s24
    %s99 = ssub.s32 %s97, %s98
    %p100 = scmp.eq.s32.totalorder %s99, 0
    %s102 = sadd.s32 %s101, 1
    %s103 = scalar_select %p100, %s101, %s102
    %p106 = pneg %p100
    %p107 = scmp.eq.s32.totalorder %s9, 1
    %p108 = por %p106, %p107
    %p109 = scmp.ne.s32.totalorder %s101, %s104
    %p110 = scmp.eq.s32.totalorder %s9, 0
    %p111 = por %p109, %p110
    %p112 = scmp.ne.s32.totalorder %s101, %s104
    %p113 = scmp.eq.s32.totalorder %s14, 1
    %p114 = por %p112, %p113
    %p115 = scmp.ne.s32.totalorder %s104, %s105
    %p116 = scmp.eq.s32.totalorder %s14, 0
    %p117 = por %p115, %p116
    %p118 = scmp.ne.s32.totalorder %s104, %s105
    %p119 = scmp.eq.s32.totalorder %s15, 1
    %p120 = por %p118, %p119
    %p122 = scmp.ne.s32.totalorder %s105, %s121
    %p123 = scmp.eq.s32.totalorder %s15, 0
    %p124 = por %p122, %p123
    %p125 = scmp.le.s32.totalorder 1, %s9
    %p126 = scmp.lt.s32.totalorder %s9, 3
    %p127 = pnand %p125, %p126
    %p128 = pneg %p127
    // Predicated region
    $region9: #{conv3_forward.10} parent=5 // pred_check
      _
    $region10: #{conv3_forward.10} parent=5 // pred_check_branch
      %130 = sbr.rel (%p127) target = $region12
    $region11: #{conv3_forward.10} parent=5 // pred_region
      %s131 = ssub.s32 %s9, 1
      // Predicated region
      $region13: #{conv3_forward.10} parent=11 // pred_check
        %p132 = pneg %p68
      $region14: #{conv3_forward.10} parent=11 // pred_check_branch
        %134 = sbr.rel (%p132) target = $region16
      $region15: #{conv3_forward.10} parent=11 // pred_region
        _
      $region16: #{conv3_forward.10} parent=11 // pred_fallthru
        _
      // Predicated region
      $region17: #{conv3_forward.10} parent=11 // pred_check
        %p135 = pneg %p89
      $region18: #{conv3_forward.10} parent=11 // pred_check_branch
        %137 = sbr.rel (%p135) target = $region20
      $region19: #{conv3_forward.10} parent=11 // pred_region
        _
      $region20: #{conv3_forward.10} parent=11 // pred_fallthru
        _
    $region12: #{conv3_forward.10} parent=5 // pred_fallthru
      _
    %p138 = scmp.lt.s32.totalorder %s9, 2
    // Predicated region
    $region21: #{conv3_forward.10} parent=5 // pred_check
      %p139 = pneg %p138
    $region22: #{conv3_forward.10} parent=5 // pred_check_branch
      %141 = sbr.rel (%p139) target = $region24
    $region23: #{conv3_forward.10} parent=5 // pred_region
      // Predicated region
      $region25: #{conv3_forward.10} parent=23 // pred_check
        %p142 = pneg %p41
      $region26: #{conv3_forward.10} parent=23 // pred_check_branch
        %144 = sbr.rel (%p142) target = $region28
      $region27: #{conv3_forward.10} parent=23 // pred_region
        %p145 = scmp.lt.s32.totalorder %s16, 1
        %s146 = scalar_select %p145, %s16, 1
        %s147 = smul.addr %s146, 20
        %s148 = smul.addr %s147, 4
        %s149 = scalar_lea.vmem %s0, %s148
      $region28: #{conv3_forward.10} parent=23 // pred_fallthru
        _
    $region24: #{conv3_forward.10} parent=5 // pred_fallthru
      _
    %p150 = scmp.le.s32.totalorder 1, %s9
    %p151 = scmp.lt.s32.totalorder %s9, 3
    %p152 = pnand %p150, %p151
    %p153 = pneg %p152
    // Predicated region
    $region29: #{conv3_forward.10} parent=5 // pred_check
      _
    $region30: #{conv3_forward.10} parent=5 // pred_check_branch
      %155 = sbr.rel (%p152) target = $region32
    $region31: #{conv3_forward.10} parent=5 // pred_region
      %s156 = ssub.s32 %s9, 1
      %p157 = scmp.lt.s32.totalorder %s18, 1
      %s158 = scalar_select %p157, %s18, 1
      %s159 = smul.addr %s158, 20
      %s160 = smul.addr %s159, 4
      %s161 = scalar_lea.vmem %s0, %s160
      %p162 = pneg %p47
      %p163 = pneg %p44
      %p164 = pneg %p68
      %p165 = pneg %p65
      %p166 = pneg %p89
      %p167 = pneg %p86
      %p168 = pneg %p117
      %p169 = pneg %p114
      %s170 = sadd.s32 %s18, %s19
      %s171 = smul.u32 8, %s170
      %p172 = scmp.lt.s32.totalorder %s171, 15
      %s173 = scalar_select %p172, %s171, 15
      %s174 = smul.addr %s173, 4
      %s175 = scalar_lea.vmem %s3, %s174
      %p176 = scmp.lt.s32.totalorder %s18, 1
      %s177 = scalar_select %p176, %s18, 1
      %s178 = smul.addr %s177, 20
      %s179 = smul.addr %s178, 4
      %s180 = scalar_lea.vmem %s0, %s179
      %s181 = sadd.s32 %s18, %s19
      %s182 = smul.u32 8, %s181
      %p183 = scmp.lt.s32.totalorder %s182, 15
      %s184 = scalar_select %p183, %s182, 15
      %s185 = smul.addr %s184, 4
      %s186 = scalar_lea.vmem %s3, %s185
      %s187 = sadd.s32 %s18, %s19
      %s188 = smul.u32 8, %s187
      %s190 = smul.u32 %s19, 8
      %s191 = smul.u32 %s190, 2
      %s192 = smul.addr %s191, 4
      %s193 = scalar_lea.vmem %s180, %s192
      %v194 = vld [vmem:[%s193] sm:$0xf]
      %v195 = vld [vmem:[%s193 + $0x4] sm:$0x1]
      %v196 = vld [vmem:[%s193 + $0x8] sm:$0xf]
      %v197 = vld [vmem:[%s193 + $0xc] sm:$0x1]
      %v198 = vld [vmem:[%s193 + $0x10] sm:$0xf]
      %v199 = vld [vmem:[%s193 + $0x14] sm:$0x1]
      %v200 = vld [vmem:[%s193 + $0x18] sm:$0xf]
      %v201 = vld [vmem:[%s193 + $0x1c] sm:$0x1]
      %v202 = vld [vmem:[%s193 + $0x20] sm:$0xf]
      %v203 = vld [vmem:[%s193 + $0x24] sm:$0x1]
      %v204 = vld [vmem:[%s193 + $0x28] sm:$0xf]
      %v205 = vld [vmem:[%s193 + $0x2c] sm:$0x1]
      %v206 = vld [vmem:[%s193 + $0x30] sm:$0xf]
      %v207 = vld [vmem:[%s193 + $0x34] sm:$0x1]
      %v208 = vld [vmem:[%s193 + $0x38] sm:$0xf]
      %v209 = vld [vmem:[%s193 + $0x3c] sm:$0x1]
      %v210 = vld [vmem:[%s193 + $0x40] sm:$0xf]
      %v211 = vld [vmem:[%s193 + $0x44] sm:$0x1]
      %v212 = vld [vmem:[%s193 + $0x48] sm:$0xf]
      %v213 = vld [vmem:[%s193 + $0x4c] sm:$0x1]
      %vm214 = vsmask.f32 3328
      %vm215 = vsmask.f32 7440
      %vm216 = vmor %vm214, %vm215
      %v218 = vshrl.u32 %v194, 16
      %v220 = vrot.slane %v218, 4
      %v221 = vshll.u32 %v194, 16
      %v223 = vrot.slane %v221, 5
      %v224 = vor.u32 %v220, %v223
      %v225 = vrot.slane %v224, 4
      %v227 = vshll.u32 %v195, 16
      %v229 = vrot.slane %v227, 5
      %v230 = vsel %vm216, %v225, %v229
      %v232 = vshrl.u32 %v196, 16
      %v234 = vrot.slane %v232, 4
      %v235 = vshll.u32 %v196, 16
      %v237 = vrot.slane %v235, 5
      %v238 = vor.u32 %v234, %v237
      %v239 = vrot.slane %v238, 4
      %v241 = vshll.u32 %v197, 16
      %v243 = vrot.slane %v241, 5
      %v244 = vsel %vm216, %v239, %v243
      %v246 = vshrl.u32 %v198, 16
      %v248 = vrot.slane %v246, 4
      %v249 = vshll.u32 %v198, 16
      %v251 = vrot.slane %v249, 5
      %v252 = vor.u32 %v248, %v251
      %v253 = vrot.slane %v252, 4
      %v255 = vshll.u32 %v199, 16
      %v257 = vrot.slane %v255, 5
      %v258 = vsel %vm216, %v253, %v257
      %v260 = vshrl.u32 %v200, 16
      %v262 = vrot.slane %v260, 4
      %v263 = vshll.u32 %v200, 16
      %v265 = vrot.slane %v263, 5
      %v266 = vor.u32 %v262, %v265
      %v267 = vrot.slane %v266, 4
      %v269 = vshll.u32 %v201, 16
      %v271 = vrot.slane %v269, 5
      %v272 = vsel %vm216, %v267, %v271
      %v274 = vshrl.u32 %v202, 16
      %v276 = vrot.slane %v274, 4
      %v277 = vshll.u32 %v202, 16
      %v279 = vrot.slane %v277, 5
      %v280 = vor.u32 %v276, %v279
      %v281 = vrot.slane %v280, 4
      %v283 = vshll.u32 %v203, 16
      %v285 = vrot.slane %v283, 5
      %v286 = vsel %vm216, %v281, %v285
      %v288 = vshrl.u32 %v204, 16
      %v290 = vrot.slane %v288, 4
      %v291 = vshll.u32 %v204, 16
      %v293 = vrot.slane %v291, 5
      %v294 = vor.u32 %v290, %v293
      %v295 = vrot.slane %v294, 4
      %v297 = vshll.u32 %v205, 16
      %v299 = vrot.slane %v297, 5
      %v300 = vsel %vm216, %v295, %v299
      %v302 = vshrl.u32 %v206, 16
      %v304 = vrot.slane %v302, 4
      %v305 = vshll.u32 %v206, 16
      %v307 = vrot.slane %v305, 5
      %v308 = vor.u32 %v304, %v307
      %v309 = vrot.slane %v308, 4
      %v311 = vshll.u32 %v207, 16
      %v313 = vrot.slane %v311, 5
      %v314 = vsel %vm216, %v309, %v313
      %v316 = vshrl.u32 %v208, 16
      %v318 = vrot.slane %v316, 4
      %v319 = vshll.u32 %v208, 16
      %v321 = vrot.slane %v319, 5
      %v322 = vor.u32 %v318, %v321
      %v323 = vrot.slane %v322, 4
      %v325 = vshll.u32 %v209, 16
      %v327 = vrot.slane %v325, 5
      %v328 = vsel %vm216, %v323, %v327
      %vm345 = vcmask 1042432
      %vm346 = vcmask 1046532
      %vm347 = vmor %vm345, %vm346
      %v348 = vrot.slane %v194, 5
      %v349 = vrot.slane %v348, 4
      %v350 = vrot.slane %v195, 5
      %v351 = vsel %vm347, %v349, %v350
      %v352 = vrot.slane %v196, 5
      %v353 = vrot.slane %v352, 4
      %v354 = vrot.slane %v197, 5
      %v355 = vsel %vm347, %v353, %v354
      %v356 = vrot.slane %v198, 5
      %v357 = vrot.slane %v356, 4
      %v358 = vrot.slane %v199, 5
      %v359 = vsel %vm347, %v357, %v358
      %v360 = vrot.slane %v200, 5
      %v361 = vrot.slane %v360, 4
      %v362 = vrot.slane %v201, 5
      %v363 = vsel %vm347, %v361, %v362
      %v364 = vrot.slane %v202, 5
      %v365 = vrot.slane %v364, 4
      %v366 = vrot.slane %v203, 5
      %v367 = vsel %vm347, %v365, %v366
      %v368 = vrot.slane %v204, 5
      %v369 = vrot.slane %v368, 4
      %v370 = vrot.slane %v205, 5
      %v371 = vsel %vm347, %v369, %v370
      %v372 = vrot.slane %v206, 5
      %v373 = vrot.slane %v372, 4
      %v374 = vrot.slane %v207, 5
      %v375 = vsel %vm347, %v373, %v374
      %v376 = vrot.slane %v208, 5
      %v377 = vrot.slane %v376, 4
      %v378 = vrot.slane %v209, 5
      %v379 = vsel %vm347, %v377, %v378
      %v381 = vshrl.u32 %v210, 16
      %v383 = vrot.slane %v381, 4
      %v384 = vshll.u32 %v210, 16
      %v386 = vrot.slane %v384, 5
      %v387 = vor.u32 %v383, %v386
      %v388 = vrot.slane %v387, 4
      %v390 = vshll.u32 %v211, 16
      %v392 = vrot.slane %v390, 5
      %v393 = vsel %vm216, %v388, %v392
      %v396 = vrot.slane %v210, 5
      %v397 = vrot.slane %v396, 4
      %v398 = vrot.slane %v211, 5
      %v399 = vsel %vm347, %v397, %v398
      %v401 = vshrl.u32 %v212, 16
      %v403 = vrot.slane %v401, 4
      %v404 = vshll.u32 %v212, 16
      %v406 = vrot.slane %v404, 5
      %v407 = vor.u32 %v403, %v406
      %v408 = vrot.slane %v407, 4
      %v410 = vshll.u32 %v213, 16
      %v412 = vrot.slane %v410, 5
      %v413 = vsel %vm216, %v408, %v412
      %v416 = vrot.slane %v212, 5
      %v417 = vrot.slane %v416, 4
      %v418 = vrot.slane %v213, 5
      %v419 = vsel %vm347, %v417, %v418
      %v420 = vunpack.c.l.b16 %v194
      %v421 = vunpack.c.l.b16 %v196
      %v422 = vunpack.c.l.b16 %v198
      %v423 = vunpack.c.l.b16 %v200
      %v424 = vunpack.c.l.b16 %v202
      %v425 = vunpack.c.l.b16 %v204
      %v426 = vunpack.c.l.b16 %v206
      %v427 = vunpack.c.l.b16 %v208
      %v428 = vpack.c.b16 %v421, %v420
      %v429 = vpack.c.b16 %v423, %v422
      %v430 = vpack.c.b16 %v425, %v424
      %v431 = vpack.c.b16 %v427, %v426
      %v432 = vunpack.c.l.b16 %v230
      %v433 = vunpack.c.l.b16 %v244
      %v434 = vunpack.c.l.b16 %v258
      %v435 = vunpack.c.l.b16 %v272
      %v436 = vunpack.c.l.b16 %v286
      %v437 = vunpack.c.l.b16 %v300
      %v438 = vunpack.c.l.b16 %v314
      %v439 = vunpack.c.l.b16 %v328
      %v440 = vpack.c.b16 %v433, %v432
      %v441 = vpack.c.b16 %v435, %v434
      %v442 = vpack.c.b16 %v437, %v436
      %v443 = vpack.c.b16 %v439, %v438
      %444 = vrot.lane.b32.xlu0 %v440, 64
      %v445 = vpop.permute.xlu0 %444
      %446 = vrot.lane.b32.xlu0 %v441, 64
      %v447 = vpop.permute.xlu0 %446
      %448 = vrot.lane.b32.xlu0 %v442, 64
      %v449 = vpop.permute.xlu0 %448
      %450 = vrot.lane.b32.xlu0 %v443, 64
      %v451 = vpop.permute.xlu0 %450
      %v452 = vunpack.c.l.b16 %v351
      %v453 = vunpack.c.l.b16 %v355
      %v454 = vunpack.c.l.b16 %v359
      %v455 = vunpack.c.l.b16 %v363
      %v456 = vunpack.c.l.b16 %v367
      %v457 = vunpack.c.l.b16 %v371
      %v458 = vunpack.c.l.b16 %v375
      %v459 = vunpack.c.l.b16 %v379
      %v460 = vpack.c.b16 %v453, %v452
      %v461 = vpack.c.b16 %v455, %v454
      %v462 = vpack.c.b16 %v457, %v456
      %v463 = vpack.c.b16 %v459, %v458
      %v464 = vunpack.c.l.b16 %v210
      %v465 = vpack.c.b16 %v422, %v421
      %v466 = vpack.c.b16 %v424, %v423
      %v467 = vpack.c.b16 %v426, %v425
      %v468 = vpack.c.b16 %v464, %v427
      %469 = vrot.lane.b32.xlu0 %v465, 64
      %v470 = vpop.permute.xlu0 %469
      %471 = vrot.lane.b32.xlu0 %v466, 64
      %v472 = vpop.permute.xlu0 %471
      %473 = vrot.lane.b32.xlu0 %v467, 64
      %v474 = vpop.permute.xlu0 %473
      %475 = vrot.lane.b32.xlu0 %v468, 64
      %v476 = vpop.permute.xlu0 %475
      %v477 = vunpack.c.l.b16 %v393
      %v478 = vpack.c.b16 %v434, %v433
      %v479 = vpack.c.b16 %v436, %v435
      %v480 = vpack.c.b16 %v438, %v437
      %v481 = vpack.c.b16 %v477, %v439
      %v482 = vunpack.c.l.b16 %v399
      %v483 = vpack.c.b16 %v454, %v453
      %v484 = vpack.c.b16 %v456, %v455
      %v485 = vpack.c.b16 %v458, %v457
      %v486 = vpack.c.b16 %v482, %v459
      %487 = vrot.lane.b32.xlu0 %v483, 64
      %v488 = vpop.permute.xlu0 %487
      %489 = vrot.lane.b32.xlu0 %v484, 64
      %v490 = vpop.permute.xlu0 %489
      %491 = vrot.lane.b32.xlu0 %v485, 64
      %v492 = vpop.permute.xlu0 %491
      %493 = vrot.lane.b32.xlu0 %v486, 64
      %v494 = vpop.permute.xlu0 %493
      %v495 = vunpack.c.l.b16 %v212
      %v496 = vpack.c.b16 %v495, %v464
      %v497 = vunpack.c.l.b16 %v413
      %v498 = vpack.c.b16 %v497, %v477
      %499 = vrot.lane.b32.xlu0 %v498, 64
      %v500 = vpop.permute.xlu0 %499
      %v501 = vunpack.c.l.b16 %v419
      %v502 = vpack.c.b16 %v501, %v482
      %vm503 = vcmask 523264
      %v506 = vsel %vm503, %v428, %v445
      %v510 = vsel %vm503, %v429, %v447
      %v514 = vsel %vm503, %v430, %v449
      %v518 = vsel %vm503, %v431, %v451
      %v522 = vsel %vm503, %v460, %v470
      %v526 = vsel %vm503, %v461, %v472
      %v530 = vsel %vm503, %v462, %v474
      %v534 = vsel %vm503, %v463, %v476
      %v538 = vsel %vm503, %v478, %v488
      %v542 = vsel %vm503, %v479, %v490
      %v546 = vsel %vm503, %v480, %v492
      %v550 = vsel %vm503, %v481, %v494
      %v554 = vsel %vm503, %v496, %v500
      %v556 = vld [vmem:[%s1] sm:$0xf]
      %v557 = vld [vmem:[%s1 + $0x4] sm:$0xf]
      %v558 = vld [vmem:[%s1 + $0x8] sm:$0xf]
      %v559 = vld [vmem:[%s1 + $0xc] sm:$0xf]
      %v560 = vld [vmem:[%s1 + $0x10] sm:$0xf]
      %v561 = vld [vmem:[%s1 + $0x14] sm:$0xf]
      %v562 = vld [vmem:[%s1 + $0x18] sm:$0xf]
      %v563 = vld [vmem:[%s1 + $0x1c] sm:$0xf]
      %v564 = vld [vmem:[%s1 + $0x20] sm:$0xf]
      %v565 = vld [vmem:[%s1 + $0x24] sm:$0xf]
      %v566 = vld [vmem:[%s1 + $0x28] sm:$0xf]
      %v567 = vld [vmem:[%s1 + $0x2c] sm:$0xf]
      %v568 = vld [vmem:[%s1 + $0x30] sm:$0xf]
      %v569 = vld [vmem:[%s1 + $0x34] sm:$0xf]
      %v570 = vld [vmem:[%s1 + $0x38] sm:$0xf]
      %v571 = vld [vmem:[%s1 + $0x3c] sm:$0xf]
      %v572 = vld [vmem:[%s1 + $0x40] sm:$0xf]
      %v573 = vld [vmem:[%s1 + $0x44] sm:$0xf]
      %v574 = vld [vmem:[%s1 + $0x48] sm:$0xf]
      %v575 = vld [vmem:[%s1 + $0x4c] sm:$0xf]
      %v576 = vld [vmem:[%s1 + $0x50] sm:$0xf]
      %v577 = vld [vmem:[%s1 + $0x54] sm:$0xf]
      %v578 = vld [vmem:[%s1 + $0x58] sm:$0xf]
      %v579 = vld [vmem:[%s1 + $0x5c] sm:$0xf]
      %v580 = vld [vmem:[%s1 + $0x60] sm:$0xf]
      %v581 = vld [vmem:[%s1 + $0x64] sm:$0xf]
      %v582 = vld [vmem:[%s1 + $0x68] sm:$0xf]
      %v583 = vld [vmem:[%s1 + $0x6c] sm:$0xf]
      %v584 = vld [vmem:[%s1 + $0x70] sm:$0xf]
      %v585 = vld [vmem:[%s1 + $0x74] sm:$0xf]
      %v586 = vld [vmem:[%s1 + $0x78] sm:$0xf]
      %v587 = vld [vmem:[%s1 + $0x7c] sm:$0xf]
      %v588 = vld [vmem:[%s1 + $0x80] sm:$0xf]
      %v589 = vld [vmem:[%s1 + $0x84] sm:$0xf]
      %v590 = vld [vmem:[%s1 + $0x88] sm:$0xf]
      %v591 = vld [vmem:[%s1 + $0x8c] sm:$0xf]
      %v592 = vld [vmem:[%s1 + $0x90] sm:$0xf]
      %v593 = vld [vmem:[%s1 + $0x94] sm:$0xf]
      %v594 = vld [vmem:[%s1 + $0x98] sm:$0xf]
      %v595 = vld [vmem:[%s1 + $0x9c] sm:$0xf]
      %v596 = vld [vmem:[%s1 + $0xa0] sm:$0xf]
      %v597 = vld [vmem:[%s1 + $0xa4] sm:$0xf]
      %v598 = vld [vmem:[%s1 + $0xa8] sm:$0xf]
      %v599 = vld [vmem:[%s1 + $0xac] sm:$0xf]
      %v600 = vld [vmem:[%s1 + $0xb0] sm:$0xf]
      %v601 = vld [vmem:[%s1 + $0xb4] sm:$0xf]
      %v602 = vld [vmem:[%s1 + $0xb8] sm:$0xf]
      %v603 = vld [vmem:[%s1 + $0xbc] sm:$0xf]
      %v604 = vld [vmem:[%s1 + $0xc0] sm:$0xf]
      %v605 = vld [vmem:[%s1 + $0xc4] sm:$0xf]
      %v606 = vld [vmem:[%s1 + $0xc8] sm:$0xf]
      %v607 = vld [vmem:[%s1 + $0xcc] sm:$0xf]
      %v608 = vld [vmem:[%s1 + $0xd0] sm:$0xf]
      %v609 = vld [vmem:[%s1 + $0xd4] sm:$0xf]
      %v610 = vld [vmem:[%s1 + $0xd8] sm:$0xf]
      %v611 = vld [vmem:[%s1 + $0xdc] sm:$0xf]
      %v612 = vld [vmem:[%s1 + $0xe0] sm:$0xf]
      %v613 = vld [vmem:[%s1 + $0xe4] sm:$0xf]
      %v614 = vld [vmem:[%s1 + $0xe8] sm:$0xf]
      %v615 = vld [vmem:[%s1 + $0xec] sm:$0xf]
      %v616 = vld [vmem:[%s1 + $0xf0] sm:$0xf]
      %v617 = vld [vmem:[%s1 + $0xf4] sm:$0xf]
      %v618 = vld [vmem:[%s1 + $0xf8] sm:$0xf]
      %v619 = vld [vmem:[%s1 + $0xfc] sm:$0xf]
      %v620 = vld [vmem:[%s1 + $0x100] sm:$0xf]
      %v621 = vld [vmem:[%s1 + $0x104] sm:$0xf]
      %v622 = vld [vmem:[%s1 + $0x108] sm:$0xf]
      %v623 = vld [vmem:[%s1 + $0x10c] sm:$0xf]
      %v624 = vld [vmem:[%s1 + $0x110] sm:$0xf]
      %v625 = vld [vmem:[%s1 + $0x114] sm:$0xf]
      %v626 = vld [vmem:[%s1 + $0x118] sm:$0xf]
      %v627 = vld [vmem:[%s1 + $0x11c] sm:$0xf]
      %v628 = vld [vmem:[%s2] sm:$0x1]
      %v630 = vlaneseq
      %v631 = vshrl.u32 %v630, 7
      %v632 = vsub.s32 0, %v631
      %v633 = vrot.slane %v628, %v632
      %v707 = vunpack.c.l.b16 %v556
      %v708 = vunpack.c.l.b16 %v557
      %v709 = vunpack.c.l.b16 %v558
      %v710 = vunpack.c.l.b16 %v559
      %v711 = vunpack.c.l.b16 %v560
      %v712 = vunpack.c.l.b16 %v561
      %v713 = vunpack.c.l.b16 %v562
      %v714 = vunpack.c.l.b16 %v563
      %v715 = vunpack.c.l.b16 %v564
      %v716 = vunpack.c.l.b16 %v565
      %v717 = vunpack.c.l.b16 %v566
      %v718 = vunpack.c.l.b16 %v567
      %v719 = vunpack.c.l.b16 %v568
      %v720 = vunpack.c.l.b16 %v569
      %v721 = vunpack.c.l.b16 %v570
      %v722 = vunpack.c.l.b16 %v571
      %v723 = vunpack.c.l.b16 %v572
      %v724 = vunpack.c.l.b16 %v573
      %v725 = vunpack.c.l.b16 %v574
      %v726 = vunpack.c.l.b16 %v575
      %v727 = vunpack.c.l.b16 %v576
      %v728 = vunpack.c.l.b16 %v577
      %v729 = vunpack.c.l.b16 %v578
      %v730 = vunpack.c.l.b16 %v579
      %v731 = vunpack.c.l.b16 %v580
      %v732 = vunpack.c.l.b16 %v581
      %v733 = vunpack.c.l.b16 %v582
      %v734 = vunpack.c.l.b16 %v583
      %v735 = vunpack.c.l.b16 %v584
      %v736 = vunpack.c.l.b16 %v585
      %v737 = vunpack.c.l.b16 %v586
      %v738 = vunpack.c.l.b16 %v587
      %v739 = vunpack.c.l.b16 %v588
      %v740 = vunpack.c.l.b16 %v589
      %v741 = vunpack.c.l.b16 %v590
      %v742 = vunpack.c.l.b16 %v591
      %v743 = vunpack.c.l.b16 %v592
      %v744 = vunpack.c.l.b16 %v593
      %v745 = vunpack.c.l.b16 %v594
      %v746 = vunpack.c.l.b16 %v595
      %v747 = vunpack.c.l.b16 %v596
      %v748 = vunpack.c.l.b16 %v597
      %v749 = vunpack.c.l.b16 %v598
      %v750 = vunpack.c.l.b16 %v599
      %v751 = vunpack.c.l.b16 %v600
      %v752 = vunpack.c.l.b16 %v601
      %v753 = vunpack.c.l.b16 %v602
      %v754 = vunpack.c.l.b16 %v603
      %v755 = vunpack.c.l.b16 %v604
      %v756 = vunpack.c.l.b16 %v605
      %v757 = vunpack.c.l.b16 %v606
      %v758 = vunpack.c.l.b16 %v607
      %v759 = vunpack.c.l.b16 %v608
      %v760 = vunpack.c.l.b16 %v609
      %v761 = vunpack.c.l.b16 %v610
      %v762 = vunpack.c.l.b16 %v611
      %v763 = vunpack.c.l.b16 %v612
      %v764 = vunpack.c.l.b16 %v613
      %v765 = vunpack.c.l.b16 %v614
      %v766 = vunpack.c.l.b16 %v615
      %v767 = vunpack.c.l.b16 %v616
      %v768 = vunpack.c.l.b16 %v617
      %v769 = vunpack.c.l.b16 %v618
      %v770 = vunpack.c.l.b16 %v619
      %v771 = vunpack.c.l.b16 %v620
      %v772 = vunpack.c.l.b16 %v621
      %v773 = vunpack.c.l.b16 %v622
      %v774 = vunpack.c.l.b16 %v623
      %v775 = vunpack.c.l.b16 %v624
      %v776 = vunpack.c.l.b16 %v625
      %v777 = vunpack.c.l.b16 %v626
      %v778 = vunpack.c.l.b16 %v627
      %v779 = vpack.c.b16 %v708, %v707
      %v780 = vpack.c.b16 %v710, %v709
      %v781 = vpack.c.b16 %v712, %v711
      %v782 = vpack.c.b16 %v714, %v713
      %v783 = vpack.c.b16 %v716, %v715
      %v784 = vpack.c.b16 %v718, %v717
      %v785 = vpack.c.b16 %v720, %v719
      %v786 = vpack.c.b16 %v722, %v721
      %v787 = vpack.c.b16 %v724, %v723
      %v788 = vpack.c.b16 %v726, %v725
      %v789 = vpack.c.b16 %v728, %v727
      %v790 = vpack.c.b16 %v730, %v729
      %v791 = vpack.c.b16 %v732, %v731
      %v792 = vpack.c.b16 %v734, %v733
      %v793 = vpack.c.b16 %v736, %v735
      %v794 = vpack.c.b16 %v738, %v737
      %v795 = vpack.c.b16 %v740, %v739
      %v796 = vpack.c.b16 %v742, %v741
      %v797 = vpack.c.b16 %v744, %v743
      %v798 = vpack.c.b16 %v746, %v745
      %v799 = vpack.c.b16 %v748, %v747
      %v800 = vpack.c.b16 %v750, %v749
      %v801 = vpack.c.b16 %v752, %v751
      %v802 = vpack.c.b16 %v754, %v753
      %v803 = vpack.c.b16 %v756, %v755
      %v804 = vpack.c.b16 %v758, %v757
      %v805 = vpack.c.b16 %v760, %v759
      %v806 = vpack.c.b16 %v762, %v761
      %v807 = vpack.c.b16 %v764, %v763
      %v808 = vpack.c.b16 %v766, %v765
      %v809 = vpack.c.b16 %v768, %v767
      %v810 = vpack.c.b16 %v770, %v769
      %v811 = vpack.c.b16 %v772, %v771
      %v812 = vpack.c.b16 %v774, %v773
      %v813 = vpack.c.b16 %v776, %v775
      %v814 = vpack.c.b16 %v778, %v777
      %v851 = vsel %vm503, %v461, 0
      %v853 = vsel %vm503, %v462, 0
      %v855 = vsel %vm503, %v463, 0
      %v858 = vsel %vm503, %v502, 0
      %860 = vmatprep.subr.bf16.mxu0 0
      %861 = vmatpush1.bf16.msra.mxu0 %v779
      %862 = vmatprep.subr.bf16.mxu0 0
      %863 = vmatpush1.bf16.msra.mxu0 %v780
      %864 = vmatprep.subr.bf16.mxu0 0
      %865 = vmatpush1.bf16.msra.mxu0 %v781
      %866 = vmatprep.subr.bf16.mxu0 0
      %867 = vmatpush1.bf16.msra.mxu0 %v782
      %868 = vmatprep.subr.bf16.mxu0 0
      %869 = vmatpush1.bf16.msra.mxu0 %v783
      %870 = vmatprep.subr.bf16.mxu0 0
      %871 = vmatpush1.bf16.msra.mxu0 %v784
      %872 = vmatprep.subr.bf16.mxu0 0
      %873 = vmatpush1.bf16.msra.mxu0 %v785
      %874 = vmatprep.subr.bf16.mxu0 0
      %875 = vmatpush1.bf16.msra.mxu0 %v786
      %876 = vmatprep.subr.bf16.mxu0 0
      %877 = vmatpush1.bf16.msra.mxu0 %v787
      %878 = vmatprep.subr.bf16.mxu0 0
      %879 = vmatpush1.bf16.msra.mxu0 %v788
      %880 = vmatprep.subr.bf16.mxu0 0
      %881 = vmatpush1.bf16.msra.mxu0 %v789
      %882 = vmatprep.subr.bf16.mxu0 0
      %883 = vmatpush1.bf16.msra.mxu0 %v790
      %884 = vmatprep.subr.bf16.mxu0 0
      %885 = vmatpush1.bf16.msra.mxu0 %v791
      %886 = vmatprep.subr.bf16.mxu0 0
      %887 = vmatpush1.bf16.msra.mxu0 %v792
      %888 = vmatprep.subr.bf16.mxu0 0
      %889 = vmatpush1.bf16.msra.mxu0 %v793
      %890 = vmatprep.subr.bf16.mxu0 0
      %891 = vmatpush1.bf16.msra.mxu0 %v794
      %892 = vmatprep.mubr.bf16.mxu0 %v522
      %893 = vmatmul.mubr.bf16.gmra.mrb[0].mxu0 %v506
      %v894 = vpop.f32.mrb[0].mxu0
      %v895 = vadd.f32 %v633, %v894
      %v896 = vpop.f32.mrb[0].mxu0
      %v897 = vpop.f32.mrb[0].mxu0
      %v898 = vadd.f32 %v633, %v897
      %v899 = vpop.f32.mrb[0].mxu0
      %900 = vmatprep.mubr.bf16.mxu0 %v526
      %901 = vmatmul.mubr.bf16.gmra.mrb[0].mxu0 %v510
      %v902 = vpop.f32.mrb[0].mxu0
      %v903 = vadd.f32 %v633, %v902
      %v904 = vpop.f32.mrb[0].mxu0
      %v905 = vpop.f32.mrb[0].mxu0
      %v906 = vadd.f32 %v633, %v905
      %v907 = vpop.f32.mrb[0].mxu0
      %908 = vmatprep.mubr.bf16.mxu0 %v530
      %909 = vmatmul.mubr.bf16.gmra.mrb[0].mxu0 %v514
      %v910 = vpop.f32.mrb[0].mxu0
      %v911 = vadd.f32 %v633, %v910
      %v912 = vpop.f32.mrb[0].mxu0
      %v913 = vpop.f32.mrb[0].mxu0
      %v914 = vadd.f32 %v633, %v913
      %v915 = vpop.f32.mrb[0].mxu0
      %916 = vmatprep.mubr.bf16.mxu0 %v534
      %917 = vmatmul.mubr.bf16.gmra.mrb[0].mxu0 %v518
      %v918 = vpop.f32.mrb[0].mxu0
      %v919 = vadd.f32 %v633, %v918
      %v920 = vpop.f32.mrb[0].mxu0
      %v921 = vpop.f32.mrb[0].mxu0
      %v922 = vadd.f32 %v633, %v921
      %v923 = vpop.f32.mrb[0].mxu0
      %924 = vdwg.mxu0
      %925 = vmatprep.subr.bf16.mxu0 0
      %926 = vmatpush1.bf16.msra.mxu0 %v795
      %927 = vmatprep.subr.bf16.mxu0 0
      %928 = vmatpush1.bf16.msra.mxu0 %v796
      %929 = vmatprep.subr.bf16.mxu0 0
      %930 = vmatpush1.bf16.msra.mxu0 %v797
      %931 = vmatprep.subr.bf16.mxu0 0
      %932 = vmatpush1.bf16.msra.mxu0 %v798
      %933 = vmatprep.subr.bf16.mxu0 0
      %934 = vmatpush1.bf16.msra.mxu0 %v799
      %935 = vmatprep.subr.bf16.mxu0 0
      %936 = vmatpush1.bf16.msra.mxu0 %v800
      %937 = vmatprep.subr.bf16.mxu0 0
      %938 = vmatpush1.bf16.msra.mxu0 %v801
      %939 = vmatprep.subr.bf16.mxu0 0
      %940 = vmatpush1.bf16.msra.mxu0 %v802
      %941 = vmatprep.subr.bf16.mxu0 0
      %942 = vmatpush1.bf16.msra.mxu0 %v803
      %943 = vmatprep.subr.bf16.mxu0 0
      %944 = vmatpush1.bf16.msra.mxu0 %v804
      %945 = vmatprep.subr.bf16.mxu0 0
      %946 = vmatpush1.bf16.msra.mxu0 %v805
      %947 = vmatprep.subr.bf16.mxu0 0
      %948 = vmatpush1.bf16.msra.mxu0 %v806
      %949 = vmatprep.subr.bf16.mxu0 0
      %950 = vmatpush1.bf16.msra.mxu0 %v807
      %951 = vmatprep.subr.bf16.mxu0 0
      %952 = vmatpush1.bf16.msra.mxu0 %v808
      %953 = vmatprep.subr.bf16.mxu0 0
      %954 = vmatpush1.bf16.msra.mxu0 %v809
      %955 = vmatprep.subr.bf16.mxu0 0
      %956 = vmatpush1.bf16.msra.mxu0 %v810
      %957 = vmatprep.mubr.bf16.mxu0 %v510
      %958 = vmatmul.mubr.bf16.gmra.mrb[0].mxu0 %v538
      %v959 = vpop.f32.mrb[0].mxu0
      %v960 = vadd.f32 %v895, %v959
      %v961 = vpop.f32.mrb[0].mxu0
      %v962 = vpop.f32.mrb[0].mxu0
      %v963 = vadd.f32 %v898, %v962
      %v964 = vpop.f32.mrb[0].mxu0
      %965 = vmatprep.mubr.bf16.mxu0 %v514
      %966 = vmatmul.mubr.bf16.gmra.mrb[0].mxu0 %v542
      %v967 = vpop.f32.mrb[0].mxu0
      %v968 = vadd.f32 %v903, %v967
      %v969 = vpop.f32.mrb[0].mxu0
      %v970 = vpop.f32.mrb[0].mxu0
      %v971 = vadd.f32 %v906, %v970
      %v972 = vpop.f32.mrb[0].mxu0
      %973 = vmatprep.mubr.bf16.mxu0 %v518
      %974 = vmatmul.mubr.bf16.gmra.mrb[0].mxu0 %v546
      %v975 = vpop.f32.mrb[0].mxu0
      %v976 = vadd.f32 %v911, %v975
      %v977 = vpop.f32.mrb[0].mxu0
      %v978 = vpop.f32.mrb[0].mxu0
      %v979 = vadd.f32 %v914, %v978
      %v980 = vpop.f32.mrb[0].mxu0
      %981 = vmatprep.mubr.bf16.mxu0 %v554
      %982 = vmatmul.mubr.bf16.gmra.mrb[0].mxu0 %v550
      %v983 = vpop.f32.mrb[0].mxu0
      %v984 = vadd.f32 %v919, %v983
      %v985 = vpop.f32.mrb[0].mxu0
      %v986 = vpop.f32.mrb[0].mxu0
      %v987 = vadd.f32 %v922, %v986
      %v988 = vpop.f32.mrb[0].mxu0
      %989 = vdwg.mxu0
      %990 = vmatprep.subr.bf16.mxu0 0
      %991 = vmatpush1.bf16.msra.mxu0 %v811
      %992 = vmatprep.subr.bf16.mxu0 0
      %993 = vmatpush1.bf16.msra.mxu0 %v812
      %994 = vmatprep.subr.bf16.mxu0 0
      %995 = vmatpush1.bf16.msra.mxu0 %v813
      %996 = vmatprep.subr.bf16.mxu0 0
      %997 = vmatpush1.bf16.msra.mxu0 %v814
      %998 = vmatprep.subr.bf16.mxu0 0
      %999 = vmatpush1.bf16.msra.mxu0 0
      %1000 = vmatprep.subr.bf16.mxu0 0
      %1001 = vmatpush1.bf16.msra.mxu0 0
      %1002 = vmatprep.subr.bf16.mxu0 0
      %1003 = vmatpush1.bf16.msra.mxu0 0
      %1004 = vmatprep.subr.bf16.mxu0 0
      %1005 = vmatpush1.bf16.msra.mxu0 0
      %1006 = vmatprep.subr.bf16.mxu0 0
      %1007 = vmatpush1.bf16.msra.mxu0 0
      %1008 = vmatprep.subr.bf16.mxu0 0
      %1009 = vmatpush1.bf16.msra.mxu0 0
      %1010 = vmatprep.subr.bf16.mxu0 0
      %1011 = vmatpush1.bf16.msra.mxu0 0
      %1012 = vmatprep.subr.bf16.mxu0 0
      %1013 = vmatpush1.bf16.msra.mxu0 0
      %1014 = vmatprep.subr.bf16.mxu0 0
      %1015 = vmatpush1.bf16.msra.mxu0 0
      %1016 = vmatprep.subr.bf16.mxu0 0
      %1017 = vmatpush1.bf16.msra.mxu0 0
      %1018 = vmatprep.subr.bf16.mxu0 0
      %1019 = vmatpush1.bf16.msra.mxu0 0
      %1020 = vmatprep.subr.bf16.mxu0 0
      %1021 = vmatpush1.bf16.msra.mxu0 0
      %1022 = vmatprep.mubr.bf16.mxu0 0
      %1023 = vmatmul.mubr.bf16.gmra.mrb[0].mxu0 %v851
      %v1024 = vpop.f32.mrb[0].mxu0
      %v1025 = vadd.f32 %v960, %v1024
      %v1026 = vpop.f32.mrb[0].mxu0
      %v1027 = vpop.f32.mrb[0].mxu0
      %v1028 = vadd.f32 %v963, %v1027
      %v1029 = vpop.f32.mrb[0].mxu0
      %1030 = vmatprep.mubr.bf16.mxu0 0
      %1031 = vmatmul.mubr.bf16.gmra.mrb[0].mxu0 %v853
      %v1032 = vpop.f32.mrb[0].mxu0
      %v1033 = vadd.f32 %v968, %v1032
      %v1034 = vpop.f32.mrb[0].mxu0
      %v1035 = vpop.f32.mrb[0].mxu0
      %v1036 = vadd.f32 %v971, %v1035
      %v1037 = vpop.f32.mrb[0].mxu0
      %1038 = vmatprep.mubr.bf16.mxu0 0
      %1039 = vmatmul.mubr.bf16.gmra.mrb[0].mxu0 %v855
      %v1040 = vpop.f32.mrb[0].mxu0
      %v1041 = vadd.f32 %v976, %v1040
      %v1042 = vpop.f32.mrb[0].mxu0
      %v1043 = vpop.f32.mrb[0].mxu0
      %v1044 = vadd.f32 %v979, %v1043
      %v1045 = vpop.f32.mrb[0].mxu0
      %1046 = vmatprep.mubr.bf16.mxu0 0
      %1047 = vmatmul.mubr.bf16.gmra.mrb[0].mxu0 %v858
      %v1048 = vpop.f32.mrb[0].mxu0
      %v1049 = vadd.f32 %v984, %v1048
      %v1050 = vpop.f32.mrb[0].mxu0
      %v1051 = vpop.f32.mrb[0].mxu0
      %v1052 = vadd.f32 %v987, %v1051
      %v1053 = vpop.f32.mrb[0].mxu0
      %1054 = vdwg.mxu0
      %vm1055 = vcmp.ge.f32.partialorder %v1025, 0.0
      %vm1056 = vcmp.ge.f32.partialorder %v1028, 0.0
      %vm1057 = vcmp.ge.f32.partialorder %v1033, 0.0
      %vm1058 = vcmp.ge.f32.partialorder %v1036, 0.0
      %vm1059 = vcmp.ge.f32.partialorder %v1041, 0.0
      %vm1060 = vcmp.ge.f32.partialorder %v1044, 0.0
      %vm1061 = vcmp.ge.f32.partialorder %v1049, 0.0
      %vm1062 = vcmp.ge.f32.partialorder %v1052, 0.0
      %v1063 = vmul.f32 %v1025, 0.2
      %v1064 = vmul.f32 %v1028, 0.2
      %v1065 = vmul.f32 %v1033, 0.2
      %v1066 = vmul.f32 %v1036, 0.2
      %v1067 = vmul.f32 %v1041, 0.2
      %v1068 = vmul.f32 %v1044, 0.2
      %v1069 = vmul.f32 %v1049, 0.2
      %v1070 = vmul.f32 %v1052, 0.2
      %v1071 = vsel %vm1055, %v1025, %v1063
      %v1072 = vsel %vm1056, %v1028, %v1064
      %v1073 = vsel %vm1057, %v1033, %v1065
      %v1074 = vsel %vm1058, %v1036, %v1066
      %v1075 = vsel %vm1059, %v1041, %v1067
      %v1076 = vsel %vm1060, %v1044, %v1068
      %v1077 = vsel %vm1061, %v1049, %v1069
      %v1078 = vsel %vm1062, %v1052, %v1070
      %v1079 = vpack.c.bf16 %v1072, %v1071
      %v1080 = vpack.c.bf16 %v1074, %v1073
      %v1081 = vpack.c.bf16 %v1076, %v1075
      %v1082 = vpack.c.bf16 %v1078, %v1077
      %v1087 = vunpack.c.l.b16 %v1079
      %v1088 = vunpack.c.h.b16 %v1079
      %v1089 = vunpack.c.l.b16 %v1080
      %v1090 = vunpack.c.h.b16 %v1080
      %v1091 = vunpack.c.l.b16 %v1081
      %v1092 = vunpack.c.h.b16 %v1081
      %v1093 = vunpack.c.l.b16 %v1082
      %v1094 = vunpack.c.h.b16 %v1082
      %v1095 = vpack.c.b16 %v1087, %v1087
      %v1096 = vpack.c.b16 %v1088, %v1088
      %v1097 = vpack.c.b16 %v1089, %v1089
      %v1098 = vpack.c.b16 %v1090, %v1090
      %v1099 = vpack.c.b16 %v1091, %v1091
      %v1100 = vpack.c.b16 %v1092, %v1092
      %v1101 = vpack.c.b16 %v1093, %v1093
      %v1102 = vpack.c.b16 %v1094, %v1094
      %vm1111 = vcmask 519168
      %1112 = vst.msk [vmem:[%s186] sm:$0xf] %vm1111, %v1095
      %1113 = vst.msk [vmem:[%s186 + $0x4] sm:$0xf] %vm1111, %v1096
      %1114 = vst.msk [vmem:[%s186 + $0x8] sm:$0xf] %vm1111, %v1097
      %1115 = vst.msk [vmem:[%s186 + $0xc] sm:$0xf] %vm1111, %v1098
      %1116 = vst.msk [vmem:[%s186 + $0x10] sm:$0xf] %vm1111, %v1099
      %1117 = vst.msk [vmem:[%s186 + $0x14] sm:$0xf] %vm1111, %v1100
      %1118 = vst.msk [vmem:[%s186 + $0x18] sm:$0xf] %vm1111, %v1101
      %1119 = vst.msk [vmem:[%s186 + $0x1c] sm:$0xf] %vm1111, %v1102
      %s1120 = sadd.s32 %s18, %s19
      %s1121 = smul.u32 8, %s1120
      %p1122 = scmp.lt.s32.totalorder %s1121, 15
      %s1123 = scalar_select %p1122, %s1121, 15
      %s1124 = smul.addr %s1123, 4
      %s1125 = scalar_lea.vmem %s3, %s1124
      // Predicated region
      $region33: #{conv3_forward.10} parent=31 // pred_check
        %p1126 = pneg %p114
      $region34: #{conv3_forward.10} parent=31 // pred_check_branch
        %1128 = sbr.rel (%p1126) target = $region36
      $region35: #{conv3_forward.10} parent=31 // pred_region
        %s1129 = sadd.s32 %s18, %s19
        %s1130 = smul.u32 8, %s1129
      $region36: #{conv3_forward.10} parent=31 // pred_fallthru
        _
    $region32: #{conv3_forward.10} parent=5 // pred_fallthru
      _
    %p1131 = scmp.le.s32.totalorder 2, %s9
    // Predicated region
    $region37: #{conv3_forward.10} parent=5 // pred_check
      %p1132 = pneg %p1131
    $region38: #{conv3_forward.10} parent=5 // pred_check_branch
      %1134 = sbr.rel (%p1132) target = $region40
    $region39: #{conv3_forward.10} parent=5 // pred_region
      %s1135 = ssub.s32 %s9, 2
      // Predicated region
      $region41: #{conv3_forward.10} parent=39 // pred_check
        %p1136 = pneg %p120
      $region42: #{conv3_forward.10} parent=39 // pred_check_branch
        %1138 = sbr.rel (%p1136) target = $region44
      $region43: #{conv3_forward.10} parent=39 // pred_region
        %s1139 = sadd.s32 %s20, %s21
        %s1140 = smul.u32 8, %s1139
        %p1141 = scmp.lt.s32.totalorder %s1140, 15
        %s1142 = scalar_select %p1141, %s1140, 15
        %s1143 = smul.addr %s1142, 4
        %s1144 = scalar_lea.vmem %s3, %s1143
      $region44: #{conv3_forward.10} parent=39 // pred_fallthru
        _
    $region40: #{conv3_forward.10} parent=5 // pred_fallthru
      _
  $region6: #{conv3_forward.10} parent=0 // loop_footer
    %s13 = sadd.s32 1, %s9
  $region7: #{conv3_forward.10} parent=0 // loop_footer_branch
    %8 = sbr.rel target = $region3
  $region8: #{conv3_forward.10} parent=0 // loop_exit
    _

</llo_original>
